<compile_context>
chip_gen: v6e
topology: v6e:2x2x1
jax: 0.10.0
libtpu: 0.0.40
codegen_flags: <defaults>
</compile_context>

<pallas_src>
import jax
import jax.numpy as jnp
from jax import lax
from jax.experimental import pallas as pl
from jax.experimental.pallas import tpu as pltpu

EPS = 1e-5            # InstanceNorm eps (PyTorch default)
NEG_SLOPE = 0.01      # LeakyReLU negative slope (PyTorch default)
VMEM_LIMIT = 48 * 1024 * 1024   # safe on v5e/v6e (128 MiB) and v7x (64 MiB)


def _leaky(x):
    return jnp.where(x > 0, x, NEG_SLOPE * x)


def _fold4(v, c):
    # (1, 4*c) -> (1, c): sum the 4 tap blocks along the lane axis.
    return v[:, 0:c] + v[:, c:2 * c] + v[:, 2 * c:3 * c] + v[:, 3 * c:4 * c]


def _in_lrelu(y, g, bt, inv_m):
    # Single-pass InstanceNorm stats + affine normalize + LeakyReLU.
    # y: (M, C) f32, per-channel stats over axis 0.
    s = jnp.sum(y, axis=0, keepdims=True) * inv_m          # mean
    ss = jnp.sum(y * y, axis=0, keepdims=True) * inv_m     # E[y^2]
    var = jnp.maximum(ss - s * s, 0.0)
    scale = lax.rsqrt(var + EPS) * g
    shift = bt - s * scale
    return _leaky(y * scale + shift)


def _im2col3x3(xin):
    # xin: (H, W, C) bf16 value -> (H*W, 9*C) bf16, lane order (kh, kw, cin).
    # Zero padding is built on values (no HBM padded copy); only sublane /
    # leading-dim concats and non-lane reshapes are used.
    H, W, C = xin.shape
    z_row = jnp.zeros((1, W, C), xin.dtype)
    xr = jnp.concatenate([z_row, xin, z_row], axis=0)       # (H+2, W, C)
    z_col = jnp.zeros((H + 2, 1, C), xin.dtype)
    xp = jnp.concatenate([z_col, xr, z_col], axis=1)        # (H+2, W+2, C)
    cols = [xp[kh:kh + H, kw:kw + W, :] for kh in range(3) for kw in range(3)]
    return jnp.concatenate(cols, axis=-1).reshape(H * W, 9 * C)


# ----------------------------------------------------------------------------
# Fused UpBlock kernel: one grid step per batch element.
# refs: x(1,H,W,Cin) skip(1,2H,2W,Cskip) up_w(Cin,4Cup) up_g(1,Cup) up_bt(1,Cup)
#       w0_skip(9Cskip,Cout) w0_up(9Cup,Cout) g0(1,Cout) bt0(1,Cout)
#       [w_i(9Cout,Cout) g_i bt_i  for i in 1..num_conv-1]   out(1,2H,2W,Cout)
# ----------------------------------------------------------------------------
def _make_upblock_kernel(num_conv):
    def kernel(*refs):
        x_ref, skip_ref, wup_ref, gup_ref, btup_ref = refs[:5]
        conv_refs = refs[5:-1]
        o_ref = refs[-1]

        _, H, W, Cin = x_ref.shape
        _, H2, W2, _ = skip_ref.shape
        Cup = gup_ref.shape[-1]
        Cout = o_ref.shape[-1]

        # ---- stage 1: ConvTranspose2d(k=s=2) as ONE matmul over 4 taps ----
        xf = x_ref[0].reshape(H * W, Cin)                       # bf16
        y = jnp.dot(xf, wup_ref[...],
                    preferred_element_type=jnp.float32)         # (HW, 4*Cup)
        # per-channel IN stats over the full 2Hx2W map (taps folded), 1 pass.
        inv_n = 1.0 / float(4 * H * W)
        mean_c = _fold4(jnp.sum(y, axis=0, keepdims=True), Cup) * inv_n
        ex2_c = _fold4(jnp.sum(y * y, axis=0, keepdims=True), Cup) * inv_n
        var_c = jnp.maximum(ex2_c - mean_c * mean_c, 0.0)
        scale_c = lax.rsqrt(var_c + EPS) * gup_ref[...]
        shift_c = btup_ref[...] - mean_c * scale_c
        scale = jnp.concatenate([scale_c] * 4, axis=1)          # (1, 4*Cup)
        shift = jnp.concatenate([shift_c] * 4, axis=1)
        y = _leaky(y * scale + shift)                           # (HW, 4*Cup)

        # ---- tap interleave -> (2H, 2W, Cup), stays in VMEM --------------
        # column order of y is (a, b, c) with tap = a*2 + b.
        taps = [y[:, k * Cup:(k + 1) * Cup] for k in range(4)]  # (HW, Cup)
        r0 = jnp.concatenate([taps[0].reshape(H * W, 1, Cup),
                              taps[1].reshape(H * W, 1, Cup)],
                             axis=1).reshape(H, W2, Cup)        # rows a = 0
        r1 = jnp.concatenate([taps[2].reshape(H * W, 1, Cup),
                              taps[3].reshape(H * W, 1, Cup)],
                             axis=1).reshape(H, W2, Cup)        # rows a = 1
        up = jnp.concatenate([r0, r1], axis=1).reshape(H2, W2, Cup)
        up = up.astype(jnp.bfloat16)

        # ---- stage 2: num_conv x [Conv3x3 + IN + LeakyReLU] ---------------
        inv_m = 1.0 / float(H2 * W2)
        # layer 0: skip and up consumed through separate weight blocks
        # (no lane concat of the two activations).
        w0s_ref, w0u_ref, g0_ref, bt0_ref = conv_refs[:4]
        acc = jnp.dot(_im2col3x3(skip_ref[0]), w0s_ref[...],
                      preferred_element_type=jnp.float32)
        acc = acc + jnp.dot(_im2col3x3(up), w0u_ref[...],
                            preferred_element_type=jnp.float32)
        h = _in_lrelu(acc, g0_ref[...], bt0_ref[...], inv_m)    # (H2*W2, Cout)

        idx = 4
        for _ in range(1, num_conv):
            w_ref, g_ref, bt_ref = conv_refs[idx:idx + 3]
            idx += 3
            xin = h.reshape(H2, W2, Cout).astype(jnp.bfloat16)
            acc = jnp.dot(_im2col3x3(xin), w_ref[...],
                          preferred_element_type=jnp.float32)
            h = _in_lrelu(acc, g_ref[...], bt_ref[...], inv_m)

        o_ref[...] = h.reshape(1, H2, W2, Cout).astype(o_ref.dtype)

    return kernel


# ----------------------------------------------------------------------------
# Public forward: NCHW in/out, single fused pallas_call.
# ----------------------------------------------------------------------------
def up_block_forward(kp, inputs_nchw, skip_nchw):
    x = jnp.transpose(inputs_nchw, (0, 2, 3, 1)).astype(jnp.bfloat16)
    sk = jnp.transpose(skip_nchw, (0, 2, 3, 1)).astype(jnp.bfloat16)
    N, H, W, Cin = x.shape
    _, H2, W2, Cskip = sk.shape
    assert H2 == 2 * H and W2 == 2 * W
    Cout = kp["conv_g"][0].shape[-1]
    num_conv = len(kp["conv_g"])

    params = [kp["up_w"], kp["up_g"], kp["up_bt"],
              kp["w0_skip"], kp["w0_up"], kp["conv_g"][0], kp["conv_bt"][0]]
    for i in range(1, num_conv):
        params += [kp["conv_w_rest"][i - 1], kp["conv_g"][i], kp["conv_bt"][i]]

    in_specs = [pl.BlockSpec((1, H, W, Cin), lambda n: (n, 0, 0, 0)),
                pl.BlockSpec((1, H2, W2, Cskip), lambda n: (n, 0, 0, 0))]
    for p in params:
        in_specs.append(pl.BlockSpec(p.shape, lambda n, _nd=p.ndim: (0,) * _nd))

    out = pl.pallas_call(
        _make_upblock_kernel(num_conv),
        out_shape=jax.ShapeDtypeStruct((N, H2, W2, Cout), jnp.float32),
        grid=(N,),
        in_specs=in_specs,
        out_specs=pl.BlockSpec((1, H2, W2, Cout), lambda n: (n, 0, 0, 0)),
        compiler_params=pltpu.CompilerParams(
            dimension_semantics=("parallel",),
            vmem_limit_bytes=VMEM_LIMIT),
    )(x, sk, *params)
    return jnp.transpose(out, (0, 3, 1, 2))      # back to NCHW


# ----------------------------------------------------------------------------
# One-time parameter prep (layout transforms / casts out of the forward path)
# ----------------------------------------------------------------------------
def prepare_params(params):
    up_w = params["up_w"]                         # (2, 2, Cin, Cup) = (a,b,c,o)
    Cin, Cup = up_w.shape[2], up_w.shape[3]
    # (Cin, 4*Cup), columns ordered (tap = a*2+b, cout); bf16 for the MXU.
    w_all = jnp.transpose(up_w, (2, 0, 1, 3)).reshape(Cin, 4 * Cup)
    w0 = params["conv_w"][0]                      # HWIO (3,3,Cskip+Cup,Cout)
    Cout = w0.shape[-1]
    Cskip = w0.shape[2] - Cup

    kp = {
        "up_w": w_all.astype(jnp.bfloat16),
        "up_g": params["up_g"], "up_bt": params["up_bt"],
        # first conv weight split per input (skip first, then up), rows (kh,kw,cin)
        "w0_skip": w0[:, :, :Cskip, :].reshape(9 * Cskip, Cout).astype(jnp.bfloat16),
        "w0_up": w0[:, :, Cskip:, :].reshape(9 * Cup, Cout).astype(jnp.bfloat16),
        "conv_w_rest": [],
        "conv_g": list(params["conv_g"]), "conv_bt": list(params["conv_bt"]),
    }
    for i in range(1, len(params["conv_w"])):
        wi = params["conv_w"][i]                  # (3,3,Cout,Cout)
        kp["conv_w_rest"].append(
            wi.reshape(9 * wi.shape[2], Cout).astype(jnp.bfloat16))
    # conv/upconv biases are intentionally not passed to the kernel: a
    # per-channel constant added before InstanceNorm is cancelled exactly.
    return kp


# ----------------------------------------------------------------------------
# Deterministic parameter init (reference layouts)
# ----------------------------------------------------------------------------
def init_params(key, in_channels, upsample_out_channels, conv_out_channels,
                num_conv):
    ks = list(jax.random.split(key, 4 + 4 * num_conv))

    def nrm(k, shape, scale=0.1):
        return jax.random.normal(k, shape, jnp.float32) * scale

    # ConvTranspose2d weight: PyTorch (Cin, Cout, 2, 2) -> (a, b, Cin, Cout)
    wt = nrm(ks[0], (in_channels, upsample_out_channels, 2, 2))
    params = {
        "up_w": jnp.transpose(wt, (2, 3, 0, 1)),
        "up_b": nrm(ks[1], (1, upsample_out_channels)),
        "up_g": 1.0 + nrm(ks[2], (1, upsample_out_channels), 0.05),
        "up_bt": nrm(ks[3], (1, upsample_out_channels), 0.05),
        "conv_w": [], "conv_b": [], "conv_g": [], "conv_bt": [],
    }
    cin = upsample_out_channels + conv_out_channels
    for i in range(num_conv):
        base = 4 + 4 * i
        wc = nrm(ks[base], (conv_out_channels, cin, 3, 3))         # OIHW
        params["conv_w"].append(jnp.transpose(wc, (2, 3, 1, 0)))   # HWIO
        params["conv_b"].append(nrm(ks[base + 1], (1, conv_out_channels)))
        params["conv_g"].append(1.0 + nrm(ks[base + 2], (1, conv_out_channels), 0.05))
        params["conv_bt"].append(nrm(ks[base + 3], (1, conv_out_channels), 0.05))
        cin = conv_out_channels
    return params


# ----------------------------------------------------------------------------
# Pure-JAX reference (independent of the Pallas code path)
# ----------------------------------------------------------------------------
def _in_norm_lrelu_ref(y, g, b):
    mean = jnp.mean(y, axis=(1, 2), keepdims=True)
    var = jnp.mean((y - mean) ** 2, axis=(1, 2), keepdims=True)
    yn = (y - mean) * lax.rsqrt(var + EPS) * g + b
    return jnp.where(yn > 0, yn, NEG_SLOPE * yn)


def reference_forward(params, inputs_nchw, skip_nchw):
    x = jnp.transpose(inputs_nchw, (0, 2, 3, 1)).astype(jnp.float32)
    skip = jnp.transpose(skip_nchw, (0, 2, 3, 1)).astype(jnp.float32)
    N, H, W, _ = x.shape
    w = params["up_w"]                              # (a, b, Cin, Cup)
    Cup = w.shape[-1]
    # transposed conv, kernel = stride = 2: out[n,2i+a,2j+b,o] = sum_c x*w[a,b,c,o]
    up = jnp.einsum('nijc,abco->niajbo', x, w).reshape(N, 2 * H, 2 * W, Cup)
    up = up + params["up_b"][0]
    up = _in_norm_lrelu_ref(up, params["up_g"][0], params["up_bt"][0])
    h = jnp.concatenate([skip, up], axis=-1)        # torch.cat([skip, up], 1)
    for i in range(len(params["conv_w"])):
        y = lax.conv_general_dilated(
            h, params["conv_w"][i], (1, 1), ((1, 1), (1, 1)),
            dimension_numbers=('NHWC', 'HWIO', 'NHWC'))
        y = y + params["conv_b"][i][0]
        h = _in_norm_lrelu_ref(y, params["conv_g"][i][0], params["conv_bt"][i][0])
    return jnp.transpose(h, (0, 3, 1, 2))


if __name__ == "__main__":
    key = jax.random.PRNGKey(0)
    kparam, kx, ksk = jax.random.split(key, 3)

    in_channels = 6            # channels of `inputs` (deep feature map)
    upsample_out_channels = 4
    conv_out_channels = 4      # == channels of `skip_features`
    num_conv = 2
    N, H, W = 2, 8, 8          # inputs spatial 8x8 -> upsampled to 16x16

    params = init_params(kparam, in_channels, upsample_out_channels,
                         conv_out_channels, num_conv)
    kparams = prepare_params(params)
    inputs = jax.random.normal(kx, (N, in_channels, H, W), jnp.float32)
    skip_features = jax.random.normal(
        ksk, (N, conv_out_channels, 2 * H, 2 * W), jnp.float32)

    out = jax.block_until_ready(up_block_forward(kparams, inputs, skip_features))
    ref = jax.block_until_ready(reference_forward(params, inputs, skip_features))

    assert out.shape == (N, conv_out_channels, 2 * H, 2 * W), out.shape
    assert bool(jnp.allclose(out, ref, rtol=5e-2, atol=5e-2)), (
        float(jnp.max(jnp.abs(out - ref))))
    print("KERNEL_OK")
</pallas_src>

<mosaic_0001>
module attributes {stable_mosaic.version = 11 : i64} {
  func.func @kernel(%arg0: i32, %arg1: memref<1x8x8x6xbf16, #tpu.memory_space<vmem>>, %arg2: memref<1x16x16x4xbf16, #tpu.memory_space<vmem>>, %arg3: memref<6x16xbf16, #tpu.memory_space<vmem>>, %arg4: memref<1x4xf32, #tpu.memory_space<vmem>>, %arg5: memref<1x4xf32, #tpu.memory_space<vmem>>, %arg6: memref<36x4xbf16, #tpu.memory_space<vmem>>, %arg7: memref<36x4xbf16, #tpu.memory_space<vmem>>, %arg8: memref<1x4xf32, #tpu.memory_space<vmem>>, %arg9: memref<1x4xf32, #tpu.memory_space<vmem>>, %arg10: memref<36x4xbf16, #tpu.memory_space<vmem>>, %arg11: memref<1x4xf32, #tpu.memory_space<vmem>>, %arg12: memref<1x4xf32, #tpu.memory_space<vmem>>, %arg13: memref<1x16x16x4xf32, #tpu.memory_space<vmem>>) attributes {dimension_semantics = [#tpu.dimension_semantics<parallel>], iteration_bounds = array<i64: 2>, scalar_prefetch = 0 : i64, scratch_operands = 0 : i64, tpu.core_type = #tpu.core_type<tc>, window_params = [{transform_indices = @transform_0, window_bounds = array<i64: 1, 8, 8, 6>}, {transform_indices = @transform_1, window_bounds = array<i64: 1, 16, 16, 4>}, {pipeline_mode = #tpu.pipeline_mode<synchronous>, transform_indices = @transform_2, window_bounds = array<i64: 6, 16>}, {pipeline_mode = #tpu.pipeline_mode<synchronous>, transform_indices = @transform_3, window_bounds = array<i64: 1, 4>}, {pipeline_mode = #tpu.pipeline_mode<synchronous>, transform_indices = @transform_4, window_bounds = array<i64: 1, 4>}, {pipeline_mode = #tpu.pipeline_mode<synchronous>, transform_indices = @transform_5, window_bounds = array<i64: 36, 4>}, {pipeline_mode = #tpu.pipeline_mode<synchronous>, transform_indices = @transform_6, window_bounds = array<i64: 36, 4>}, {pipeline_mode = #tpu.pipeline_mode<synchronous>, transform_indices = @transform_7, window_bounds = array<i64: 1, 4>}, {pipeline_mode = #tpu.pipeline_mode<synchronous>, transform_indices = @transform_8, window_bounds = array<i64: 1, 4>}, {pipeline_mode = #tpu.pipeline_mode<synchronous>, transform_indices = @transform_9, window_bounds = array<i64: 36, 4>}, {pipeline_mode = #tpu.pipeline_mode<synchronous>, transform_indices = @transform_10, window_bounds = array<i64: 1, 4>}, {pipeline_mode = #tpu.pipeline_mode<synchronous>, transform_indices = @transform_11, window_bounds = array<i64: 1, 4>}, {transform_indices = @transform_12, window_bounds = array<i64: 1, 16, 16, 4>}]} {
    %c0 = arith.constant 0 : index
    %c0_0 = arith.constant 0 : index
    %c0_1 = arith.constant 0 : index
    %c0_2 = arith.constant 0 : index
    %0 = vector.load %arg1[%c0, %c0_0, %c0_1, %c0_2] : memref<1x8x8x6xbf16, #tpu.memory_space<vmem>>, vector<1x8x8x6xbf16>
    %1 = vector.shape_cast %0 : vector<1x8x8x6xbf16> to vector<8x8x6xbf16>
    %2 = vector.shape_cast %1 : vector<8x8x6xbf16> to vector<64x6xbf16>
    %c0_3 = arith.constant 0 : index
    %c0_4 = arith.constant 0 : index
    %3 = vector.load %arg3[%c0_3, %c0_4] : memref<6x16xbf16, #tpu.memory_space<vmem>>, vector<6x16xbf16>
    %cst = arith.constant dense<0.000000e+00> : vector<64x16xf32>
    %4 = tpu.matmul %2, %3, %cst {dimension_numbers = #tpu.dot_dimension_numbers<[1], [0], [0], [1], [0, 0, 1, 1], [], []>} : vector<64x6xbf16>, vector<6x16xbf16>, vector<64x16xf32> -> vector<64x16xf32>
    %cst_5 = arith.constant dense<0.000000e+00> : vector<16xf32>
    %5 = vector.multi_reduction <add>, %4, %cst_5 [0] : vector<64x16xf32> to vector<16xf32>
    %6 = vector.shape_cast %5 : vector<16xf32> to vector<1x16xf32>
    %7 = vector.extract_strided_slice %6 {offsets = [0, 0], sizes = [1, 4], strides = [1, 1]} : vector<1x16xf32> to vector<1x4xf32>
    %8 = vector.extract_strided_slice %6 {offsets = [0, 4], sizes = [1, 4], strides = [1, 1]} : vector<1x16xf32> to vector<1x4xf32>
    %9 = arith.addf %7, %8 : vector<1x4xf32>
    %10 = vector.extract_strided_slice %6 {offsets = [0, 8], sizes = [1, 4], strides = [1, 1]} : vector<1x16xf32> to vector<1x4xf32>
    %11 = arith.addf %9, %10 : vector<1x4xf32>
    %12 = vector.extract_strided_slice %6 {offsets = [0, 12], sizes = [1, 4], strides = [1, 1]} : vector<1x16xf32> to vector<1x4xf32>
    %13 = arith.addf %11, %12 : vector<1x4xf32>
    %cst_6 = arith.constant 3.906250e-03 : f32
    %14 = vector.broadcast %cst_6 : f32 to vector<1x4xf32>
    %15 = arith.mulf %13, %14 : vector<1x4xf32>
    %16 = arith.mulf %4, %4 : vector<64x16xf32>
    %cst_7 = arith.constant dense<0.000000e+00> : vector<16xf32>
    %17 = vector.multi_reduction <add>, %16, %cst_7 [0] : vector<64x16xf32> to vector<16xf32>
    %18 = vector.shape_cast %17 : vector<16xf32> to vector<1x16xf32>
    %19 = vector.extract_strided_slice %18 {offsets = [0, 0], sizes = [1, 4], strides = [1, 1]} : vector<1x16xf32> to vector<1x4xf32>
    %20 = vector.extract_strided_slice %18 {offsets = [0, 4], sizes = [1, 4], strides = [1, 1]} : vector<1x16xf32> to vector<1x4xf32>
    %21 = arith.addf %19, %20 : vector<1x4xf32>
    %22 = vector.extract_strided_slice %18 {offsets = [0, 8], sizes = [1, 4], strides = [1, 1]} : vector<1x16xf32> to vector<1x4xf32>
    %23 = arith.addf %21, %22 : vector<1x4xf32>
    %24 = vector.extract_strided_slice %18 {offsets = [0, 12], sizes = [1, 4], strides = [1, 1]} : vector<1x16xf32> to vector<1x4xf32>
    %25 = arith.addf %23, %24 : vector<1x4xf32>
    %cst_8 = arith.constant 3.906250e-03 : f32
    %26 = vector.broadcast %cst_8 : f32 to vector<1x4xf32>
    %27 = arith.mulf %25, %26 : vector<1x4xf32>
    %28 = arith.mulf %15, %15 : vector<1x4xf32>
    %29 = arith.subf %27, %28 : vector<1x4xf32>
    %cst_9 = arith.constant 0.000000e+00 : f32
    %30 = vector.broadcast %cst_9 : f32 to vector<1x4xf32>
    %31 = arith.maximumf %29, %30 : vector<1x4xf32>
    %cst_10 = arith.constant 9.99999974E-6 : f32
    %32 = vector.broadcast %cst_10 : f32 to vector<1x4xf32>
    %33 = arith.addf %31, %32 : vector<1x4xf32>
    %34 = math.rsqrt %33 : vector<1x4xf32>
    %c0_11 = arith.constant 0 : index
    %c0_12 = arith.constant 0 : index
    %35 = vector.load %arg4[%c0_11, %c0_12] : memref<1x4xf32, #tpu.memory_space<vmem>>, vector<1x4xf32>
    %36 = arith.mulf %34, %35 : vector<1x4xf32>
    %c0_13 = arith.constant 0 : index
    %c0_14 = arith.constant 0 : index
    %37 = vector.load %arg5[%c0_13, %c0_14] : memref<1x4xf32, #tpu.memory_space<vmem>>, vector<1x4xf32>
    %38 = arith.mulf %15, %36 : vector<1x4xf32>
    %39 = arith.subf %37, %38 : vector<1x4xf32>
    %40 = tpu.concatenate %36, %36, %36, %36 in 1 : vector<1x4xf32>, vector<1x4xf32>, vector<1x4xf32>, vector<1x4xf32> -> vector<1x16xf32>
    %41 = tpu.concatenate %39, %39, %39, %39 in 1 : vector<1x4xf32>, vector<1x4xf32>, vector<1x4xf32>, vector<1x4xf32> -> vector<1x16xf32>
    %42 = vector.broadcast %40 : vector<1x16xf32> to vector<64x16xf32>
    %43 = arith.mulf %4, %42 : vector<64x16xf32>
    %44 = vector.broadcast %41 : vector<1x16xf32> to vector<64x16xf32>
    %45 = arith.addf %43, %44 : vector<64x16xf32>
    %cst_15 = arith.constant 0.000000e+00 : f32
    %46 = vector.broadcast %cst_15 : f32 to vector<64x16xf32>
    %47 = arith.cmpf ogt, %45, %46 : vector<64x16xf32>
    %cst_16 = arith.constant 0.00999999977 : f32
    %48 = vector.broadcast %cst_16 : f32 to vector<64x16xf32>
    %49 = arith.mulf %48, %45 : vector<64x16xf32>
    %50 = arith.select %47, %45, %49 : vector<64x16xi1>, vector<64x16xf32>
    %51 = vector.extract_strided_slice %50 {offsets = [0, 0], sizes = [64, 4], strides = [1, 1]} : vector<64x16xf32> to vector<64x4xf32>
    %52 = vector.extract_strided_slice %50 {offsets = [0, 4], sizes = [64, 4], strides = [1, 1]} : vector<64x16xf32> to vector<64x4xf32>
    %53 = vector.extract_strided_slice %50 {offsets = [0, 8], sizes = [64, 4], strides = [1, 1]} : vector<64x16xf32> to vector<64x4xf32>
    %54 = vector.extract_strided_slice %50 {offsets = [0, 12], sizes = [64, 4], strides = [1, 1]} : vector<64x16xf32> to vector<64x4xf32>
    %55 = vector.shape_cast %51 : vector<64x4xf32> to vector<64x1x4xf32>
    %56 = vector.shape_cast %52 : vector<64x4xf32> to vector<64x1x4xf32>
    %57 = tpu.concatenate %55, %56 in 1 : vector<64x1x4xf32>, vector<64x1x4xf32> -> vector<64x2x4xf32>
    %58 = vector.shape_cast %57 : vector<64x2x4xf32> to vector<8x16x4xf32>
    %59 = vector.shape_cast %53 : vector<64x4xf32> to vector<64x1x4xf32>
    %60 = vector.shape_cast %54 : vector<64x4xf32> to vector<64x1x4xf32>
    %61 = tpu.concatenate %59, %60 in 1 : vector<64x1x4xf32>, vector<64x1x4xf32> -> vector<64x2x4xf32>
    %62 = vector.shape_cast %61 : vector<64x2x4xf32> to vector<8x16x4xf32>
    %63 = tpu.concatenate %58, %62 in 1 : vector<8x16x4xf32>, vector<8x16x4xf32> -> vector<8x32x4xf32>
    %64 = vector.shape_cast %63 : vector<8x32x4xf32> to vector<16x16x4xf32>
    %65 = arith.truncf %64 : vector<16x16x4xf32> to vector<16x16x4xbf16>
    %c0_17 = arith.constant 0 : index
    %c0_18 = arith.constant 0 : index
    %c0_19 = arith.constant 0 : index
    %c0_20 = arith.constant 0 : index
    %66 = vector.load %arg2[%c0_17, %c0_18, %c0_19, %c0_20] : memref<1x16x16x4xbf16, #tpu.memory_space<vmem>>, vector<1x16x16x4xbf16>
    %67 = vector.shape_cast %66 : vector<1x16x16x4xbf16> to vector<16x16x4xbf16>
    %cst_21 = arith.constant 0.000000e+00 : bf16
    %68 = vector.broadcast %cst_21 : bf16 to vector<1x16x4xbf16>
    %69 = tpu.concatenate %68, %67, %68 in 0 : vector<1x16x4xbf16>, vector<16x16x4xbf16>, vector<1x16x4xbf16> -> vector<18x16x4xbf16>
    %cst_22 = arith.constant 0.000000e+00 : bf16
    %70 = vector.broadcast %cst_22 : bf16 to vector<18x1x4xbf16>
    %71 = tpu.concatenate %70, %69, %70 in 1 : vector<18x1x4xbf16>, vector<18x16x4xbf16>, vector<18x1x4xbf16> -> vector<18x18x4xbf16>
    %72 = vector.extract_strided_slice %71 {offsets = [0, 0, 0], sizes = [16, 16, 4], strides = [1, 1, 1]} : vector<18x18x4xbf16> to vector<16x16x4xbf16>
    %73 = vector.extract_strided_slice %71 {offsets = [0, 1, 0], sizes = [16, 16, 4], strides = [1, 1, 1]} : vector<18x18x4xbf16> to vector<16x16x4xbf16>
    %74 = vector.extract_strided_slice %71 {offsets = [0, 2, 0], sizes = [16, 16, 4], strides = [1, 1, 1]} : vector<18x18x4xbf16> to vector<16x16x4xbf16>
    %75 = vector.extract_strided_slice %71 {offsets = [1, 0, 0], sizes = [16, 16, 4], strides = [1, 1, 1]} : vector<18x18x4xbf16> to vector<16x16x4xbf16>
    %76 = vector.extract_strided_slice %71 {offsets = [1, 1, 0], sizes = [16, 16, 4], strides = [1, 1, 1]} : vector<18x18x4xbf16> to vector<16x16x4xbf16>
    %77 = vector.extract_strided_slice %71 {offsets = [1, 2, 0], sizes = [16, 16, 4], strides = [1, 1, 1]} : vector<18x18x4xbf16> to vector<16x16x4xbf16>
    %78 = vector.extract_strided_slice %71 {offsets = [2, 0, 0], sizes = [16, 16, 4], strides = [1, 1, 1]} : vector<18x18x4xbf16> to vector<16x16x4xbf16>
    %79 = vector.extract_strided_slice %71 {offsets = [2, 1, 0], sizes = [16, 16, 4], strides = [1, 1, 1]} : vector<18x18x4xbf16> to vector<16x16x4xbf16>
    %80 = vector.extract_strided_slice %71 {offsets = [2, 2, 0], sizes = [16, 16, 4], strides = [1, 1, 1]} : vector<18x18x4xbf16> to vector<16x16x4xbf16>
    %81 = tpu.concatenate %72, %73, %74, %75, %76, %77, %78, %79, %80 in 2 : vector<16x16x4xbf16>, vector<16x16x4xbf16>, vector<16x16x4xbf16>, vector<16x16x4xbf16>, vector<16x16x4xbf16>, vector<16x16x4xbf16>, vector<16x16x4xbf16>, vector<16x16x4xbf16>, vector<16x16x4xbf16> -> vector<16x16x36xbf16>
    %82 = vector.shape_cast %81 : vector<16x16x36xbf16> to vector<256x36xbf16>
    %c0_23 = arith.constant 0 : index
    %c0_24 = arith.constant 0 : index
    %83 = vector.load %arg6[%c0_23, %c0_24] : memref<36x4xbf16, #tpu.memory_space<vmem>>, vector<36x4xbf16>
    %cst_25 = arith.constant dense<0.000000e+00> : vector<256x4xf32>
    %84 = tpu.matmul %82, %83, %cst_25 {dimension_numbers = #tpu.dot_dimension_numbers<[1], [0], [0], [1], [0, 0, 1, 1], [], []>} : vector<256x36xbf16>, vector<36x4xbf16>, vector<256x4xf32> -> vector<256x4xf32>
    %cst_26 = arith.constant 0.000000e+00 : bf16
    %85 = vector.broadcast %cst_26 : bf16 to vector<1x16x4xbf16>
    %86 = tpu.concatenate %85, %65, %85 in 0 : vector<1x16x4xbf16>, vector<16x16x4xbf16>, vector<1x16x4xbf16> -> vector<18x16x4xbf16>
    %cst_27 = arith.constant 0.000000e+00 : bf16
    %87 = vector.broadcast %cst_27 : bf16 to vector<18x1x4xbf16>
    %88 = tpu.concatenate %87, %86, %87 in 1 : vector<18x1x4xbf16>, vector<18x16x4xbf16>, vector<18x1x4xbf16> -> vector<18x18x4xbf16>
    %89 = vector.extract_strided_slice %88 {offsets = [0, 0, 0], sizes = [16, 16, 4], strides = [1, 1, 1]} : vector<18x18x4xbf16> to vector<16x16x4xbf16>
    %90 = vector.extract_strided_slice %88 {offsets = [0, 1, 0], sizes = [16, 16, 4], strides = [1, 1, 1]} : vector<18x18x4xbf16> to vector<16x16x4xbf16>
    %91 = vector.extract_strided_slice %88 {offsets = [0, 2, 0], sizes = [16, 16, 4], strides = [1, 1, 1]} : vector<18x18x4xbf16> to vector<16x16x4xbf16>
    %92 = vector.extract_strided_slice %88 {offsets = [1, 0, 0], sizes = [16, 16, 4], strides = [1, 1, 1]} : vector<18x18x4xbf16> to vector<16x16x4xbf16>
    %93 = vector.extract_strided_slice %88 {offsets = [1, 1, 0], sizes = [16, 16, 4], strides = [1, 1, 1]} : vector<18x18x4xbf16> to vector<16x16x4xbf16>
    %94 = vector.extract_strided_slice %88 {offsets = [1, 2, 0], sizes = [16, 16, 4], strides = [1, 1, 1]} : vector<18x18x4xbf16> to vector<16x16x4xbf16>
    %95 = vector.extract_strided_slice %88 {offsets = [2, 0, 0], sizes = [16, 16, 4], strides = [1, 1, 1]} : vector<18x18x4xbf16> to vector<16x16x4xbf16>
    %96 = vector.extract_strided_slice %88 {offsets = [2, 1, 0], sizes = [16, 16, 4], strides = [1, 1, 1]} : vector<18x18x4xbf16> to vector<16x16x4xbf16>
    %97 = vector.extract_strided_slice %88 {offsets = [2, 2, 0], sizes = [16, 16, 4], strides = [1, 1, 1]} : vector<18x18x4xbf16> to vector<16x16x4xbf16>
    %98 = tpu.concatenate %89, %90, %91, %92, %93, %94, %95, %96, %97 in 2 : vector<16x16x4xbf16>, vector<16x16x4xbf16>, vector<16x16x4xbf16>, vector<16x16x4xbf16>, vector<16x16x4xbf16>, vector<16x16x4xbf16>, vector<16x16x4xbf16>, vector<16x16x4xbf16>, vector<16x16x4xbf16> -> vector<16x16x36xbf16>
    %99 = vector.shape_cast %98 : vector<16x16x36xbf16> to vector<256x36xbf16>
    %c0_28 = arith.constant 0 : index
    %c0_29 = arith.constant 0 : index
    %100 = vector.load %arg7[%c0_28, %c0_29] : memref<36x4xbf16, #tpu.memory_space<vmem>>, vector<36x4xbf16>
    %cst_30 = arith.constant dense<0.000000e+00> : vector<256x4xf32>
    %101 = tpu.matmul %99, %100, %cst_30 {dimension_numbers = #tpu.dot_dimension_numbers<[1], [0], [0], [1], [0, 0, 1, 1], [], []>} : vector<256x36xbf16>, vector<36x4xbf16>, vector<256x4xf32> -> vector<256x4xf32>
    %102 = arith.addf %84, %101 : vector<256x4xf32>
    %c0_31 = arith.constant 0 : index
    %c0_32 = arith.constant 0 : index
    %103 = vector.load %arg8[%c0_31, %c0_32] : memref<1x4xf32, #tpu.memory_space<vmem>>, vector<1x4xf32>
    %c0_33 = arith.constant 0 : index
    %c0_34 = arith.constant 0 : index
    %104 = vector.load %arg9[%c0_33, %c0_34] : memref<1x4xf32, #tpu.memory_space<vmem>>, vector<1x4xf32>
    %cst_35 = arith.constant dense<0.000000e+00> : vector<4xf32>
    %105 = vector.multi_reduction <add>, %102, %cst_35 [0] : vector<256x4xf32> to vector<4xf32>
    %106 = vector.shape_cast %105 : vector<4xf32> to vector<1x4xf32>
    %cst_36 = arith.constant 3.906250e-03 : f32
    %107 = vector.broadcast %cst_36 : f32 to vector<1x4xf32>
    %108 = arith.mulf %106, %107 : vector<1x4xf32>
    %109 = arith.mulf %102, %102 : vector<256x4xf32>
    %cst_37 = arith.constant dense<0.000000e+00> : vector<4xf32>
    %110 = vector.multi_reduction <add>, %109, %cst_37 [0] : vector<256x4xf32> to vector<4xf32>
    %111 = vector.shape_cast %110 : vector<4xf32> to vector<1x4xf32>
    %cst_38 = arith.constant 3.906250e-03 : f32
    %112 = vector.broadcast %cst_38 : f32 to vector<1x4xf32>
    %113 = arith.mulf %111, %112 : vector<1x4xf32>
    %114 = arith.mulf %108, %108 : vector<1x4xf32>
    %115 = arith.subf %113, %114 : vector<1x4xf32>
    %cst_39 = arith.constant 0.000000e+00 : f32
    %116 = vector.broadcast %cst_39 : f32 to vector<1x4xf32>
    %117 = arith.maximumf %115, %116 : vector<1x4xf32>
    %cst_40 = arith.constant 9.99999974E-6 : f32
    %118 = vector.broadcast %cst_40 : f32 to vector<1x4xf32>
    %119 = arith.addf %117, %118 : vector<1x4xf32>
    %120 = math.rsqrt %119 : vector<1x4xf32>
    %121 = arith.mulf %120, %103 : vector<1x4xf32>
    %122 = arith.mulf %108, %121 : vector<1x4xf32>
    %123 = arith.subf %104, %122 : vector<1x4xf32>
    %124 = vector.broadcast %121 : vector<1x4xf32> to vector<256x4xf32>
    %125 = arith.mulf %102, %124 : vector<256x4xf32>
    %126 = vector.broadcast %123 : vector<1x4xf32> to vector<256x4xf32>
    %127 = arith.addf %125, %126 : vector<256x4xf32>
    %cst_41 = arith.constant 0.000000e+00 : f32
    %128 = vector.broadcast %cst_41 : f32 to vector<256x4xf32>
    %129 = arith.cmpf ogt, %127, %128 : vector<256x4xf32>
    %cst_42 = arith.constant 0.00999999977 : f32
    %130 = vector.broadcast %cst_42 : f32 to vector<256x4xf32>
    %131 = arith.mulf %130, %127 : vector<256x4xf32>
    %132 = arith.select %129, %127, %131 : vector<256x4xi1>, vector<256x4xf32>
    %133 = vector.shape_cast %132 : vector<256x4xf32> to vector<16x16x4xf32>
    %134 = arith.truncf %133 : vector<16x16x4xf32> to vector<16x16x4xbf16>
    %cst_43 = arith.constant 0.000000e+00 : bf16
    %135 = vector.broadcast %cst_43 : bf16 to vector<1x16x4xbf16>
    %136 = tpu.concatenate %135, %134, %135 in 0 : vector<1x16x4xbf16>, vector<16x16x4xbf16>, vector<1x16x4xbf16> -> vector<18x16x4xbf16>
    %cst_44 = arith.constant 0.000000e+00 : bf16
    %137 = vector.broadcast %cst_44 : bf16 to vector<18x1x4xbf16>
    %138 = tpu.concatenate %137, %136, %137 in 1 : vector<18x1x4xbf16>, vector<18x16x4xbf16>, vector<18x1x4xbf16> -> vector<18x18x4xbf16>
    %139 = vector.extract_strided_slice %138 {offsets = [0, 0, 0], sizes = [16, 16, 4], strides = [1, 1, 1]} : vector<18x18x4xbf16> to vector<16x16x4xbf16>
    %140 = vector.extract_strided_slice %138 {offsets = [0, 1, 0], sizes = [16, 16, 4], strides = [1, 1, 1]} : vector<18x18x4xbf16> to vector<16x16x4xbf16>
    %141 = vector.extract_strided_slice %138 {offsets = [0, 2, 0], sizes = [16, 16, 4], strides = [1, 1, 1]} : vector<18x18x4xbf16> to vector<16x16x4xbf16>
    %142 = vector.extract_strided_slice %138 {offsets = [1, 0, 0], sizes = [16, 16, 4], strides = [1, 1, 1]} : vector<18x18x4xbf16> to vector<16x16x4xbf16>
    %143 = vector.extract_strided_slice %138 {offsets = [1, 1, 0], sizes = [16, 16, 4], strides = [1, 1, 1]} : vector<18x18x4xbf16> to vector<16x16x4xbf16>
    %144 = vector.extract_strided_slice %138 {offsets = [1, 2, 0], sizes = [16, 16, 4], strides = [1, 1, 1]} : vector<18x18x4xbf16> to vector<16x16x4xbf16>
    %145 = vector.extract_strided_slice %138 {offsets = [2, 0, 0], sizes = [16, 16, 4], strides = [1, 1, 1]} : vector<18x18x4xbf16> to vector<16x16x4xbf16>
    %146 = vector.extract_strided_slice %138 {offsets = [2, 1, 0], sizes = [16, 16, 4], strides = [1, 1, 1]} : vector<18x18x4xbf16> to vector<16x16x4xbf16>
    %147 = vector.extract_strided_slice %138 {offsets = [2, 2, 0], sizes = [16, 16, 4], strides = [1, 1, 1]} : vector<18x18x4xbf16> to vector<16x16x4xbf16>
    %148 = tpu.concatenate %139, %140, %141, %142, %143, %144, %145, %146, %147 in 2 : vector<16x16x4xbf16>, vector<16x16x4xbf16>, vector<16x16x4xbf16>, vector<16x16x4xbf16>, vector<16x16x4xbf16>, vector<16x16x4xbf16>, vector<16x16x4xbf16>, vector<16x16x4xbf16>, vector<16x16x4xbf16> -> vector<16x16x36xbf16>
    %149 = vector.shape_cast %148 : vector<16x16x36xbf16> to vector<256x36xbf16>
    %c0_45 = arith.constant 0 : index
    %c0_46 = arith.constant 0 : index
    %150 = vector.load %arg10[%c0_45, %c0_46] : memref<36x4xbf16, #tpu.memory_space<vmem>>, vector<36x4xbf16>
    %cst_47 = arith.constant dense<0.000000e+00> : vector<256x4xf32>
    %151 = tpu.matmul %149, %150, %cst_47 {dimension_numbers = #tpu.dot_dimension_numbers<[1], [0], [0], [1], [0, 0, 1, 1], [], []>} : vector<256x36xbf16>, vector<36x4xbf16>, vector<256x4xf32> -> vector<256x4xf32>
    %c0_48 = arith.constant 0 : index
    %c0_49 = arith.constant 0 : index
    %152 = vector.load %arg11[%c0_48, %c0_49] : memref<1x4xf32, #tpu.memory_space<vmem>>, vector<1x4xf32>
    %c0_50 = arith.constant 0 : index
    %c0_51 = arith.constant 0 : index
    %153 = vector.load %arg12[%c0_50, %c0_51] : memref<1x4xf32, #tpu.memory_space<vmem>>, vector<1x4xf32>
    %cst_52 = arith.constant dense<0.000000e+00> : vector<4xf32>
    %154 = vector.multi_reduction <add>, %151, %cst_52 [0] : vector<256x4xf32> to vector<4xf32>
    %155 = vector.shape_cast %154 : vector<4xf32> to vector<1x4xf32>
    %cst_53 = arith.constant 3.906250e-03 : f32
    %156 = vector.broadcast %cst_53 : f32 to vector<1x4xf32>
    %157 = arith.mulf %155, %156 : vector<1x4xf32>
    %158 = arith.mulf %151, %151 : vector<256x4xf32>
    %cst_54 = arith.constant dense<0.000000e+00> : vector<4xf32>
    %159 = vector.multi_reduction <add>, %158, %cst_54 [0] : vector<256x4xf32> to vector<4xf32>
    %160 = vector.shape_cast %159 : vector<4xf32> to vector<1x4xf32>
    %cst_55 = arith.constant 3.906250e-03 : f32
    %161 = vector.broadcast %cst_55 : f32 to vector<1x4xf32>
    %162 = arith.mulf %160, %161 : vector<1x4xf32>
    %163 = arith.mulf %157, %157 : vector<1x4xf32>
    %164 = arith.subf %162, %163 : vector<1x4xf32>
    %cst_56 = arith.constant 0.000000e+00 : f32
    %165 = vector.broadcast %cst_56 : f32 to vector<1x4xf32>
    %166 = arith.maximumf %164, %165 : vector<1x4xf32>
    %cst_57 = arith.constant 9.99999974E-6 : f32
    %167 = vector.broadcast %cst_57 : f32 to vector<1x4xf32>
    %168 = arith.addf %166, %167 : vector<1x4xf32>
    %169 = math.rsqrt %168 : vector<1x4xf32>
    %170 = arith.mulf %169, %152 : vector<1x4xf32>
    %171 = arith.mulf %157, %170 : vector<1x4xf32>
    %172 = arith.subf %153, %171 : vector<1x4xf32>
    %173 = vector.broadcast %170 : vector<1x4xf32> to vector<256x4xf32>
    %174 = arith.mulf %151, %173 : vector<256x4xf32>
    %175 = vector.broadcast %172 : vector<1x4xf32> to vector<256x4xf32>
    %176 = arith.addf %174, %175 : vector<256x4xf32>
    %cst_58 = arith.constant 0.000000e+00 : f32
    %177 = vector.broadcast %cst_58 : f32 to vector<256x4xf32>
    %178 = arith.cmpf ogt, %176, %177 : vector<256x4xf32>
    %cst_59 = arith.constant 0.00999999977 : f32
    %179 = vector.broadcast %cst_59 : f32 to vector<256x4xf32>
    %180 = arith.mulf %179, %176 : vector<256x4xf32>
    %181 = arith.select %178, %176, %180 : vector<256x4xi1>, vector<256x4xf32>
    %182 = vector.shape_cast %181 : vector<256x4xf32> to vector<1x16x16x4xf32>
    %c0_60 = arith.constant 0 : index
    %c0_61 = arith.constant 0 : index
    %c0_62 = arith.constant 0 : index
    %c0_63 = arith.constant 0 : index
    %183 = vector.load %arg13[%c0_60, %c0_61, %c0_62, %c0_63] : memref<1x16x16x4xf32, #tpu.memory_space<vmem>>, vector<1x16x16x4xf32>
    tpu.vector_store %arg13[%c0_60, %c0_61, %c0_62, %c0_63], %182 {strides = array<i32>} : memref<1x16x16x4xf32, #tpu.memory_space<vmem>>, vector<1x16x16x4xf32>,
    return
  }
  func.func @transform_0(%arg0: i32) -> (i32, i32, i32, i32) {
    %c0_i32 = arith.constant 0 : i32
    %c0_i32_0 = arith.constant 0 : i32
    %c0_i32_1 = arith.constant 0 : i32
    %c0_i32_2 = arith.constant 0 : i32
    return %arg0, %c0_i32, %c0_i32_0, %c0_i32_1 : i32, i32, i32, i32
  }
  func.func @transform_1(%arg0: i32) -> (i32, i32, i32, i32) {
    %c0_i32 = arith.constant 0 : i32
    %c0_i32_0 = arith.constant 0 : i32
    %c0_i32_1 = arith.constant 0 : i32
    %c0_i32_2 = arith.constant 0 : i32
    return %arg0, %c0_i32, %c0_i32_0, %c0_i32_1 : i32, i32, i32, i32
  }
  func.func @transform_2(%arg0: i32) -> (i32, i32) {
    %c0_i32 = arith.constant 0 : i32
    %c0_i32_0 = arith.constant 0 : i32
    %c0_i32_1 = arith.constant 0 : i32
    return %c0_i32, %c0_i32_0 : i32, i32
  }
  func.func @transform_3(%arg0: i32) -> (i32, i32) {
    %c0_i32 = arith.constant 0 : i32
    %c0_i32_0 = arith.constant 0 : i32
    %c0_i32_1 = arith.constant 0 : i32
    return %c0_i32, %c0_i32_0 : i32, i32
  }
  func.func @transform_4(%arg0: i32) -> (i32, i32) {
    %c0_i32 = arith.constant 0 : i32
    %c0_i32_0 = arith.constant 0 : i32
    %c0_i32_1 = arith.constant 0 : i32
    return %c0_i32, %c0_i32_0 : i32, i32
  }
  func.func @transform_5(%arg0: i32) -> (i32, i32) {
    %c0_i32 = arith.constant 0 : i32
    %c0_i32_0 = arith.constant 0 : i32
    %c0_i32_1 = arith.constant 0 : i32
    return %c0_i32, %c0_i32_0 : i32, i32
  }
  func.func @transform_6(%arg0: i32) -> (i32, i32) {
    %c0_i32 = arith.constant 0 : i32
    %c0_i32_0 = arith.constant 0 : i32
    %c0_i32_1 = arith.constant 0 : i32
    return %c0_i32, %c0_i32_0 : i32, i32
  }
  func.func @transform_7(%arg0: i32) -> (i32, i32) {
    %c0_i32 = arith.constant 0 : i32
    %c0_i32_0 = arith.constant 0 : i32
    %c0_i32_1 = arith.constant 0 : i32
    return %c0_i32, %c0_i32_0 : i32, i32
  }
  func.func @transform_8(%arg0: i32) -> (i32, i32) {
    %c0_i32 = arith.constant 0 : i32
    %c0_i32_0 = arith.constant 0 : i32
    %c0_i32_1 = arith.constant 0 : i32
    return %c0_i32, %c0_i32_0 : i32, i32
  }
  func.func @transform_9(%arg0: i32) -> (i32, i32) {
    %c0_i32 = arith.constant 0 : i32
    %c0_i32_0 = arith.constant 0 : i32
    %c0_i32_1 = arith.constant 0 : i32
    return %c0_i32, %c0_i32_0 : i32, i32
  }
  func.func @transform_10(%arg0: i32) -> (i32, i32) {
    %c0_i32 = arith.constant 0 : i32
    %c0_i32_0 = arith.constant 0 : i32
    %c0_i32_1 = arith.constant 0 : i32
    return %c0_i32, %c0_i32_0 : i32, i32
  }
  func.func @transform_11(%arg0: i32) -> (i32, i32) {
    %c0_i32 = arith.constant 0 : i32
    %c0_i32_0 = arith.constant 0 : i32
    %c0_i32_1 = arith.constant 0 : i32
    return %c0_i32, %c0_i32_0 : i32, i32
  }
  func.func @transform_12(%arg0: i32) -> (i32, i32, i32, i32) {
    %c0_i32 = arith.constant 0 : i32
    %c0_i32_0 = arith.constant 0 : i32
    %c0_i32_1 = arith.constant 0 : i32
    %c0_i32_2 = arith.constant 0 : i32
    return %arg0, %c0_i32, %c0_i32_0, %c0_i32_1 : i32, i32, i32, i32
  }
}

</mosaic_0001>

<llo_original>
// kernel: tpu_custom_call.1
$region0: #{tpu_custom_call.1}
  #allocation0 [shape = 'u32[]', space=smem, size = 0x4, offset = 0x4, fixed_abs, tag = 'smem constant byte address 0x4 - core index']
  #allocation1 [shape = 'u32[144,128]{1,0:T(1,128)}', space=vmem, size = 0x12000, scoped, tag = 'internal scratch']
  %s0 = inlined_call_operand.vmem [shape: bf16[2,8,8,6], index: 0, kind: input, shape index: {}]
  %s1 = inlined_call_operand.vmem [shape: bf16[2,16,16,4], index: 1, kind: input, shape index: {}]
  %s2 = inlined_call_operand.vmem [shape: bf16[6,16], index: 2, kind: input, shape index: {}]
  %s3 = inlined_call_operand.vmem [shape: f32[1,4], index: 3, kind: input, shape index: {}]
  %s4 = inlined_call_operand.vmem [shape: f32[1,4], index: 4, kind: input, shape index: {}]
  %s5 = inlined_call_operand.vmem [shape: bf16[36,4], index: 5, kind: input, shape index: {}]
  %s6 = inlined_call_operand.vmem [shape: bf16[36,4], index: 6, kind: input, shape index: {}]
  %s7 = inlined_call_operand.vmem [shape: f32[1,4], index: 7, kind: input, shape index: {}]
  %s8 = inlined_call_operand.vmem [shape: f32[1,4], index: 8, kind: input, shape index: {}]
  %s9 = inlined_call_operand.vmem [shape: bf16[36,4], index: 9, kind: input, shape index: {}]
  %s10 = inlined_call_operand.vmem [shape: f32[1,4], index: 10, kind: input, shape index: {}]
  %s11 = inlined_call_operand.vmem [shape: f32[1,4], index: 11, kind: input, shape index: {}]
  %s12 = inlined_call_operand.vmem [shape: f32[2,16,16,4], index: 12, kind: output, shape index: {}]
  %s13 = sld [smem:[#allocation0]]
  $region81: #{tpu_custom_call.1} parent=0
    _
  %s15 = ssub.s32 1, %s13
  %s16 = scalar_select 0, %s15, %s13
  loop: start=0, step=1, limit=4
  $region2: #{tpu_custom_call.1} parent=0 // loop_pre_header
    _
  $region3: #{tpu_custom_call.1} parent=0 // loop_header
    %s18 = sphi 0, %s22
    %p19 = scmp.ge.s32.totalorder %s18, 4
    %s28 = sphi 0, %s30
    %s31 = sphi 0, %s28
    %s32 = sphi 0, %s31
    %s48 = sphi 0, %s32
    %s54 = sphi 0, %s56
    %s57 = sphi 0, %s54
    %s58 = sphi 0, %s57
    %s74 = sphi 0, %s58
    %s78 = sphi 0, %s78
    %s80 = sphi 0, %s78
    %s81 = sphi 0, %s80
    %s95 = sphi 0, %s81
    %s99 = sphi 0, %s99
    %s101 = sphi 0, %s99
    %s102 = sphi 0, %s101
    %s116 = sphi 0, %s102
    %s120 = sphi 0, %s120
    %s122 = sphi 0, %s120
    %s123 = sphi 0, %s122
    %s137 = sphi 0, %s123
    %s141 = sphi 0, %s141
    %s143 = sphi 0, %s141
    %s144 = sphi 0, %s143
    %s158 = sphi 0, %s144
    %s162 = sphi 0, %s162
    %s164 = sphi 0, %s162
    %s165 = sphi 0, %s164
    %s179 = sphi 0, %s165
    %s183 = sphi 0, %s183
    %s185 = sphi 0, %s183
    %s186 = sphi 0, %s185
    %s200 = sphi 0, %s186
    %s204 = sphi 0, %s204
    %s206 = sphi 0, %s204
    %s207 = sphi 0, %s206
    %s221 = sphi 0, %s207
    %s225 = sphi 0, %s225
    %s227 = sphi 0, %s225
    %s228 = sphi 0, %s227
    %s242 = sphi 0, %s228
    %s246 = sphi 0, %s246
    %s248 = sphi 0, %s246
    %s249 = sphi 0, %s248
    %s263 = sphi 0, %s249
    %s267 = sphi 0, %s267
    %s269 = sphi 0, %s267
    %s270 = sphi 0, %s269
    %s284 = sphi 0, %s270
    %s290 = sphi 0, %s292
    %s293 = sphi 0, %s290
    %s294 = sphi 0, %s293
    %s310 = sphi 0, %s294
  $region4: #{tpu_custom_call.1} parent=0 // loop_header_branch
    %21 = sbr.rel (%p19) target = $region8
  $region5: #{tpu_custom_call.1} parent=0 // loop_body
    %s23 = ssub.s32 %s18, 1
    %s24 = ssub.s32 %s18, 2
    %s25 = sadd.s32 %s18, 1
    %s26 = ssub.s32 %s18, %s25
    %p27 = scmp.eq.s32.totalorder %s26, 0
    %s29 = sadd.s32 %s28, 1
    %s30 = scalar_select %p27, %s28, %s29
    %p33 = pneg %p27
    %p34 = scmp.eq.s32.totalorder %s18, 1
    %p35 = por %p33, %p34
    %p36 = scmp.ne.s32.totalorder %s28, %s31
    %p37 = scmp.eq.s32.totalorder %s18, 0
    %p38 = por %p36, %p37
    %p39 = scmp.ne.s32.totalorder %s28, %s31
    %p40 = scmp.eq.s32.totalorder %s23, 1
    %p41 = por %p39, %p40
    %p42 = scmp.ne.s32.totalorder %s31, %s32
    %p43 = scmp.eq.s32.totalorder %s23, 0
    %p44 = por %p42, %p43
    %p45 = scmp.ne.s32.totalorder %s31, %s32
    %p46 = scmp.eq.s32.totalorder %s24, 1
    %p47 = por %p45, %p46
    %p49 = scmp.ne.s32.totalorder %s32, %s48
    %p50 = scmp.eq.s32.totalorder %s24, 0
    %p51 = por %p49, %p50
    %s52 = ssub.s32 %s18, %s25
    %p53 = scmp.eq.s32.totalorder %s52, 0
    %s55 = sadd.s32 %s54, 1
    %s56 = scalar_select %p53, %s54, %s55
    %p59 = pneg %p53
    %p60 = scmp.eq.s32.totalorder %s18, 1
    %p61 = por %p59, %p60
    %p62 = scmp.ne.s32.totalorder %s54, %s57
    %p63 = scmp.eq.s32.totalorder %s18, 0
    %p64 = por %p62, %p63
    %p65 = scmp.ne.s32.totalorder %s54, %s57
    %p66 = scmp.eq.s32.totalorder %s23, 1
    %p67 = por %p65, %p66
    %p68 = scmp.ne.s32.totalorder %s57, %s58
    %p69 = scmp.eq.s32.totalorder %s23, 0
    %p70 = por %p68, %p69
    %p71 = scmp.ne.s32.totalorder %s57, %s58
    %p72 = scmp.eq.s32.totalorder %s24, 1
    %p73 = por %p71, %p72
    %p75 = scmp.ne.s32.totalorder %s58, %s74
    %p76 = scmp.eq.s32.totalorder %s24, 0
    %p77 = por %p75, %p76
    %s79 = sadd.s32 %s78, 1
    %p82 = scmp.eq.s32.totalorder %s18, 1
    %p83 = scmp.ne.s32.totalorder %s78, %s80
    %p84 = scmp.eq.s32.totalorder %s18, 0
    %p85 = por %p83, %p84
    %p86 = scmp.ne.s32.totalorder %s78, %s80
    %p87 = scmp.eq.s32.totalorder %s23, 1
    %p88 = por %p86, %p87
    %p89 = scmp.ne.s32.totalorder %s80, %s81
    %p90 = scmp.eq.s32.totalorder %s23, 0
    %p91 = por %p89, %p90
    %p92 = scmp.ne.s32.totalorder %s80, %s81
    %p93 = scmp.eq.s32.totalorder %s24, 1
    %p94 = por %p92, %p93
    %p96 = scmp.ne.s32.totalorder %s81, %s95
    %p97 = scmp.eq.s32.totalorder %s24, 0
    %p98 = por %p96, %p97
    %s100 = sadd.s32 %s99, 1
    %p103 = scmp.eq.s32.totalorder %s18, 1
    %p104 = scmp.ne.s32.totalorder %s99, %s101
    %p105 = scmp.eq.s32.totalorder %s18, 0
    %p106 = por %p104, %p105
    %p107 = scmp.ne.s32.totalorder %s99, %s101
    %p108 = scmp.eq.s32.totalorder %s23, 1
    %p109 = por %p107, %p108
    %p110 = scmp.ne.s32.totalorder %s101, %s102
    %p111 = scmp.eq.s32.totalorder %s23, 0
    %p112 = por %p110, %p111
    %p113 = scmp.ne.s32.totalorder %s101, %s102
    %p114 = scmp.eq.s32.totalorder %s24, 1
    %p115 = por %p113, %p114
    %p117 = scmp.ne.s32.totalorder %s102, %s116
    %p118 = scmp.eq.s32.totalorder %s24, 0
    %p119 = por %p117, %p118
    %s121 = sadd.s32 %s120, 1
    %p124 = scmp.eq.s32.totalorder %s18, 1
    %p125 = scmp.ne.s32.totalorder %s120, %s122
    %p126 = scmp.eq.s32.totalorder %s18, 0
    %p127 = por %p125, %p126
    %p128 = scmp.ne.s32.totalorder %s120, %s122
    %p129 = scmp.eq.s32.totalorder %s23, 1
    %p130 = por %p128, %p129
    %p131 = scmp.ne.s32.totalorder %s122, %s123
    %p132 = scmp.eq.s32.totalorder %s23, 0
    %p133 = por %p131, %p132
    %p134 = scmp.ne.s32.totalorder %s122, %s123
    %p135 = scmp.eq.s32.totalorder %s24, 1
    %p136 = por %p134, %p135
    %p138 = scmp.ne.s32.totalorder %s123, %s137
    %p139 = scmp.eq.s32.totalorder %s24, 0
    %p140 = por %p138, %p139
    %s142 = sadd.s32 %s141, 1
    %p145 = scmp.eq.s32.totalorder %s18, 1
    %p146 = scmp.ne.s32.totalorder %s141, %s143
    %p147 = scmp.eq.s32.totalorder %s18, 0
    %p148 = por %p146, %p147
    %p149 = scmp.ne.s32.totalorder %s141, %s143
    %p150 = scmp.eq.s32.totalorder %s23, 1
    %p151 = por %p149, %p150
    %p152 = scmp.ne.s32.totalorder %s143, %s144
    %p153 = scmp.eq.s32.totalorder %s23, 0
    %p154 = por %p152, %p153
    %p155 = scmp.ne.s32.totalorder %s143, %s144
    %p156 = scmp.eq.s32.totalorder %s24, 1
    %p157 = por %p155, %p156
    %p159 = scmp.ne.s32.totalorder %s144, %s158
    %p160 = scmp.eq.s32.totalorder %s24, 0
    %p161 = por %p159, %p160
    %s163 = sadd.s32 %s162, 1
    %p166 = scmp.eq.s32.totalorder %s18, 1
    %p167 = scmp.ne.s32.totalorder %s162, %s164
    %p168 = scmp.eq.s32.totalorder %s18, 0
    %p169 = por %p167, %p168
    %p170 = scmp.ne.s32.totalorder %s162, %s164
    %p171 = scmp.eq.s32.totalorder %s23, 1
    %p172 = por %p170, %p171
    %p173 = scmp.ne.s32.totalorder %s164, %s165
    %p174 = scmp.eq.s32.totalorder %s23, 0
    %p175 = por %p173, %p174
    %p176 = scmp.ne.s32.totalorder %s164, %s165
    %p177 = scmp.eq.s32.totalorder %s24, 1
    %p178 = por %p176, %p177
    %p180 = scmp.ne.s32.totalorder %s165, %s179
    %p181 = scmp.eq.s32.totalorder %s24, 0
    %p182 = por %p180, %p181
    %s184 = sadd.s32 %s183, 1
    %p187 = scmp.eq.s32.totalorder %s18, 1
    %p188 = scmp.ne.s32.totalorder %s183, %s185
    %p189 = scmp.eq.s32.totalorder %s18, 0
    %p190 = por %p188, %p189
    %p191 = scmp.ne.s32.totalorder %s183, %s185
    %p192 = scmp.eq.s32.totalorder %s23, 1
    %p193 = por %p191, %p192
    %p194 = scmp.ne.s32.totalorder %s185, %s186
    %p195 = scmp.eq.s32.totalorder %s23, 0
    %p196 = por %p194, %p195
    %p197 = scmp.ne.s32.totalorder %s185, %s186
    %p198 = scmp.eq.s32.totalorder %s24, 1
    %p199 = por %p197, %p198
    %p201 = scmp.ne.s32.totalorder %s186, %s200
    %p202 = scmp.eq.s32.totalorder %s24, 0
    %p203 = por %p201, %p202
    %s205 = sadd.s32 %s204, 1
    %p208 = scmp.eq.s32.totalorder %s18, 1
    %p209 = scmp.ne.s32.totalorder %s204, %s206
    %p210 = scmp.eq.s32.totalorder %s18, 0
    %p211 = por %p209, %p210
    %p212 = scmp.ne.s32.totalorder %s204, %s206
    %p213 = scmp.eq.s32.totalorder %s23, 1
    %p214 = por %p212, %p213
    %p215 = scmp.ne.s32.totalorder %s206, %s207
    %p216 = scmp.eq.s32.totalorder %s23, 0
    %p217 = por %p215, %p216
    %p218 = scmp.ne.s32.totalorder %s206, %s207
    %p219 = scmp.eq.s32.totalorder %s24, 1
    %p220 = por %p218, %p219
    %p222 = scmp.ne.s32.totalorder %s207, %s221
    %p223 = scmp.eq.s32.totalorder %s24, 0
    %p224 = por %p222, %p223
    %s226 = sadd.s32 %s225, 1
    %p229 = scmp.eq.s32.totalorder %s18, 1
    %p230 = scmp.ne.s32.totalorder %s225, %s227
    %p231 = scmp.eq.s32.totalorder %s18, 0
    %p232 = por %p230, %p231
    %p233 = scmp.ne.s32.totalorder %s225, %s227
    %p234 = scmp.eq.s32.totalorder %s23, 1
    %p235 = por %p233, %p234
    %p236 = scmp.ne.s32.totalorder %s227, %s228
    %p237 = scmp.eq.s32.totalorder %s23, 0
    %p238 = por %p236, %p237
    %p239 = scmp.ne.s32.totalorder %s227, %s228
    %p240 = scmp.eq.s32.totalorder %s24, 1
    %p241 = por %p239, %p240
    %p243 = scmp.ne.s32.totalorder %s228, %s242
    %p244 = scmp.eq.s32.totalorder %s24, 0
    %p245 = por %p243, %p244
    %s247 = sadd.s32 %s246, 1
    %p250 = scmp.eq.s32.totalorder %s18, 1
    %p251 = scmp.ne.s32.totalorder %s246, %s248
    %p252 = scmp.eq.s32.totalorder %s18, 0
    %p253 = por %p251, %p252
    %p254 = scmp.ne.s32.totalorder %s246, %s248
    %p255 = scmp.eq.s32.totalorder %s23, 1
    %p256 = por %p254, %p255
    %p257 = scmp.ne.s32.totalorder %s248, %s249
    %p258 = scmp.eq.s32.totalorder %s23, 0
    %p259 = por %p257, %p258
    %p260 = scmp.ne.s32.totalorder %s248, %s249
    %p261 = scmp.eq.s32.totalorder %s24, 1
    %p262 = por %p260, %p261
    %p264 = scmp.ne.s32.totalorder %s249, %s263
    %p265 = scmp.eq.s32.totalorder %s24, 0
    %p266 = por %p264, %p265
    %s268 = sadd.s32 %s267, 1
    %p271 = scmp.eq.s32.totalorder %s18, 1
    %p272 = scmp.ne.s32.totalorder %s267, %s269
    %p273 = scmp.eq.s32.totalorder %s18, 0
    %p274 = por %p272, %p273
    %p275 = scmp.ne.s32.totalorder %s267, %s269
    %p276 = scmp.eq.s32.totalorder %s23, 1
    %p277 = por %p275, %p276
    %p278 = scmp.ne.s32.totalorder %s269, %s270
    %p279 = scmp.eq.s32.totalorder %s23, 0
    %p280 = por %p278, %p279
    %p281 = scmp.ne.s32.totalorder %s269, %s270
    %p282 = scmp.eq.s32.totalorder %s24, 1
    %p283 = por %p281, %p282
    %p285 = scmp.ne.s32.totalorder %s270, %s284
    %p286 = scmp.eq.s32.totalorder %s24, 0
    %p287 = por %p285, %p286
    %s288 = ssub.s32 %s18, %s25
    %p289 = scmp.eq.s32.totalorder %s288, 0
    %s291 = sadd.s32 %s290, 1
    %s292 = scalar_select %p289, %s290, %s291
    %p295 = pneg %p289
    %p296 = scmp.eq.s32.totalorder %s18, 1
    %p297 = por %p295, %p296
    %p298 = scmp.ne.s32.totalorder %s290, %s293
    %p299 = scmp.eq.s32.totalorder %s18, 0
    %p300 = por %p298, %p299
    %p301 = scmp.ne.s32.totalorder %s290, %s293
    %p302 = scmp.eq.s32.totalorder %s23, 1
    %p303 = por %p301, %p302
    %p304 = scmp.ne.s32.totalorder %s293, %s294
    %p305 = scmp.eq.s32.totalorder %s23, 0
    %p306 = por %p304, %p305
    %p307 = scmp.ne.s32.totalorder %s293, %s294
    %p308 = scmp.eq.s32.totalorder %s24, 1
    %p309 = por %p307, %p308
    %p311 = scmp.ne.s32.totalorder %s294, %s310
    %p312 = scmp.eq.s32.totalorder %s24, 0
    %p313 = por %p311, %p312
    %p314 = scmp.le.s32.totalorder 1, %s18
    %p315 = scmp.lt.s32.totalorder %s18, 3
    %p316 = pnand %p314, %p315
    %p317 = pneg %p316
    // Predicated region
    $region9: #{tpu_custom_call.1} parent=5 // pred_check
      _
    $region10: #{tpu_custom_call.1} parent=5 // pred_check_branch
      %319 = sbr.rel (%p316) target = $region12
    $region11: #{tpu_custom_call.1} parent=5 // pred_region
      %s320 = ssub.s32 %s18, 1
      // Predicated region
      $region13: #{tpu_custom_call.1} parent=11 // pred_check
        %p321 = pneg %p91
      $region14: #{tpu_custom_call.1} parent=11 // pred_check_branch
        %323 = sbr.rel (%p321) target = $region16
      $region15: #{tpu_custom_call.1} parent=11 // pred_region
        _
      $region16: #{tpu_custom_call.1} parent=11 // pred_fallthru
        _
      // Predicated region
      $region17: #{tpu_custom_call.1} parent=11 // pred_check
        %p324 = pneg %p112
      $region18: #{tpu_custom_call.1} parent=11 // pred_check_branch
        %326 = sbr.rel (%p324) target = $region20
      $region19: #{tpu_custom_call.1} parent=11 // pred_region
        _
      $region20: #{tpu_custom_call.1} parent=11 // pred_fallthru
        _
      // Predicated region
      $region21: #{tpu_custom_call.1} parent=11 // pred_check
        %p327 = pneg %p133
      $region22: #{tpu_custom_call.1} parent=11 // pred_check_branch
        %329 = sbr.rel (%p327) target = $region24
      $region23: #{tpu_custom_call.1} parent=11 // pred_region
        _
      $region24: #{tpu_custom_call.1} parent=11 // pred_fallthru
        _
      // Predicated region
      $region25: #{tpu_custom_call.1} parent=11 // pred_check
        %p330 = pneg %p154
      $region26: #{tpu_custom_call.1} parent=11 // pred_check_branch
        %332 = sbr.rel (%p330) target = $region28
      $region27: #{tpu_custom_call.1} parent=11 // pred_region
        _
      $region28: #{tpu_custom_call.1} parent=11 // pred_fallthru
        _
      // Predicated region
      $region29: #{tpu_custom_call.1} parent=11 // pred_check
        %p333 = pneg %p175
      $region30: #{tpu_custom_call.1} parent=11 // pred_check_branch
        %335 = sbr.rel (%p333) target = $region32
      $region31: #{tpu_custom_call.1} parent=11 // pred_region
        _
      $region32: #{tpu_custom_call.1} parent=11 // pred_fallthru
        _
      // Predicated region
      $region33: #{tpu_custom_call.1} parent=11 // pred_check
        %p336 = pneg %p196
      $region34: #{tpu_custom_call.1} parent=11 // pred_check_branch
        %338 = sbr.rel (%p336) target = $region36
      $region35: #{tpu_custom_call.1} parent=11 // pred_region
        _
      $region36: #{tpu_custom_call.1} parent=11 // pred_fallthru
        _
      // Predicated region
      $region37: #{tpu_custom_call.1} parent=11 // pred_check
        %p339 = pneg %p217
      $region38: #{tpu_custom_call.1} parent=11 // pred_check_branch
        %341 = sbr.rel (%p339) target = $region40
      $region39: #{tpu_custom_call.1} parent=11 // pred_region
        _
      $region40: #{tpu_custom_call.1} parent=11 // pred_fallthru
        _
      // Predicated region
      $region41: #{tpu_custom_call.1} parent=11 // pred_check
        %p342 = pneg %p238
      $region42: #{tpu_custom_call.1} parent=11 // pred_check_branch
        %344 = sbr.rel (%p342) target = $region44
      $region43: #{tpu_custom_call.1} parent=11 // pred_region
        _
      $region44: #{tpu_custom_call.1} parent=11 // pred_fallthru
        _
      // Predicated region
      $region45: #{tpu_custom_call.1} parent=11 // pred_check
        %p345 = pneg %p259
      $region46: #{tpu_custom_call.1} parent=11 // pred_check_branch
        %347 = sbr.rel (%p345) target = $region48
      $region47: #{tpu_custom_call.1} parent=11 // pred_region
        _
      $region48: #{tpu_custom_call.1} parent=11 // pred_fallthru
        _
      // Predicated region
      $region49: #{tpu_custom_call.1} parent=11 // pred_check
        %p348 = pneg %p280
      $region50: #{tpu_custom_call.1} parent=11 // pred_check_branch
        %350 = sbr.rel (%p348) target = $region52
      $region51: #{tpu_custom_call.1} parent=11 // pred_region
        _
      $region52: #{tpu_custom_call.1} parent=11 // pred_fallthru
        _
    $region12: #{tpu_custom_call.1} parent=5 // pred_fallthru
      _
    %p351 = scmp.lt.s32.totalorder %s18, 2
    // Predicated region
    $region53: #{tpu_custom_call.1} parent=5 // pred_check
      %p352 = pneg %p351
    $region54: #{tpu_custom_call.1} parent=5 // pred_check_branch
      %354 = sbr.rel (%p352) target = $region56
    $region55: #{tpu_custom_call.1} parent=5 // pred_region
      // Predicated region
      $region57: #{tpu_custom_call.1} parent=55 // pred_check
        %p355 = pneg %p38
      $region58: #{tpu_custom_call.1} parent=55 // pred_check_branch
        %357 = sbr.rel (%p355) target = $region60
      $region59: #{tpu_custom_call.1} parent=55 // pred_region
        %p358 = scmp.lt.s32.totalorder %s18, 1
        %s359 = scalar_select %p358, %s18, 1
        %s360 = smul.addr %s359, 8
        %s361 = smul.addr %s360, 4
        %s362 = scalar_lea.vmem %s0, %s361
      $region60: #{tpu_custom_call.1} parent=55 // pred_fallthru
        _
      // Predicated region
      $region61: #{tpu_custom_call.1} parent=55 // pred_check
        %p363 = pneg %p64
      $region62: #{tpu_custom_call.1} parent=55 // pred_check_branch
        %365 = sbr.rel (%p363) target = $region64
      $region63: #{tpu_custom_call.1} parent=55 // pred_region
        %p366 = scmp.lt.s32.totalorder %s18, 1
        %s367 = scalar_select %p366, %s18, 1
        %s368 = smul.addr %s367, 32
        %s369 = smul.addr %s368, 4
        %s370 = scalar_lea.vmem %s1, %s369
      $region64: #{tpu_custom_call.1} parent=55 // pred_fallthru
        _
    $region56: #{tpu_custom_call.1} parent=5 // pred_fallthru
      _
    %p371 = scmp.le.s32.totalorder 1, %s18
    %p372 = scmp.lt.s32.totalorder %s18, 3
    %p373 = pnand %p371, %p372
    %p374 = pneg %p373
    // Predicated region
    $region65: #{tpu_custom_call.1} parent=5 // pred_check
      _
    $region66: #{tpu_custom_call.1} parent=5 // pred_check_branch
      %376 = sbr.rel (%p373) target = $region68
    $region67: #{tpu_custom_call.1} parent=5 // pred_region
      %s377 = ssub.s32 %s18, 1
      %p378 = scmp.lt.s32.totalorder %s23, 1
      %s379 = scalar_select %p378, %s23, 1
      %s380 = smul.addr %s379, 8
      %s381 = smul.addr %s380, 4
      %s382 = scalar_lea.vmem %s0, %s381
      %p383 = pneg %p44
      %p384 = pneg %p41
      %p385 = scmp.lt.s32.totalorder %s23, 1
      %s386 = scalar_select %p385, %s23, 1
      %s387 = smul.addr %s386, 32
      %s388 = smul.addr %s387, 4
      %s389 = scalar_lea.vmem %s1, %s388
      %p390 = pneg %p70
      %p391 = pneg %p67
      %p392 = pneg %p91
      %p393 = pneg %p88
      %p394 = pneg %p112
      %p395 = pneg %p109
      %p396 = pneg %p133
      %p397 = pneg %p130
      %p398 = pneg %p154
      %p399 = pneg %p151
      %p400 = pneg %p175
      %p401 = pneg %p172
      %p402 = pneg %p196
      %p403 = pneg %p193
      %p404 = pneg %p217
      %p405 = pneg %p214
      %p406 = pneg %p238
      %p407 = pneg %p235
      %p408 = pneg %p259
      %p409 = pneg %p256
      %p410 = pneg %p280
      %p411 = pneg %p277
      %p412 = pneg %p306
      %p413 = pneg %p303
      %p414 = scmp.lt.s32.totalorder %s23, 1
      %s415 = scalar_select %p414, %s23, 1
      %s416 = smul.addr %s415, 32
      %s417 = smul.addr %s416, 8
      %s418 = scalar_lea.vmem %s12, %s417
      %p419 = scmp.lt.s32.totalorder %s23, 1
      %s420 = scalar_select %p419, %s23, 1
      %s421 = smul.addr %s420, 8
      %s422 = smul.addr %s421, 4
      %s423 = scalar_lea.vmem %s0, %s422
      %p424 = scmp.lt.s32.totalorder %s23, 1
      %s425 = scalar_select %p424, %s23, 1
      %s426 = smul.addr %s425, 32
      %s427 = smul.addr %s426, 4
      %s428 = scalar_lea.vmem %s1, %s427
      %p429 = scmp.lt.s32.totalorder %s23, 1
      %s430 = scalar_select %p429, %s23, 1
      %s431 = smul.addr %s430, 32
      %s432 = smul.addr %s431, 8
      %s433 = scalar_lea.vmem %s12, %s432
      %v435 = vld [vmem:[%s423] sm:$0xf]
      %v436 = vld [vmem:[%s423 + $0x4] sm:$0xf]
      %v437 = vld [vmem:[%s423 + $0x8] sm:$0xf]
      %v438 = vld [vmem:[%s423 + $0xc] sm:$0xf]
      %v439 = vld [vmem:[%s423 + $0x10] sm:$0xf]
      %v440 = vld [vmem:[%s423 + $0x14] sm:$0xf]
      %v441 = vld [vmem:[%s423 + $0x18] sm:$0xf]
      %v442 = vld [vmem:[%s423 + $0x1c] sm:$0xf]
      %v443 = vld [vmem:[%s2] sm:$0x7]
      %v452 = vunpack.c.l.b16 %v435
      %v453 = vunpack.c.l.b16 %v436
      %v454 = vunpack.c.l.b16 %v437
      %v455 = vunpack.c.l.b16 %v438
      %v456 = vunpack.c.l.b16 %v439
      %v457 = vunpack.c.l.b16 %v440
      %v458 = vunpack.c.l.b16 %v441
      %v459 = vunpack.c.l.b16 %v442
      %v460 = vpack.c.b16 %v453, %v452
      %v461 = vpack.c.b16 %v455, %v454
      %v462 = vpack.c.b16 %v457, %v456
      %v463 = vpack.c.b16 %v459, %v458
      %vm464 = vcmask 48128
      %v466 = vsel %vm464, %v460, 0
      %v469 = vsel %vm464, %v461, 0
      %v472 = vsel %vm464, %v462, 0
      %v475 = vsel %vm464, %v463, 0
      %vm477 = vcmask 1042432
      %v479 = vsel %vm477, %v443, 0
      %481 = vmatprep.subr.bf16.mxu0 0
      %482 = vmatpush1.bf16.msra.mxu0 0
      %483 = vmatprep.subr.bf16.mxu0 0
      %484 = vmatpush1.bf16.msra.mxu0 0
      %485 = vmatprep.subr.bf16.mxu0 0
      %486 = vmatpush1.bf16.msra.mxu0 0
      %487 = vmatprep.subr.bf16.mxu0 0
      %488 = vmatpush1.bf16.msra.mxu0 0
      %489 = vmatprep.subr.bf16.mxu0 0
      %490 = vmatpush1.bf16.msra.mxu0 0
      %491 = vmatprep.subr.bf16.mxu0 0
      %492 = vmatpush1.bf16.msra.mxu0 0
      %493 = vmatprep.subr.bf16.mxu0 0
      %494 = vmatpush1.bf16.msra.mxu0 0
      %495 = vmatprep.subr.bf16.mxu0 0
      %496 = vmatpush1.bf16.msra.mxu0 %v479
      %497 = vmatprep.subr.bf16.mxu0 0
      %498 = vmatpush2.bf16.msra.mxu0 0
      %499 = vmatprep.subr.bf16.mxu0 0
      %500 = vmatpush2.bf16.msra.mxu0 0
      %501 = vmatprep.subr.bf16.mxu0 0
      %502 = vmatpush2.bf16.msra.mxu0 0
      %503 = vmatprep.subr.bf16.mxu0 0
      %504 = vmatpush2.bf16.msra.mxu0 0
      %505 = vmatprep.subr.bf16.mxu0 0
      %506 = vmatpush2.bf16.msra.mxu0 0
      %507 = vmatprep.subr.bf16.mxu0 0
      %508 = vmatpush2.bf16.msra.mxu0 0
      %509 = vmatprep.subr.bf16.mxu0 0
      %510 = vmatpush2.bf16.msra.mxu0 0
      %511 = vmatprep.subr.bf16.mxu0 0
      %512 = vmatpush2.bf16.msra.mxu0 0
      %513 = vmatprep.mubr.bf16.mxu0 0
      %514 = vmatmul.mubr.bf16.gmra.mxu0 %v466
      %v515 = vpop.f32.mrf.mxu0
      %v516 = vadd.f32 0.0, %v515
      %v517 = vpop.f32.mrf.mxu0
      %v518 = vpop.f32.mrf.mxu0
      %v519 = vadd.f32 0.0, %v518
      %v520 = vpop.f32.mrf.mxu0
      %521 = vmatprep.mubr.bf16.mxu0 0
      %522 = vmatmul.mubr.bf16.gmra.mxu0 %v469
      %v523 = vpop.f32.mrf.mxu0
      %v524 = vadd.f32 0.0, %v523
      %v525 = vpop.f32.mrf.mxu0
      %v526 = vpop.f32.mrf.mxu0
      %v527 = vadd.f32 0.0, %v526
      %v528 = vpop.f32.mrf.mxu0
      %529 = vmatprep.mubr.bf16.mxu0 0
      %530 = vmatmul.mubr.bf16.gmra.mxu0 %v472
      %v531 = vpop.f32.mrf.mxu0
      %v532 = vadd.f32 0.0, %v531
      %v533 = vpop.f32.mrf.mxu0
      %v534 = vpop.f32.mrf.mxu0
      %v535 = vadd.f32 0.0, %v534
      %v536 = vpop.f32.mrf.mxu0
      %537 = vmatprep.mubr.bf16.mxu0 0
      %538 = vmatmul.mubr.bf16.gmra.mxu0 %v475
      %v539 = vpop.f32.mrf.mxu0
      %v540 = vadd.f32 0.0, %v539
      %v541 = vpop.f32.mrf.mxu0
      %v542 = vpop.f32.mrf.mxu0
      %v543 = vadd.f32 0.0, %v542
      %v544 = vpop.f32.mrf.mxu0
      %545 = vdwg.mxu0
      %vm546 = vcmask 130048
      %v547 = vsel %vm546, %v516, 0.0
      %v548 = vsel %vm546, %v519, 0.0
      %v549 = vadd.f32 %v547, %v548
      %v550 = vsel %vm546, %v524, 0.0
      %v551 = vadd.f32 %v549, %v550
      %v552 = vsel %vm546, %v527, 0.0
      %v553 = vadd.f32 %v551, %v552
      %v554 = vsel %vm546, %v532, 0.0
      %v555 = vadd.f32 %v553, %v554
      %v556 = vsel %vm546, %v535, 0.0
      %v557 = vadd.f32 %v555, %v556
      %v558 = vsel %vm546, %v540, 0.0
      %v559 = vadd.f32 %v557, %v558
      %v560 = vsel %vm546, %v543, 0.0
      %v561 = vadd.f32 %v559, %v560
      %v562 = vrot.slane %v561, 4
      %v563 = vadd.f32 %v561, %v562
      %v564 = vrot.slane %v563, 2
      %v565 = vadd.f32 %v563, %v564
      %v566 = vrot.slane %v565, 1
      %v567 = vadd.f32 %v565, %v566
      %569 = vrot.lane.b32.xlu0 %v567, 124
      %v570 = vpop.permute.xlu0 %569
      %v572 = vadd.f32 %v567, %v570
      %573 = vrot.lane.b32.xlu0 %v567, 120
      %v574 = vpop.permute.xlu0 %573
      %v576 = vadd.f32 %v572, %v574
      %577 = vrot.lane.b32.xlu0 %v567, 116
      %v578 = vpop.permute.xlu0 %577
      %v580 = vadd.f32 %v576, %v578
      %v581 = vmul.f32 %v580, 0.00390625
      %v582 = vmul.f32 %v516, %v516
      %v583 = vmul.f32 %v519, %v519
      %v584 = vmul.f32 %v524, %v524
      %v585 = vmul.f32 %v527, %v527
      %v586 = vmul.f32 %v532, %v532
      %v587 = vmul.f32 %v535, %v535
      %v588 = vmul.f32 %v540, %v540
      %v589 = vmul.f32 %v543, %v543
      %v590 = vsel %vm546, %v582, 0.0
      %v591 = vsel %vm546, %v583, 0.0
      %v592 = vadd.f32 %v590, %v591
      %v593 = vsel %vm546, %v584, 0.0
      %v594 = vadd.f32 %v592, %v593
      %v595 = vsel %vm546, %v585, 0.0
      %v596 = vadd.f32 %v594, %v595
      %v597 = vsel %vm546, %v586, 0.0
      %v598 = vadd.f32 %v596, %v597
      %v599 = vsel %vm546, %v587, 0.0
      %v600 = vadd.f32 %v598, %v599
      %v601 = vsel %vm546, %v588, 0.0
      %v602 = vadd.f32 %v600, %v601
      %v603 = vsel %vm546, %v589, 0.0
      %v604 = vadd.f32 %v602, %v603
      %v605 = vrot.slane %v604, 4
      %v606 = vadd.f32 %v604, %v605
      %v607 = vrot.slane %v606, 2
      %v608 = vadd.f32 %v606, %v607
      %v609 = vrot.slane %v608, 1
      %v610 = vadd.f32 %v608, %v609
      %612 = vrot.lane.b32.xlu0 %v610, 124
      %v613 = vpop.permute.xlu0 %612
      %v615 = vadd.f32 %v610, %v613
      %616 = vrot.lane.b32.xlu0 %v610, 120
      %v617 = vpop.permute.xlu0 %616
      %v619 = vadd.f32 %v615, %v617
      %620 = vrot.lane.b32.xlu0 %v610, 116
      %v621 = vpop.permute.xlu0 %620
      %v623 = vadd.f32 %v619, %v621
      %v624 = vmul.f32 %v623, 0.00390625
      %v625 = vmul.f32 %v581, %v581
      %v626 = vsub.f32 %v624, %v625
      %v627 = vmax.f32 %v626, 0.0
      %v628 = vadd.f32 %v627, 1e-05
      %v629 = vrsqrt.pop %v628
      %v630 = vld [vmem:[%s3] sm:$0x1]
      %v631 = vmul.f32 %v629, %v630
      %v632 = vld [vmem:[%s4] sm:$0x1]
      %v633 = vmul.f32 %v581, %v631
      %v634 = vsub.f32 %v632, %v633
      %636 = vrot.lane.b32.xlu0 %v631, 4
      %v637 = vpop.permute.xlu0 %636
      %639 = vrot.lane.b32.xlu0 %v631, 8
      %v640 = vpop.permute.xlu0 %639
      %642 = vrot.lane.b32.xlu0 %v631, 12
      %v643 = vpop.permute.xlu0 %642
      %vm645 = vcmask 31744
      %v646 = vsel %vm645, %v631, %v637
      %vm647 = vcmask 64512
      %v648 = vsel %vm647, %v646, %v640
      %vm649 = vcmask 97280
      %v650 = vsel %vm649, %v648, %v643
      %v652 = vlaneseq
      %v653 = vshrl.u32 %v652, 7
      %v654 = vsub.s32 0, %v653
      %v655 = vrot.slane %v634, %v654
      %656 = vrot.lane.b32.xlu0 %v655, 4
      %v657 = vpop.permute.xlu0 %656
      %659 = vrot.lane.b32.xlu0 %v655, 8
      %v660 = vpop.permute.xlu0 %659
      %662 = vrot.lane.b32.xlu0 %v655, 12
      %v663 = vpop.permute.xlu0 %662
      %v665 = vsel %vm645, %v634, %v657
      %v666 = vsel %vm647, %v665, %v660
      %v667 = vsel %vm649, %v666, %v663
      %v668 = vlaneseq
      %v669 = vshrl.u32 %v668, 7
      %v670 = vsub.s32 0, %v669
      %v671 = vrot.slane %v650, %v670
      %v672 = vmul.f32 %v516, %v671
      %v673 = vmul.f32 %v519, %v671
      %v674 = vmul.f32 %v524, %v671
      %v675 = vmul.f32 %v527, %v671
      %v676 = vmul.f32 %v532, %v671
      %v677 = vmul.f32 %v535, %v671
      %v678 = vmul.f32 %v540, %v671
      %v679 = vmul.f32 %v543, %v671
      %v680 = vlaneseq
      %v681 = vshrl.u32 %v680, 7
      %v682 = vsub.s32 0, %v681
      %v683 = vrot.slane %v667, %v682
      %v684 = vadd.f32 %v672, %v683
      %v685 = vadd.f32 %v673, %v683
      %v686 = vadd.f32 %v674, %v683
      %v687 = vadd.f32 %v675, %v683
      %v688 = vadd.f32 %v676, %v683
      %v689 = vadd.f32 %v677, %v683
      %v690 = vadd.f32 %v678, %v683
      %v691 = vadd.f32 %v679, %v683
      %vm692 = vcmp.gt.f32.partialorder %v684, 0.0
      %vm693 = vcmp.gt.f32.partialorder %v685, 0.0
      %vm694 = vcmp.gt.f32.partialorder %v686, 0.0
      %vm695 = vcmp.gt.f32.partialorder %v687, 0.0
      %vm696 = vcmp.gt.f32.partialorder %v688, 0.0
      %vm697 = vcmp.gt.f32.partialorder %v689, 0.0
      %vm698 = vcmp.gt.f32.partialorder %v690, 0.0
      %vm699 = vcmp.gt.f32.partialorder %v691, 0.0
      %v700 = vmul.f32 %v684, 0.01
      %v701 = vmul.f32 %v685, 0.01
      %v702 = vmul.f32 %v686, 0.01
      %v703 = vmul.f32 %v687, 0.01
      %v704 = vmul.f32 %v688, 0.01
      %v705 = vmul.f32 %v689, 0.01
      %v706 = vmul.f32 %v690, 0.01
      %v707 = vmul.f32 %v691, 0.01
      %v708 = vsel %vm692, %v684, %v700
      %v709 = vsel %vm693, %v685, %v701
      %v710 = vsel %vm694, %v686, %v702
      %v711 = vsel %vm695, %v687, %v703
      %v712 = vsel %vm696, %v688, %v704
      %v713 = vsel %vm697, %v689, %v705
      %v714 = vsel %vm698, %v690, %v706
      %v715 = vsel %vm699, %v691, %v707
      %v724 = vcombine.high %v708, %v708
      %v726 = vunpack.c.l.s4 1966171168
      %v727 = vunpack.c.0.s8 %v726
      %v728 = vlaneseq
      %v729 = vshrl.u32 %v728, 7
      %v730 = vsub.s32 %v727, %v729
      %v731 = vrot.slane %v708, %v730
      %v733 = vunpack.c.l.s4 1966171168
      %v734 = vunpack.c.0.s8 %v733
      %v735 = vlaneseq
      %v736 = vshrl.u32 %v735, 7
      %v737 = vsub.s32 %v734, %v736
      %v738 = vrot.slane %v724, %v737
      %v739 = vcombine.high %v731, %v731
      %v740 = vcombine.high %v738, %v738
      %v742 = vunpack.c.l.s4 1966171168
      %v743 = vunpack.c.0.s8 %v742
      %v744 = vlaneseq
      %v745 = vshrl.u32 %v744, 7
      %v746 = vsub.s32 %v743, %v745
      %v747 = vrot.slane %v731, %v746
      %v749 = vunpack.c.l.s4 1966171168
      %v750 = vunpack.c.0.s8 %v749
      %v751 = vlaneseq
      %v752 = vshrl.u32 %v751, 7
      %v753 = vsub.s32 %v750, %v752
      %v754 = vrot.slane %v738, %v753
      %v756 = vunpack.c.l.s4 1966171168
      %v757 = vunpack.c.0.s8 %v756
      %v758 = vlaneseq
      %v759 = vshrl.u32 %v758, 7
      %v760 = vsub.s32 %v757, %v759
      %v761 = vrot.slane %v739, %v760
      %v763 = vunpack.c.l.s4 1966171168
      %v764 = vunpack.c.0.s8 %v763
      %v765 = vlaneseq
      %v766 = vshrl.u32 %v765, 7
      %v767 = vsub.s32 %v764, %v766
      %v768 = vrot.slane %v740, %v767
      %v769 = vcombine.high %v747, %v747
      %v770 = vcombine.high %v754, %v754
      %v771 = vcombine.high %v761, %v761
      %v772 = vcombine.high %v768, %v768
      %v773 = vcombine.high %v709, %v709
      %v775 = vunpack.c.l.s4 1966171168
      %v776 = vunpack.c.0.s8 %v775
      %v777 = vlaneseq
      %v778 = vshrl.u32 %v777, 7
      %v779 = vsub.s32 %v776, %v778
      %v780 = vrot.slane %v709, %v779
      %v782 = vunpack.c.l.s4 1966171168
      %v783 = vunpack.c.0.s8 %v782
      %v784 = vlaneseq
      %v785 = vshrl.u32 %v784, 7
      %v786 = vsub.s32 %v783, %v785
      %v787 = vrot.slane %v773, %v786
      %v788 = vcombine.high %v780, %v780
      %v789 = vcombine.high %v787, %v787
      %v791 = vunpack.c.l.s4 1966171168
      %v792 = vunpack.c.0.s8 %v791
      %v793 = vlaneseq
      %v794 = vshrl.u32 %v793, 7
      %v795 = vsub.s32 %v792, %v794
      %v796 = vrot.slane %v780, %v795
      %v798 = vunpack.c.l.s4 1966171168
      %v799 = vunpack.c.0.s8 %v798
      %v800 = vlaneseq
      %v801 = vshrl.u32 %v800, 7
      %v802 = vsub.s32 %v799, %v801
      %v803 = vrot.slane %v787, %v802
      %v805 = vunpack.c.l.s4 1966171168
      %v806 = vunpack.c.0.s8 %v805
      %v807 = vlaneseq
      %v808 = vshrl.u32 %v807, 7
      %v809 = vsub.s32 %v806, %v808
      %v810 = vrot.slane %v788, %v809
      %v812 = vunpack.c.l.s4 1966171168
      %v813 = vunpack.c.0.s8 %v812
      %v814 = vlaneseq
      %v815 = vshrl.u32 %v814, 7
      %v816 = vsub.s32 %v813, %v815
      %v817 = vrot.slane %v789, %v816
      %v818 = vcombine.high %v796, %v796
      %v819 = vcombine.high %v803, %v803
      %v820 = vcombine.high %v810, %v810
      %v821 = vcombine.high %v817, %v817
      %v822 = vcombine.high %v710, %v710
      %v824 = vunpack.c.l.s4 1966171168
      %v825 = vunpack.c.0.s8 %v824
      %v826 = vlaneseq
      %v827 = vshrl.u32 %v826, 7
      %v828 = vsub.s32 %v825, %v827
      %v829 = vrot.slane %v710, %v828
      %v831 = vunpack.c.l.s4 1966171168
      %v832 = vunpack.c.0.s8 %v831
      %v833 = vlaneseq
      %v834 = vshrl.u32 %v833, 7
      %v835 = vsub.s32 %v832, %v834
      %v836 = vrot.slane %v822, %v835
      %v837 = vcombine.high %v829, %v829
      %v838 = vcombine.high %v836, %v836
      %v840 = vunpack.c.l.s4 1966171168
      %v841 = vunpack.c.0.s8 %v840
      %v842 = vlaneseq
      %v843 = vshrl.u32 %v842, 7
      %v844 = vsub.s32 %v841, %v843
      %v845 = vrot.slane %v829, %v844
      %v847 = vunpack.c.l.s4 1966171168
      %v848 = vunpack.c.0.s8 %v847
      %v849 = vlaneseq
      %v850 = vshrl.u32 %v849, 7
      %v851 = vsub.s32 %v848, %v850
      %v852 = vrot.slane %v836, %v851
      %v854 = vunpack.c.l.s4 1966171168
      %v855 = vunpack.c.0.s8 %v854
      %v856 = vlaneseq
      %v857 = vshrl.u32 %v856, 7
      %v858 = vsub.s32 %v855, %v857
      %v859 = vrot.slane %v837, %v858
      %v861 = vunpack.c.l.s4 1966171168
      %v862 = vunpack.c.0.s8 %v861
      %v863 = vlaneseq
      %v864 = vshrl.u32 %v863, 7
      %v865 = vsub.s32 %v862, %v864
      %v866 = vrot.slane %v838, %v865
      %v867 = vcombine.high %v845, %v845
      %v868 = vcombine.high %v852, %v852
      %v869 = vcombine.high %v859, %v859
      %v870 = vcombine.high %v866, %v866
      %v871 = vcombine.high %v711, %v711
      %v873 = vunpack.c.l.s4 1966171168
      %v874 = vunpack.c.0.s8 %v873
      %v875 = vlaneseq
      %v876 = vshrl.u32 %v875, 7
      %v877 = vsub.s32 %v874, %v876
      %v878 = vrot.slane %v711, %v877
      %v880 = vunpack.c.l.s4 1966171168
      %v881 = vunpack.c.0.s8 %v880
      %v882 = vlaneseq
      %v883 = vshrl.u32 %v882, 7
      %v884 = vsub.s32 %v881, %v883
      %v885 = vrot.slane %v871, %v884
      %v886 = vcombine.high %v878, %v878
      %v887 = vcombine.high %v885, %v885
      %v889 = vunpack.c.l.s4 1966171168
      %v890 = vunpack.c.0.s8 %v889
      %v891 = vlaneseq
      %v892 = vshrl.u32 %v891, 7
      %v893 = vsub.s32 %v890, %v892
      %v894 = vrot.slane %v878, %v893
      %v896 = vunpack.c.l.s4 1966171168
      %v897 = vunpack.c.0.s8 %v896
      %v898 = vlaneseq
      %v899 = vshrl.u32 %v898, 7
      %v900 = vsub.s32 %v897, %v899
      %v901 = vrot.slane %v885, %v900
      %v903 = vunpack.c.l.s4 1966171168
      %v904 = vunpack.c.0.s8 %v903
      %v905 = vlaneseq
      %v906 = vshrl.u32 %v905, 7
      %v907 = vsub.s32 %v904, %v906
      %v908 = vrot.slane %v886, %v907
      %v910 = vunpack.c.l.s4 1966171168
      %v911 = vunpack.c.0.s8 %v910
      %v912 = vlaneseq
      %v913 = vshrl.u32 %v912, 7
      %v914 = vsub.s32 %v911, %v913
      %v915 = vrot.slane %v887, %v914
      %v916 = vcombine.high %v894, %v894
      %v917 = vcombine.high %v901, %v901
      %v918 = vcombine.high %v908, %v908
      %v919 = vcombine.high %v915, %v915
      %v920 = vcombine.high %v712, %v712
      %v922 = vunpack.c.l.s4 1966171168
      %v923 = vunpack.c.0.s8 %v922
      %v924 = vlaneseq
      %v925 = vshrl.u32 %v924, 7
      %v926 = vsub.s32 %v923, %v925
      %v927 = vrot.slane %v712, %v926
      %v929 = vunpack.c.l.s4 1966171168
      %v930 = vunpack.c.0.s8 %v929
      %v931 = vlaneseq
      %v932 = vshrl.u32 %v931, 7
      %v933 = vsub.s32 %v930, %v932
      %v934 = vrot.slane %v920, %v933
      %v935 = vcombine.high %v927, %v927
      %v936 = vcombine.high %v934, %v934
      %v938 = vunpack.c.l.s4 1966171168
      %v939 = vunpack.c.0.s8 %v938
      %v940 = vlaneseq
      %v941 = vshrl.u32 %v940, 7
      %v942 = vsub.s32 %v939, %v941
      %v943 = vrot.slane %v927, %v942
      %v945 = vunpack.c.l.s4 1966171168
      %v946 = vunpack.c.0.s8 %v945
      %v947 = vlaneseq
      %v948 = vshrl.u32 %v947, 7
      %v949 = vsub.s32 %v946, %v948
      %v950 = vrot.slane %v934, %v949
      %v952 = vunpack.c.l.s4 1966171168
      %v953 = vunpack.c.0.s8 %v952
      %v954 = vlaneseq
      %v955 = vshrl.u32 %v954, 7
      %v956 = vsub.s32 %v953, %v955
      %v957 = vrot.slane %v935, %v956
      %v959 = vunpack.c.l.s4 1966171168
      %v960 = vunpack.c.0.s8 %v959
      %v961 = vlaneseq
      %v962 = vshrl.u32 %v961, 7
      %v963 = vsub.s32 %v960, %v962
      %v964 = vrot.slane %v936, %v963
      %v965 = vcombine.high %v943, %v943
      %v966 = vcombine.high %v950, %v950
      %v967 = vcombine.high %v957, %v957
      %v968 = vcombine.high %v964, %v964
      %v969 = vcombine.high %v713, %v713
      %v971 = vunpack.c.l.s4 1966171168
      %v972 = vunpack.c.0.s8 %v971
      %v973 = vlaneseq
      %v974 = vshrl.u32 %v973, 7
      %v975 = vsub.s32 %v972, %v974
      %v976 = vrot.slane %v713, %v975
      %v978 = vunpack.c.l.s4 1966171168
      %v979 = vunpack.c.0.s8 %v978
      %v980 = vlaneseq
      %v981 = vshrl.u32 %v980, 7
      %v982 = vsub.s32 %v979, %v981
      %v983 = vrot.slane %v969, %v982
      %v984 = vcombine.high %v976, %v976
      %v985 = vcombine.high %v983, %v983
      %v987 = vunpack.c.l.s4 1966171168
      %v988 = vunpack.c.0.s8 %v987
      %v989 = vlaneseq
      %v990 = vshrl.u32 %v989, 7
      %v991 = vsub.s32 %v988, %v990
      %v992 = vrot.slane %v976, %v991
      %v994 = vunpack.c.l.s4 1966171168
      %v995 = vunpack.c.0.s8 %v994
      %v996 = vlaneseq
      %v997 = vshrl.u32 %v996, 7
      %v998 = vsub.s32 %v995, %v997
      %v999 = vrot.slane %v983, %v998
      %v1001 = vunpack.c.l.s4 1966171168
      %v1002 = vunpack.c.0.s8 %v1001
      %v1003 = vlaneseq
      %v1004 = vshrl.u32 %v1003, 7
      %v1005 = vsub.s32 %v1002, %v1004
      %v1006 = vrot.slane %v984, %v1005
      %v1008 = vunpack.c.l.s4 1966171168
      %v1009 = vunpack.c.0.s8 %v1008
      %v1010 = vlaneseq
      %v1011 = vshrl.u32 %v1010, 7
      %v1012 = vsub.s32 %v1009, %v1011
      %v1013 = vrot.slane %v985, %v1012
      %v1014 = vcombine.high %v992, %v992
      %v1015 = vcombine.high %v999, %v999
      %v1016 = vcombine.high %v1006, %v1006
      %v1017 = vcombine.high %v1013, %v1013
      %v1018 = vcombine.high %v714, %v714
      %v1020 = vunpack.c.l.s4 1966171168
      %v1021 = vunpack.c.0.s8 %v1020
      %v1022 = vlaneseq
      %v1023 = vshrl.u32 %v1022, 7
      %v1024 = vsub.s32 %v1021, %v1023
      %v1025 = vrot.slane %v714, %v1024
      %v1027 = vunpack.c.l.s4 1966171168
      %v1028 = vunpack.c.0.s8 %v1027
      %v1029 = vlaneseq
      %v1030 = vshrl.u32 %v1029, 7
      %v1031 = vsub.s32 %v1028, %v1030
      %v1032 = vrot.slane %v1018, %v1031
      %v1033 = vcombine.high %v1025, %v1025
      %v1034 = vcombine.high %v1032, %v1032
      %v1036 = vunpack.c.l.s4 1966171168
      %v1037 = vunpack.c.0.s8 %v1036
      %v1038 = vlaneseq
      %v1039 = vshrl.u32 %v1038, 7
      %v1040 = vsub.s32 %v1037, %v1039
      %v1041 = vrot.slane %v1025, %v1040
      %v1043 = vunpack.c.l.s4 1966171168
      %v1044 = vunpack.c.0.s8 %v1043
      %v1045 = vlaneseq
      %v1046 = vshrl.u32 %v1045, 7
      %v1047 = vsub.s32 %v1044, %v1046
      %v1048 = vrot.slane %v1032, %v1047
      %v1050 = vunpack.c.l.s4 1966171168
      %v1051 = vunpack.c.0.s8 %v1050
      %v1052 = vlaneseq
      %v1053 = vshrl.u32 %v1052, 7
      %v1054 = vsub.s32 %v1051, %v1053
      %v1055 = vrot.slane %v1033, %v1054
      %v1057 = vunpack.c.l.s4 1966171168
      %v1058 = vunpack.c.0.s8 %v1057
      %v1059 = vlaneseq
      %v1060 = vshrl.u32 %v1059, 7
      %v1061 = vsub.s32 %v1058, %v1060
      %v1062 = vrot.slane %v1034, %v1061
      %v1063 = vcombine.high %v1041, %v1041
      %v1064 = vcombine.high %v1048, %v1048
      %v1065 = vcombine.high %v1055, %v1055
      %v1066 = vcombine.high %v1062, %v1062
      %v1067 = vcombine.high %v715, %v715
      %v1069 = vunpack.c.l.s4 1966171168
      %v1070 = vunpack.c.0.s8 %v1069
      %v1071 = vlaneseq
      %v1072 = vshrl.u32 %v1071, 7
      %v1073 = vsub.s32 %v1070, %v1072
      %v1074 = vrot.slane %v715, %v1073
      %v1076 = vunpack.c.l.s4 1966171168
      %v1077 = vunpack.c.0.s8 %v1076
      %v1078 = vlaneseq
      %v1079 = vshrl.u32 %v1078, 7
      %v1080 = vsub.s32 %v1077, %v1079
      %v1081 = vrot.slane %v1067, %v1080
      %v1082 = vcombine.high %v1074, %v1074
      %v1083 = vcombine.high %v1081, %v1081
      %v1085 = vunpack.c.l.s4 1966171168
      %v1086 = vunpack.c.0.s8 %v1085
      %v1087 = vlaneseq
      %v1088 = vshrl.u32 %v1087, 7
      %v1089 = vsub.s32 %v1086, %v1088
      %v1090 = vrot.slane %v1074, %v1089
      %v1092 = vunpack.c.l.s4 1966171168
      %v1093 = vunpack.c.0.s8 %v1092
      %v1094 = vlaneseq
      %v1095 = vshrl.u32 %v1094, 7
      %v1096 = vsub.s32 %v1093, %v1095
      %v1097 = vrot.slane %v1081, %v1096
      %v1099 = vunpack.c.l.s4 1966171168
      %v1100 = vunpack.c.0.s8 %v1099
      %v1101 = vlaneseq
      %v1102 = vshrl.u32 %v1101, 7
      %v1103 = vsub.s32 %v1100, %v1102
      %v1104 = vrot.slane %v1082, %v1103
      %v1106 = vunpack.c.l.s4 1966171168
      %v1107 = vunpack.c.0.s8 %v1106
      %v1108 = vlaneseq
      %v1109 = vshrl.u32 %v1108, 7
      %v1110 = vsub.s32 %v1107, %v1109
      %v1111 = vrot.slane %v1083, %v1110
      %v1112 = vcombine.high %v1090, %v1090
      %v1113 = vcombine.high %v1097, %v1097
      %v1114 = vcombine.high %v1104, %v1104
      %v1115 = vcombine.high %v1111, %v1111
      %v1180 = vlaneseq
      %v1181 = vshrl.u32 %v1180, 7
      %v1182 = vsub.s32 0, %v1181
      %v1183 = vrot.slane %v747, %v1182
      %v1184 = vlaneseq
      %v1185 = vshrl.u32 %v1184, 7
      %v1186 = vsub.s32 0, %v1185
      %v1187 = vrot.slane %v761, %v1186
      %v1188 = vlaneseq
      %v1189 = vshrl.u32 %v1188, 7
      %v1190 = vsub.s32 0, %v1189
      %v1191 = vrot.slane %v769, %v1190
      %v1192 = vlaneseq
      %v1193 = vshrl.u32 %v1192, 7
      %v1194 = vsub.s32 0, %v1193
      %v1195 = vrot.slane %v771, %v1194
      %v1196 = vlaneseq
      %v1197 = vshrl.u32 %v1196, 7
      %v1198 = vsub.s32 0, %v1197
      %v1199 = vrot.slane %v754, %v1198
      %v1200 = vlaneseq
      %v1201 = vshrl.u32 %v1200, 7
      %v1202 = vsub.s32 0, %v1201
      %v1203 = vrot.slane %v768, %v1202
      %v1204 = vlaneseq
      %v1205 = vshrl.u32 %v1204, 7
      %v1206 = vsub.s32 0, %v1205
      %v1207 = vrot.slane %v770, %v1206
      %v1208 = vlaneseq
      %v1209 = vshrl.u32 %v1208, 7
      %v1210 = vsub.s32 0, %v1209
      %v1211 = vrot.slane %v772, %v1210
      %v1212 = vlaneseq
      %v1213 = vshrl.u32 %v1212, 7
      %v1214 = vsub.s32 0, %v1213
      %v1215 = vrot.slane %v796, %v1214
      %v1216 = vlaneseq
      %v1217 = vshrl.u32 %v1216, 7
      %v1218 = vsub.s32 0, %v1217
      %v1219 = vrot.slane %v810, %v1218
      %v1220 = vlaneseq
      %v1221 = vshrl.u32 %v1220, 7
      %v1222 = vsub.s32 0, %v1221
      %v1223 = vrot.slane %v818, %v1222
      %v1224 = vlaneseq
      %v1225 = vshrl.u32 %v1224, 7
      %v1226 = vsub.s32 0, %v1225
      %v1227 = vrot.slane %v820, %v1226
      %v1228 = vlaneseq
      %v1229 = vshrl.u32 %v1228, 7
      %v1230 = vsub.s32 0, %v1229
      %v1231 = vrot.slane %v803, %v1230
      %v1232 = vlaneseq
      %v1233 = vshrl.u32 %v1232, 7
      %v1234 = vsub.s32 0, %v1233
      %v1235 = vrot.slane %v817, %v1234
      %v1236 = vlaneseq
      %v1237 = vshrl.u32 %v1236, 7
      %v1238 = vsub.s32 0, %v1237
      %v1239 = vrot.slane %v819, %v1238
      %v1240 = vlaneseq
      %v1241 = vshrl.u32 %v1240, 7
      %v1242 = vsub.s32 0, %v1241
      %v1243 = vrot.slane %v821, %v1242
      %v1244 = vlaneseq
      %v1245 = vshrl.u32 %v1244, 7
      %v1246 = vsub.s32 0, %v1245
      %v1247 = vrot.slane %v845, %v1246
      %v1248 = vlaneseq
      %v1249 = vshrl.u32 %v1248, 7
      %v1250 = vsub.s32 0, %v1249
      %v1251 = vrot.slane %v859, %v1250
      %v1252 = vlaneseq
      %v1253 = vshrl.u32 %v1252, 7
      %v1254 = vsub.s32 0, %v1253
      %v1255 = vrot.slane %v867, %v1254
      %v1256 = vlaneseq
      %v1257 = vshrl.u32 %v1256, 7
      %v1258 = vsub.s32 0, %v1257
      %v1259 = vrot.slane %v869, %v1258
      %v1260 = vlaneseq
      %v1261 = vshrl.u32 %v1260, 7
      %v1262 = vsub.s32 0, %v1261
      %v1263 = vrot.slane %v852, %v1262
      %v1264 = vlaneseq
      %v1265 = vshrl.u32 %v1264, 7
      %v1266 = vsub.s32 0, %v1265
      %v1267 = vrot.slane %v866, %v1266
      %v1268 = vlaneseq
      %v1269 = vshrl.u32 %v1268, 7
      %v1270 = vsub.s32 0, %v1269
      %v1271 = vrot.slane %v868, %v1270
      %v1272 = vlaneseq
      %v1273 = vshrl.u32 %v1272, 7
      %v1274 = vsub.s32 0, %v1273
      %v1275 = vrot.slane %v870, %v1274
      %v1276 = vlaneseq
      %v1277 = vshrl.u32 %v1276, 7
      %v1278 = vsub.s32 0, %v1277
      %v1279 = vrot.slane %v894, %v1278
      %v1280 = vlaneseq
      %v1281 = vshrl.u32 %v1280, 7
      %v1282 = vsub.s32 0, %v1281
      %v1283 = vrot.slane %v908, %v1282
      %v1284 = vlaneseq
      %v1285 = vshrl.u32 %v1284, 7
      %v1286 = vsub.s32 0, %v1285
      %v1287 = vrot.slane %v916, %v1286
      %v1288 = vlaneseq
      %v1289 = vshrl.u32 %v1288, 7
      %v1290 = vsub.s32 0, %v1289
      %v1291 = vrot.slane %v918, %v1290
      %v1292 = vlaneseq
      %v1293 = vshrl.u32 %v1292, 7
      %v1294 = vsub.s32 0, %v1293
      %v1295 = vrot.slane %v901, %v1294
      %v1296 = vlaneseq
      %v1297 = vshrl.u32 %v1296, 7
      %v1298 = vsub.s32 0, %v1297
      %v1299 = vrot.slane %v915, %v1298
      %v1300 = vlaneseq
      %v1301 = vshrl.u32 %v1300, 7
      %v1302 = vsub.s32 0, %v1301
      %v1303 = vrot.slane %v917, %v1302
      %v1304 = vlaneseq
      %v1305 = vshrl.u32 %v1304, 7
      %v1306 = vsub.s32 0, %v1305
      %v1307 = vrot.slane %v919, %v1306
      %v1308 = vlaneseq
      %v1309 = vshrl.u32 %v1308, 7
      %v1310 = vsub.s32 0, %v1309
      %v1311 = vrot.slane %v943, %v1310
      %v1312 = vlaneseq
      %v1313 = vshrl.u32 %v1312, 7
      %v1314 = vsub.s32 0, %v1313
      %v1315 = vrot.slane %v957, %v1314
      %v1316 = vlaneseq
      %v1317 = vshrl.u32 %v1316, 7
      %v1318 = vsub.s32 0, %v1317
      %v1319 = vrot.slane %v965, %v1318
      %v1320 = vlaneseq
      %v1321 = vshrl.u32 %v1320, 7
      %v1322 = vsub.s32 0, %v1321
      %v1323 = vrot.slane %v967, %v1322
      %v1324 = vlaneseq
      %v1325 = vshrl.u32 %v1324, 7
      %v1326 = vsub.s32 0, %v1325
      %v1327 = vrot.slane %v950, %v1326
      %v1328 = vlaneseq
      %v1329 = vshrl.u32 %v1328, 7
      %v1330 = vsub.s32 0, %v1329
      %v1331 = vrot.slane %v964, %v1330
      %v1332 = vlaneseq
      %v1333 = vshrl.u32 %v1332, 7
      %v1334 = vsub.s32 0, %v1333
      %v1335 = vrot.slane %v966, %v1334
      %v1336 = vlaneseq
      %v1337 = vshrl.u32 %v1336, 7
      %v1338 = vsub.s32 0, %v1337
      %v1339 = vrot.slane %v968, %v1338
      %v1340 = vlaneseq
      %v1341 = vshrl.u32 %v1340, 7
      %v1342 = vsub.s32 0, %v1341
      %v1343 = vrot.slane %v992, %v1342
      %v1344 = vlaneseq
      %v1345 = vshrl.u32 %v1344, 7
      %v1346 = vsub.s32 0, %v1345
      %v1347 = vrot.slane %v1006, %v1346
      %v1348 = vlaneseq
      %v1349 = vshrl.u32 %v1348, 7
      %v1350 = vsub.s32 0, %v1349
      %v1351 = vrot.slane %v1014, %v1350
      %v1352 = vlaneseq
      %v1353 = vshrl.u32 %v1352, 7
      %v1354 = vsub.s32 0, %v1353
      %v1355 = vrot.slane %v1016, %v1354
      %v1356 = vlaneseq
      %v1357 = vshrl.u32 %v1356, 7
      %v1358 = vsub.s32 0, %v1357
      %v1359 = vrot.slane %v999, %v1358
      %v1360 = vlaneseq
      %v1361 = vshrl.u32 %v1360, 7
      %v1362 = vsub.s32 0, %v1361
      %v1363 = vrot.slane %v1013, %v1362
      %v1364 = vlaneseq
      %v1365 = vshrl.u32 %v1364, 7
      %v1366 = vsub.s32 0, %v1365
      %v1367 = vrot.slane %v1015, %v1366
      %v1368 = vlaneseq
      %v1369 = vshrl.u32 %v1368, 7
      %v1370 = vsub.s32 0, %v1369
      %v1371 = vrot.slane %v1017, %v1370
      %v1372 = vlaneseq
      %v1373 = vshrl.u32 %v1372, 7
      %v1374 = vsub.s32 0, %v1373
      %v1375 = vrot.slane %v1041, %v1374
      %v1376 = vlaneseq
      %v1377 = vshrl.u32 %v1376, 7
      %v1378 = vsub.s32 0, %v1377
      %v1379 = vrot.slane %v1055, %v1378
      %v1380 = vlaneseq
      %v1381 = vshrl.u32 %v1380, 7
      %v1382 = vsub.s32 0, %v1381
      %v1383 = vrot.slane %v1063, %v1382
      %v1384 = vlaneseq
      %v1385 = vshrl.u32 %v1384, 7
      %v1386 = vsub.s32 0, %v1385
      %v1387 = vrot.slane %v1065, %v1386
      %v1388 = vlaneseq
      %v1389 = vshrl.u32 %v1388, 7
      %v1390 = vsub.s32 0, %v1389
      %v1391 = vrot.slane %v1048, %v1390
      %v1392 = vlaneseq
      %v1393 = vshrl.u32 %v1392, 7
      %v1394 = vsub.s32 0, %v1393
      %v1395 = vrot.slane %v1062, %v1394
      %v1396 = vlaneseq
      %v1397 = vshrl.u32 %v1396, 7
      %v1398 = vsub.s32 0, %v1397
      %v1399 = vrot.slane %v1064, %v1398
      %v1400 = vlaneseq
      %v1401 = vshrl.u32 %v1400, 7
      %v1402 = vsub.s32 0, %v1401
      %v1403 = vrot.slane %v1066, %v1402
      %v1404 = vlaneseq
      %v1405 = vshrl.u32 %v1404, 7
      %v1406 = vsub.s32 0, %v1405
      %v1407 = vrot.slane %v1090, %v1406
      %v1408 = vlaneseq
      %v1409 = vshrl.u32 %v1408, 7
      %v1410 = vsub.s32 0, %v1409
      %v1411 = vrot.slane %v1104, %v1410
      %v1412 = vlaneseq
      %v1413 = vshrl.u32 %v1412, 7
      %v1414 = vsub.s32 0, %v1413
      %v1415 = vrot.slane %v1112, %v1414
      %v1416 = vlaneseq
      %v1417 = vshrl.u32 %v1416, 7
      %v1418 = vsub.s32 0, %v1417
      %v1419 = vrot.slane %v1114, %v1418
      %v1420 = vlaneseq
      %v1421 = vshrl.u32 %v1420, 7
      %v1422 = vsub.s32 0, %v1421
      %v1423 = vrot.slane %v1097, %v1422
      %v1424 = vlaneseq
      %v1425 = vshrl.u32 %v1424, 7
      %v1426 = vsub.s32 0, %v1425
      %v1427 = vrot.slane %v1111, %v1426
      %v1428 = vlaneseq
      %v1429 = vshrl.u32 %v1428, 7
      %v1430 = vsub.s32 0, %v1429
      %v1431 = vrot.slane %v1113, %v1430
      %v1432 = vlaneseq
      %v1433 = vshrl.u32 %v1432, 7
      %v1434 = vsub.s32 0, %v1433
      %v1435 = vrot.slane %v1115, %v1434
      %1436 = vrot.lane.b32.xlu0 %v1183, 124
      %v1437 = vpop.permute.xlu0 %1436
      %1438 = vrot.lane.b32.xlu0 %v1187, 124
      %v1439 = vpop.permute.xlu0 %1438
      %1440 = vrot.lane.b32.xlu0 %v1191, 124
      %v1441 = vpop.permute.xlu0 %1440
      %1442 = vrot.lane.b32.xlu0 %v1195, 124
      %v1443 = vpop.permute.xlu0 %1442
      %1444 = vrot.lane.b32.xlu0 %v1199, 124
      %v1445 = vpop.permute.xlu0 %1444
      %1446 = vrot.lane.b32.xlu0 %v1203, 124
      %v1447 = vpop.permute.xlu0 %1446
      %1448 = vrot.lane.b32.xlu0 %v1207, 124
      %v1449 = vpop.permute.xlu0 %1448
      %1450 = vrot.lane.b32.xlu0 %v1211, 124
      %v1451 = vpop.permute.xlu0 %1450
      %1452 = vrot.lane.b32.xlu0 %v1215, 124
      %v1453 = vpop.permute.xlu0 %1452
      %1454 = vrot.lane.b32.xlu0 %v1219, 124
      %v1455 = vpop.permute.xlu0 %1454
      %1456 = vrot.lane.b32.xlu0 %v1223, 124
      %v1457 = vpop.permute.xlu0 %1456
      %1458 = vrot.lane.b32.xlu0 %v1227, 124
      %v1459 = vpop.permute.xlu0 %1458
      %1460 = vrot.lane.b32.xlu0 %v1231, 124
      %v1461 = vpop.permute.xlu0 %1460
      %1462 = vrot.lane.b32.xlu0 %v1235, 124
      %v1463 = vpop.permute.xlu0 %1462
      %1464 = vrot.lane.b32.xlu0 %v1239, 124
      %v1465 = vpop.permute.xlu0 %1464
      %1466 = vrot.lane.b32.xlu0 %v1243, 124
      %v1467 = vpop.permute.xlu0 %1466
      %1468 = vrot.lane.b32.xlu0 %v1247, 124
      %v1469 = vpop.permute.xlu0 %1468
      %1470 = vrot.lane.b32.xlu0 %v1251, 124
      %v1471 = vpop.permute.xlu0 %1470
      %1472 = vrot.lane.b32.xlu0 %v1255, 124
      %v1473 = vpop.permute.xlu0 %1472
      %1474 = vrot.lane.b32.xlu0 %v1259, 124
      %v1475 = vpop.permute.xlu0 %1474
      %1476 = vrot.lane.b32.xlu0 %v1263, 124
      %v1477 = vpop.permute.xlu0 %1476
      %1478 = vrot.lane.b32.xlu0 %v1267, 124
      %v1479 = vpop.permute.xlu0 %1478
      %1480 = vrot.lane.b32.xlu0 %v1271, 124
      %v1481 = vpop.permute.xlu0 %1480
      %1482 = vrot.lane.b32.xlu0 %v1275, 124
      %v1483 = vpop.permute.xlu0 %1482
      %1484 = vrot.lane.b32.xlu0 %v1279, 124
      %v1485 = vpop.permute.xlu0 %1484
      %1486 = vrot.lane.b32.xlu0 %v1283, 124
      %v1487 = vpop.permute.xlu0 %1486
      %1488 = vrot.lane.b32.xlu0 %v1287, 124
      %v1489 = vpop.permute.xlu0 %1488
      %1490 = vrot.lane.b32.xlu0 %v1291, 124
      %v1491 = vpop.permute.xlu0 %1490
      %1492 = vrot.lane.b32.xlu0 %v1295, 124
      %v1493 = vpop.permute.xlu0 %1492
      %1494 = vrot.lane.b32.xlu0 %v1299, 124
      %v1495 = vpop.permute.xlu0 %1494
      %1496 = vrot.lane.b32.xlu0 %v1303, 124
      %v1497 = vpop.permute.xlu0 %1496
      %1498 = vrot.lane.b32.xlu0 %v1307, 124
      %v1499 = vpop.permute.xlu0 %1498
      %1500 = vrot.lane.b32.xlu0 %v1311, 124
      %v1501 = vpop.permute.xlu0 %1500
      %1502 = vrot.lane.b32.xlu0 %v1315, 124
      %v1503 = vpop.permute.xlu0 %1502
      %1504 = vrot.lane.b32.xlu0 %v1319, 124
      %v1505 = vpop.permute.xlu0 %1504
      %1506 = vrot.lane.b32.xlu0 %v1323, 124
      %v1507 = vpop.permute.xlu0 %1506
      %1508 = vrot.lane.b32.xlu0 %v1327, 124
      %v1509 = vpop.permute.xlu0 %1508
      %1510 = vrot.lane.b32.xlu0 %v1331, 124
      %v1511 = vpop.permute.xlu0 %1510
      %1512 = vrot.lane.b32.xlu0 %v1335, 124
      %v1513 = vpop.permute.xlu0 %1512
      %1514 = vrot.lane.b32.xlu0 %v1339, 124
      %v1515 = vpop.permute.xlu0 %1514
      %1516 = vrot.lane.b32.xlu0 %v1343, 124
      %v1517 = vpop.permute.xlu0 %1516
      %1518 = vrot.lane.b32.xlu0 %v1347, 124
      %v1519 = vpop.permute.xlu0 %1518
      %1520 = vrot.lane.b32.xlu0 %v1351, 124
      %v1521 = vpop.permute.xlu0 %1520
      %1522 = vrot.lane.b32.xlu0 %v1355, 124
      %v1523 = vpop.permute.xlu0 %1522
      %1524 = vrot.lane.b32.xlu0 %v1359, 124
      %v1525 = vpop.permute.xlu0 %1524
      %1526 = vrot.lane.b32.xlu0 %v1363, 124
      %v1527 = vpop.permute.xlu0 %1526
      %1528 = vrot.lane.b32.xlu0 %v1367, 124
      %v1529 = vpop.permute.xlu0 %1528
      %1530 = vrot.lane.b32.xlu0 %v1371, 124
      %v1531 = vpop.permute.xlu0 %1530
      %1532 = vrot.lane.b32.xlu0 %v1375, 124
      %v1533 = vpop.permute.xlu0 %1532
      %1534 = vrot.lane.b32.xlu0 %v1379, 124
      %v1535 = vpop.permute.xlu0 %1534
      %1536 = vrot.lane.b32.xlu0 %v1383, 124
      %v1537 = vpop.permute.xlu0 %1536
      %1538 = vrot.lane.b32.xlu0 %v1387, 124
      %v1539 = vpop.permute.xlu0 %1538
      %1540 = vrot.lane.b32.xlu0 %v1391, 124
      %v1541 = vpop.permute.xlu0 %1540
      %1542 = vrot.lane.b32.xlu0 %v1395, 124
      %v1543 = vpop.permute.xlu0 %1542
      %1544 = vrot.lane.b32.xlu0 %v1399, 124
      %v1545 = vpop.permute.xlu0 %1544
      %1546 = vrot.lane.b32.xlu0 %v1403, 124
      %v1547 = vpop.permute.xlu0 %1546
      %1548 = vrot.lane.b32.xlu0 %v1407, 124
      %v1549 = vpop.permute.xlu0 %1548
      %1550 = vrot.lane.b32.xlu0 %v1411, 124
      %v1551 = vpop.permute.xlu0 %1550
      %1552 = vrot.lane.b32.xlu0 %v1415, 124
      %v1553 = vpop.permute.xlu0 %1552
      %1554 = vrot.lane.b32.xlu0 %v1419, 124
      %v1555 = vpop.permute.xlu0 %1554
      %1556 = vrot.lane.b32.xlu0 %v1423, 124
      %v1557 = vpop.permute.xlu0 %1556
      %1558 = vrot.lane.b32.xlu0 %v1427, 124
      %v1559 = vpop.permute.xlu0 %1558
      %1560 = vrot.lane.b32.xlu0 %v1431, 124
      %v1561 = vpop.permute.xlu0 %1560
      %1562 = vrot.lane.b32.xlu0 %v1435, 124
      %v1563 = vpop.permute.xlu0 %1562
      %vm1628 = vcmask 1040384
      %v1629 = vsel %vm1628, %v747, %v1437
      %v1630 = vsel %vm1628, %v761, %v1439
      %v1631 = vsel %vm1628, %v769, %v1441
      %v1632 = vsel %vm1628, %v771, %v1443
      %v1633 = vsel %vm1628, %v754, %v1445
      %v1634 = vsel %vm1628, %v768, %v1447
      %v1635 = vsel %vm1628, %v770, %v1449
      %v1636 = vsel %vm1628, %v772, %v1451
      %v1637 = vsel %vm1628, %v796, %v1453
      %v1638 = vsel %vm1628, %v810, %v1455
      %v1639 = vsel %vm1628, %v818, %v1457
      %v1640 = vsel %vm1628, %v820, %v1459
      %v1641 = vsel %vm1628, %v803, %v1461
      %v1642 = vsel %vm1628, %v817, %v1463
      %v1643 = vsel %vm1628, %v819, %v1465
      %v1644 = vsel %vm1628, %v821, %v1467
      %v1645 = vsel %vm1628, %v845, %v1469
      %v1646 = vsel %vm1628, %v859, %v1471
      %v1647 = vsel %vm1628, %v867, %v1473
      %v1648 = vsel %vm1628, %v869, %v1475
      %v1649 = vsel %vm1628, %v852, %v1477
      %v1650 = vsel %vm1628, %v866, %v1479
      %v1651 = vsel %vm1628, %v868, %v1481
      %v1652 = vsel %vm1628, %v870, %v1483
      %v1653 = vsel %vm1628, %v894, %v1485
      %v1654 = vsel %vm1628, %v908, %v1487
      %v1655 = vsel %vm1628, %v916, %v1489
      %v1656 = vsel %vm1628, %v918, %v1491
      %v1657 = vsel %vm1628, %v901, %v1493
      %v1658 = vsel %vm1628, %v915, %v1495
      %v1659 = vsel %vm1628, %v917, %v1497
      %v1660 = vsel %vm1628, %v919, %v1499
      %v1661 = vsel %vm1628, %v943, %v1501
      %v1662 = vsel %vm1628, %v957, %v1503
      %v1663 = vsel %vm1628, %v965, %v1505
      %v1664 = vsel %vm1628, %v967, %v1507
      %v1665 = vsel %vm1628, %v950, %v1509
      %v1666 = vsel %vm1628, %v964, %v1511
      %v1667 = vsel %vm1628, %v966, %v1513
      %v1668 = vsel %vm1628, %v968, %v1515
      %v1669 = vsel %vm1628, %v992, %v1517
      %v1670 = vsel %vm1628, %v1006, %v1519
      %v1671 = vsel %vm1628, %v1014, %v1521
      %v1672 = vsel %vm1628, %v1016, %v1523
      %v1673 = vsel %vm1628, %v999, %v1525
      %v1674 = vsel %vm1628, %v1013, %v1527
      %v1675 = vsel %vm1628, %v1015, %v1529
      %v1676 = vsel %vm1628, %v1017, %v1531
      %v1677 = vsel %vm1628, %v1041, %v1533
      %v1678 = vsel %vm1628, %v1055, %v1535
      %v1679 = vsel %vm1628, %v1063, %v1537
      %v1680 = vsel %vm1628, %v1065, %v1539
      %v1681 = vsel %vm1628, %v1048, %v1541
      %v1682 = vsel %vm1628, %v1062, %v1543
      %v1683 = vsel %vm1628, %v1064, %v1545
      %v1684 = vsel %vm1628, %v1066, %v1547
      %v1685 = vsel %vm1628, %v1090, %v1549
      %v1686 = vsel %vm1628, %v1104, %v1551
      %v1687 = vsel %vm1628, %v1112, %v1553
      %v1688 = vsel %vm1628, %v1114, %v1555
      %v1689 = vsel %vm1628, %v1097, %v1557
      %v1690 = vsel %vm1628, %v1111, %v1559
      %v1691 = vsel %vm1628, %v1113, %v1561
      %v1692 = vsel %vm1628, %v1115, %v1563
      %v1757 = vcombine.low %v1629, %v1630
      %v1758 = vcombine.low %v1631, %v1632
      %v1760 = vunpack.c.l.s4 1983009808
      %v1761 = vunpack.c.0.s8 %v1760
      %v1762 = vlaneseq
      %v1763 = vshrl.u32 %v1762, 7
      %v1764 = vsub.s32 %v1761, %v1763
      %v1765 = vrot.slane %v1757, %v1764
      %v1767 = vunpack.c.l.s4 1983009808
      %v1768 = vunpack.c.0.s8 %v1767
      %v1769 = vlaneseq
      %v1770 = vshrl.u32 %v1769, 7
      %v1771 = vsub.s32 %v1768, %v1770
      %v1772 = vrot.slane %v1758, %v1771
      %v1773 = vcombine.low %v1765, %v1772
      %v1774 = vcombine.low %v1633, %v1634
      %v1775 = vcombine.low %v1635, %v1636
      %v1777 = vunpack.c.l.s4 1983009808
      %v1778 = vunpack.c.0.s8 %v1777
      %v1779 = vlaneseq
      %v1780 = vshrl.u32 %v1779, 7
      %v1781 = vsub.s32 %v1778, %v1780
      %v1782 = vrot.slane %v1774, %v1781
      %v1784 = vunpack.c.l.s4 1983009808
      %v1785 = vunpack.c.0.s8 %v1784
      %v1786 = vlaneseq
      %v1787 = vshrl.u32 %v1786, 7
      %v1788 = vsub.s32 %v1785, %v1787
      %v1789 = vrot.slane %v1775, %v1788
      %v1790 = vcombine.low %v1782, %v1789
      %v1791 = vcombine.low %v1637, %v1638
      %v1792 = vcombine.low %v1639, %v1640
      %v1794 = vunpack.c.l.s4 1983009808
      %v1795 = vunpack.c.0.s8 %v1794
      %v1796 = vlaneseq
      %v1797 = vshrl.u32 %v1796, 7
      %v1798 = vsub.s32 %v1795, %v1797
      %v1799 = vrot.slane %v1791, %v1798
      %v1801 = vunpack.c.l.s4 1983009808
      %v1802 = vunpack.c.0.s8 %v1801
      %v1803 = vlaneseq
      %v1804 = vshrl.u32 %v1803, 7
      %v1805 = vsub.s32 %v1802, %v1804
      %v1806 = vrot.slane %v1792, %v1805
      %v1807 = vcombine.low %v1799, %v1806
      %v1808 = vcombine.low %v1641, %v1642
      %v1809 = vcombine.low %v1643, %v1644
      %v1811 = vunpack.c.l.s4 1983009808
      %v1812 = vunpack.c.0.s8 %v1811
      %v1813 = vlaneseq
      %v1814 = vshrl.u32 %v1813, 7
      %v1815 = vsub.s32 %v1812, %v1814
      %v1816 = vrot.slane %v1808, %v1815
      %v1818 = vunpack.c.l.s4 1983009808
      %v1819 = vunpack.c.0.s8 %v1818
      %v1820 = vlaneseq
      %v1821 = vshrl.u32 %v1820, 7
      %v1822 = vsub.s32 %v1819, %v1821
      %v1823 = vrot.slane %v1809, %v1822
      %v1824 = vcombine.low %v1816, %v1823
      %v1825 = vcombine.low %v1645, %v1646
      %v1826 = vcombine.low %v1647, %v1648
      %v1828 = vunpack.c.l.s4 1983009808
      %v1829 = vunpack.c.0.s8 %v1828
      %v1830 = vlaneseq
      %v1831 = vshrl.u32 %v1830, 7
      %v1832 = vsub.s32 %v1829, %v1831
      %v1833 = vrot.slane %v1825, %v1832
      %v1835 = vunpack.c.l.s4 1983009808
      %v1836 = vunpack.c.0.s8 %v1835
      %v1837 = vlaneseq
      %v1838 = vshrl.u32 %v1837, 7
      %v1839 = vsub.s32 %v1836, %v1838
      %v1840 = vrot.slane %v1826, %v1839
      %v1841 = vcombine.low %v1833, %v1840
      %v1842 = vcombine.low %v1649, %v1650
      %v1843 = vcombine.low %v1651, %v1652
      %v1845 = vunpack.c.l.s4 1983009808
      %v1846 = vunpack.c.0.s8 %v1845
      %v1847 = vlaneseq
      %v1848 = vshrl.u32 %v1847, 7
      %v1849 = vsub.s32 %v1846, %v1848
      %v1850 = vrot.slane %v1842, %v1849
      %v1852 = vunpack.c.l.s4 1983009808
      %v1853 = vunpack.c.0.s8 %v1852
      %v1854 = vlaneseq
      %v1855 = vshrl.u32 %v1854, 7
      %v1856 = vsub.s32 %v1853, %v1855
      %v1857 = vrot.slane %v1843, %v1856
      %v1858 = vcombine.low %v1850, %v1857
      %v1859 = vcombine.low %v1653, %v1654
      %v1860 = vcombine.low %v1655, %v1656
      %v1862 = vunpack.c.l.s4 1983009808
      %v1863 = vunpack.c.0.s8 %v1862
      %v1864 = vlaneseq
      %v1865 = vshrl.u32 %v1864, 7
      %v1866 = vsub.s32 %v1863, %v1865
      %v1867 = vrot.slane %v1859, %v1866
      %v1869 = vunpack.c.l.s4 1983009808
      %v1870 = vunpack.c.0.s8 %v1869
      %v1871 = vlaneseq
      %v1872 = vshrl.u32 %v1871, 7
      %v1873 = vsub.s32 %v1870, %v1872
      %v1874 = vrot.slane %v1860, %v1873
      %v1875 = vcombine.low %v1867, %v1874
      %v1876 = vcombine.low %v1657, %v1658
      %v1877 = vcombine.low %v1659, %v1660
      %v1879 = vunpack.c.l.s4 1983009808
      %v1880 = vunpack.c.0.s8 %v1879
      %v1881 = vlaneseq
      %v1882 = vshrl.u32 %v1881, 7
      %v1883 = vsub.s32 %v1880, %v1882
      %v1884 = vrot.slane %v1876, %v1883
      %v1886 = vunpack.c.l.s4 1983009808
      %v1887 = vunpack.c.0.s8 %v1886
      %v1888 = vlaneseq
      %v1889 = vshrl.u32 %v1888, 7
      %v1890 = vsub.s32 %v1887, %v1889
      %v1891 = vrot.slane %v1877, %v1890
      %v1892 = vcombine.low %v1884, %v1891
      %v1893 = vcombine.low %v1661, %v1662
      %v1894 = vcombine.low %v1663, %v1664
      %v1896 = vunpack.c.l.s4 1983009808
      %v1897 = vunpack.c.0.s8 %v1896
      %v1898 = vlaneseq
      %v1899 = vshrl.u32 %v1898, 7
      %v1900 = vsub.s32 %v1897, %v1899
      %v1901 = vrot.slane %v1893, %v1900
      %v1903 = vunpack.c.l.s4 1983009808
      %v1904 = vunpack.c.0.s8 %v1903
      %v1905 = vlaneseq
      %v1906 = vshrl.u32 %v1905, 7
      %v1907 = vsub.s32 %v1904, %v1906
      %v1908 = vrot.slane %v1894, %v1907
      %v1909 = vcombine.low %v1901, %v1908
      %v1910 = vcombine.low %v1665, %v1666
      %v1911 = vcombine.low %v1667, %v1668
      %v1913 = vunpack.c.l.s4 1983009808
      %v1914 = vunpack.c.0.s8 %v1913
      %v1915 = vlaneseq
      %v1916 = vshrl.u32 %v1915, 7
      %v1917 = vsub.s32 %v1914, %v1916
      %v1918 = vrot.slane %v1910, %v1917
      %v1920 = vunpack.c.l.s4 1983009808
      %v1921 = vunpack.c.0.s8 %v1920
      %v1922 = vlaneseq
      %v1923 = vshrl.u32 %v1922, 7
      %v1924 = vsub.s32 %v1921, %v1923
      %v1925 = vrot.slane %v1911, %v1924
      %v1926 = vcombine.low %v1918, %v1925
      %v1927 = vcombine.low %v1669, %v1670
      %v1928 = vcombine.low %v1671, %v1672
      %v1930 = vunpack.c.l.s4 1983009808
      %v1931 = vunpack.c.0.s8 %v1930
      %v1932 = vlaneseq
      %v1933 = vshrl.u32 %v1932, 7
      %v1934 = vsub.s32 %v1931, %v1933
      %v1935 = vrot.slane %v1927, %v1934
      %v1937 = vunpack.c.l.s4 1983009808
      %v1938 = vunpack.c.0.s8 %v1937
      %v1939 = vlaneseq
      %v1940 = vshrl.u32 %v1939, 7
      %v1941 = vsub.s32 %v1938, %v1940
      %v1942 = vrot.slane %v1928, %v1941
      %v1943 = vcombine.low %v1935, %v1942
      %v1944 = vcombine.low %v1673, %v1674
      %v1945 = vcombine.low %v1675, %v1676
      %v1947 = vunpack.c.l.s4 1983009808
      %v1948 = vunpack.c.0.s8 %v1947
      %v1949 = vlaneseq
      %v1950 = vshrl.u32 %v1949, 7
      %v1951 = vsub.s32 %v1948, %v1950
      %v1952 = vrot.slane %v1944, %v1951
      %v1954 = vunpack.c.l.s4 1983009808
      %v1955 = vunpack.c.0.s8 %v1954
      %v1956 = vlaneseq
      %v1957 = vshrl.u32 %v1956, 7
      %v1958 = vsub.s32 %v1955, %v1957
      %v1959 = vrot.slane %v1945, %v1958
      %v1960 = vcombine.low %v1952, %v1959
      %v1961 = vcombine.low %v1677, %v1678
      %v1962 = vcombine.low %v1679, %v1680
      %v1964 = vunpack.c.l.s4 1983009808
      %v1965 = vunpack.c.0.s8 %v1964
      %v1966 = vlaneseq
      %v1967 = vshrl.u32 %v1966, 7
      %v1968 = vsub.s32 %v1965, %v1967
      %v1969 = vrot.slane %v1961, %v1968
      %v1971 = vunpack.c.l.s4 1983009808
      %v1972 = vunpack.c.0.s8 %v1971
      %v1973 = vlaneseq
      %v1974 = vshrl.u32 %v1973, 7
      %v1975 = vsub.s32 %v1972, %v1974
      %v1976 = vrot.slane %v1962, %v1975
      %v1977 = vcombine.low %v1969, %v1976
      %v1978 = vcombine.low %v1681, %v1682
      %v1979 = vcombine.low %v1683, %v1684
      %v1981 = vunpack.c.l.s4 1983009808
      %v1982 = vunpack.c.0.s8 %v1981
      %v1983 = vlaneseq
      %v1984 = vshrl.u32 %v1983, 7
      %v1985 = vsub.s32 %v1982, %v1984
      %v1986 = vrot.slane %v1978, %v1985
      %v1988 = vunpack.c.l.s4 1983009808
      %v1989 = vunpack.c.0.s8 %v1988
      %v1990 = vlaneseq
      %v1991 = vshrl.u32 %v1990, 7
      %v1992 = vsub.s32 %v1989, %v1991
      %v1993 = vrot.slane %v1979, %v1992
      %v1994 = vcombine.low %v1986, %v1993
      %v1995 = vcombine.low %v1685, %v1686
      %v1996 = vcombine.low %v1687, %v1688
      %v1998 = vunpack.c.l.s4 1983009808
      %v1999 = vunpack.c.0.s8 %v1998
      %v2000 = vlaneseq
      %v2001 = vshrl.u32 %v2000, 7
      %v2002 = vsub.s32 %v1999, %v2001
      %v2003 = vrot.slane %v1995, %v2002
      %v2005 = vunpack.c.l.s4 1983009808
      %v2006 = vunpack.c.0.s8 %v2005
      %v2007 = vlaneseq
      %v2008 = vshrl.u32 %v2007, 7
      %v2009 = vsub.s32 %v2006, %v2008
      %v2010 = vrot.slane %v1996, %v2009
      %v2011 = vcombine.low %v2003, %v2010
      %v2012 = vcombine.low %v1689, %v1690
      %v2013 = vcombine.low %v1691, %v1692
      %v2015 = vunpack.c.l.s4 1983009808
      %v2016 = vunpack.c.0.s8 %v2015
      %v2017 = vlaneseq
      %v2018 = vshrl.u32 %v2017, 7
      %v2019 = vsub.s32 %v2016, %v2018
      %v2020 = vrot.slane %v2012, %v2019
      %v2022 = vunpack.c.l.s4 1983009808
      %v2023 = vunpack.c.0.s8 %v2022
      %v2024 = vlaneseq
      %v2025 = vshrl.u32 %v2024, 7
      %v2026 = vsub.s32 %v2023, %v2025
      %v2027 = vrot.slane %v2013, %v2026
      %v2028 = vcombine.low %v2020, %v2027
      %2045 = vrot.lane.b32.xlu0 %v1773, 120
      %v2046 = vpop.permute.xlu0 %2045
      %2047 = vrot.lane.b32.xlu0 %v1790, 120
      %v2048 = vpop.permute.xlu0 %2047
      %2049 = vrot.lane.b32.xlu0 %v1807, 120
      %v2050 = vpop.permute.xlu0 %2049
      %2051 = vrot.lane.b32.xlu0 %v1824, 120
      %v2052 = vpop.permute.xlu0 %2051
      %2053 = vrot.lane.b32.xlu0 %v1841, 120
      %v2054 = vpop.permute.xlu0 %2053
      %2055 = vrot.lane.b32.xlu0 %v1858, 120
      %v2056 = vpop.permute.xlu0 %2055
      %2057 = vrot.lane.b32.xlu0 %v1875, 120
      %v2058 = vpop.permute.xlu0 %2057
      %2059 = vrot.lane.b32.xlu0 %v1892, 120
      %v2060 = vpop.permute.xlu0 %2059
      %2061 = vrot.lane.b32.xlu0 %v1909, 120
      %v2062 = vpop.permute.xlu0 %2061
      %2063 = vrot.lane.b32.xlu0 %v1926, 120
      %v2064 = vpop.permute.xlu0 %2063
      %2065 = vrot.lane.b32.xlu0 %v1943, 120
      %v2066 = vpop.permute.xlu0 %2065
      %2067 = vrot.lane.b32.xlu0 %v1960, 120
      %v2068 = vpop.permute.xlu0 %2067
      %2069 = vrot.lane.b32.xlu0 %v1977, 120
      %v2070 = vpop.permute.xlu0 %2069
      %2071 = vrot.lane.b32.xlu0 %v1994, 120
      %v2072 = vpop.permute.xlu0 %2071
      %2073 = vrot.lane.b32.xlu0 %v2011, 120
      %v2074 = vpop.permute.xlu0 %2073
      %2075 = vrot.lane.b32.xlu0 %v2028, 120
      %v2076 = vpop.permute.xlu0 %2075
      %v2093 = vpack.c.bf16 %v1790, %v1773
      %v2094 = vpack.c.bf16 %v2048, %v2046
      %v2095 = vpack.c.bf16 %v1824, %v1807
      %v2096 = vpack.c.bf16 %v2052, %v2050
      %v2097 = vpack.c.bf16 %v1858, %v1841
      %v2098 = vpack.c.bf16 %v2056, %v2054
      %v2099 = vpack.c.bf16 %v1892, %v1875
      %v2100 = vpack.c.bf16 %v2060, %v2058
      %v2101 = vpack.c.bf16 %v1926, %v1909
      %v2102 = vpack.c.bf16 %v2064, %v2062
      %v2103 = vpack.c.bf16 %v1960, %v1943
      %v2104 = vpack.c.bf16 %v2068, %v2066
      %v2105 = vpack.c.bf16 %v1994, %v1977
      %v2106 = vpack.c.bf16 %v2072, %v2070
      %v2107 = vpack.c.bf16 %v2028, %v2011
      %v2108 = vpack.c.bf16 %v2076, %v2074
      %v2109 = vld [vmem:[%s428] sm:$0xf]
      %v2110 = vld [vmem:[%s428 + $0x4] sm:$0xf]
      %v2111 = vld [vmem:[%s428 + $0x8] sm:$0xf]
      %v2112 = vld [vmem:[%s428 + $0xc] sm:$0xf]
      %v2113 = vld [vmem:[%s428 + $0x10] sm:$0xf]
      %v2114 = vld [vmem:[%s428 + $0x14] sm:$0xf]
      %v2115 = vld [vmem:[%s428 + $0x18] sm:$0xf]
      %v2116 = vld [vmem:[%s428 + $0x1c] sm:$0xf]
      %v2117 = vld [vmem:[%s428 + $0x20] sm:$0xf]
      %v2118 = vld [vmem:[%s428 + $0x24] sm:$0xf]
      %v2119 = vld [vmem:[%s428 + $0x28] sm:$0xf]
      %v2120 = vld [vmem:[%s428 + $0x2c] sm:$0xf]
      %v2121 = vld [vmem:[%s428 + $0x30] sm:$0xf]
      %v2122 = vld [vmem:[%s428 + $0x34] sm:$0xf]
      %v2123 = vld [vmem:[%s428 + $0x38] sm:$0xf]
      %v2124 = vld [vmem:[%s428 + $0x3c] sm:$0xf]
      %v2125 = vld [vmem:[%s428 + $0x40] sm:$0xf]
      %v2126 = vld [vmem:[%s428 + $0x44] sm:$0xf]
      %v2127 = vld [vmem:[%s428 + $0x48] sm:$0xf]
      %v2128 = vld [vmem:[%s428 + $0x4c] sm:$0xf]
      %v2129 = vld [vmem:[%s428 + $0x50] sm:$0xf]
      %v2130 = vld [vmem:[%s428 + $0x54] sm:$0xf]
      %v2131 = vld [vmem:[%s428 + $0x58] sm:$0xf]
      %v2132 = vld [vmem:[%s428 + $0x5c] sm:$0xf]
      %v2133 = vld [vmem:[%s428 + $0x60] sm:$0xf]
      %v2134 = vld [vmem:[%s428 + $0x64] sm:$0xf]
      %v2135 = vld [vmem:[%s428 + $0x68] sm:$0xf]
      %v2136 = vld [vmem:[%s428 + $0x6c] sm:$0xf]
      %v2137 = vld [vmem:[%s428 + $0x70] sm:$0xf]
      %v2138 = vld [vmem:[%s428 + $0x74] sm:$0xf]
      %v2139 = vld [vmem:[%s428 + $0x78] sm:$0xf]
      %v2140 = vld [vmem:[%s428 + $0x7c] sm:$0xf]
      %v2173 = vunpack.c.l.b16 %v2109
      %v2174 = vunpack.c.l.b16 %v2110
      %v2175 = vunpack.c.l.b16 %v2111
      %v2176 = vunpack.c.l.b16 %v2112
      %v2177 = vunpack.c.l.b16 %v2113
      %v2178 = vunpack.c.l.b16 %v2114
      %v2179 = vunpack.c.l.b16 %v2115
      %v2180 = vunpack.c.l.b16 %v2116
      %v2181 = vunpack.c.l.b16 %v2117
      %v2182 = vunpack.c.l.b16 %v2118
      %v2183 = vunpack.c.l.b16 %v2119
      %v2184 = vunpack.c.l.b16 %v2120
      %v2185 = vunpack.c.l.b16 %v2121
      %v2186 = vunpack.c.l.b16 %v2122
      %v2187 = vunpack.c.l.b16 %v2123
      %v2188 = vunpack.c.l.b16 %v2124
      %v2189 = vunpack.c.l.b16 %v2125
      %v2190 = vunpack.c.l.b16 %v2126
      %v2191 = vunpack.c.l.b16 %v2127
      %v2192 = vunpack.c.l.b16 %v2128
      %v2193 = vunpack.c.l.b16 %v2129
      %v2194 = vunpack.c.l.b16 %v2130
      %v2195 = vunpack.c.l.b16 %v2131
      %v2196 = vunpack.c.l.b16 %v2132
      %v2197 = vunpack.c.l.b16 %v2133
      %v2198 = vunpack.c.l.b16 %v2134
      %v2199 = vunpack.c.l.b16 %v2135
      %v2200 = vunpack.c.l.b16 %v2136
      %v2201 = vunpack.c.l.b16 %v2137
      %v2202 = vunpack.c.l.b16 %v2138
      %v2203 = vunpack.c.l.b16 %v2139
      %v2204 = vunpack.c.l.b16 %v2140
      %v2205 = vpack.c.b16 %v2174, %v2173
      %v2206 = vpack.c.b16 %v2176, %v2175
      %v2207 = vpack.c.b16 %v2178, %v2177
      %v2208 = vpack.c.b16 %v2180, %v2179
      %v2209 = vpack.c.b16 %v2182, %v2181
      %v2210 = vpack.c.b16 %v2184, %v2183
      %v2211 = vpack.c.b16 %v2186, %v2185
      %v2212 = vpack.c.b16 %v2188, %v2187
      %v2213 = vpack.c.b16 %v2190, %v2189
      %v2214 = vpack.c.b16 %v2192, %v2191
      %v2215 = vpack.c.b16 %v2194, %v2193
      %v2216 = vpack.c.b16 %v2196, %v2195
      %v2217 = vpack.c.b16 %v2198, %v2197
      %v2218 = vpack.c.b16 %v2200, %v2199
      %v2219 = vpack.c.b16 %v2202, %v2201
      %v2220 = vpack.c.b16 %v2204, %v2203
      %v2222 = vshrl.u32 0, 16
      %v2224 = vrot.slane %v2222, 7
      %v2225 = vshll.u32 0, 16
      %v2227 = vor.u32 %v2224, %v2225
      %v2229 = vshrl.u32 %v2205, 16
      %v2231 = vrot.slane %v2229, 7
      %v2232 = vshll.u32 %v2205, 16
      %v2234 = vor.u32 %v2231, %v2232
      %v2236 = vshrl.u32 %v2206, 16
      %v2238 = vrot.slane %v2236, 7
      %v2239 = vshll.u32 %v2206, 16
      %v2241 = vor.u32 %v2238, %v2239
      %v2243 = vshrl.u32 %v2207, 16
      %v2245 = vrot.slane %v2243, 7
      %v2246 = vshll.u32 %v2207, 16
      %v2248 = vor.u32 %v2245, %v2246
      %v2250 = vshrl.u32 %v2208, 16
      %v2252 = vrot.slane %v2250, 7
      %v2253 = vshll.u32 %v2208, 16
      %v2255 = vor.u32 %v2252, %v2253
      %v2257 = vshrl.u32 %v2209, 16
      %v2259 = vrot.slane %v2257, 7
      %v2260 = vshll.u32 %v2209, 16
      %v2262 = vor.u32 %v2259, %v2260
      %v2264 = vshrl.u32 %v2210, 16
      %v2266 = vrot.slane %v2264, 7
      %v2267 = vshll.u32 %v2210, 16
      %v2269 = vor.u32 %v2266, %v2267
      %v2271 = vshrl.u32 %v2211, 16
      %v2273 = vrot.slane %v2271, 7
      %v2274 = vshll.u32 %v2211, 16
      %v2276 = vor.u32 %v2273, %v2274
      %v2278 = vshrl.u32 %v2212, 16
      %v2280 = vrot.slane %v2278, 7
      %v2281 = vshll.u32 %v2212, 16
      %v2283 = vor.u32 %v2280, %v2281
      %v2285 = vshrl.u32 %v2213, 16
      %v2287 = vrot.slane %v2285, 7
      %v2288 = vshll.u32 %v2213, 16
      %v2290 = vor.u32 %v2287, %v2288
      %v2292 = vshrl.u32 %v2214, 16
      %v2294 = vrot.slane %v2292, 7
      %v2295 = vshll.u32 %v2214, 16
      %v2297 = vor.u32 %v2294, %v2295
      %v2299 = vshrl.u32 %v2215, 16
      %v2301 = vrot.slane %v2299, 7
      %v2302 = vshll.u32 %v2215, 16
      %v2304 = vor.u32 %v2301, %v2302
      %v2306 = vshrl.u32 %v2216, 16
      %v2308 = vrot.slane %v2306, 7
      %v2309 = vshll.u32 %v2216, 16
      %v2311 = vor.u32 %v2308, %v2309
      %v2313 = vshrl.u32 %v2217, 16
      %v2315 = vrot.slane %v2313, 7
      %v2316 = vshll.u32 %v2217, 16
      %v2318 = vor.u32 %v2315, %v2316
      %v2320 = vshrl.u32 %v2218, 16
      %v2322 = vrot.slane %v2320, 7
      %v2323 = vshll.u32 %v2218, 16
      %v2325 = vor.u32 %v2322, %v2323
      %v2327 = vshrl.u32 %v2219, 16
      %v2329 = vrot.slane %v2327, 7
      %v2330 = vshll.u32 %v2219, 16
      %v2332 = vor.u32 %v2329, %v2330
      %v2334 = vshrl.u32 %v2220, 16
      %v2336 = vrot.slane %v2334, 7
      %v2337 = vshll.u32 %v2220, 16
      %v2339 = vor.u32 %v2336, %v2337
      %vm2374 = vcmask 1040384
      %vm2375 = vsmask.f32 256
      %vm2376 = vmand %vm2374, %vm2375
      %v2377 = vsel %vm2376, 0, %v2227
      %v2378 = vsel %vm2376, 0, %v2234
      %v2379 = vsel %vm2376, 0, %v2241
      %v2380 = vsel %vm2376, 0, %v2248
      %v2381 = vsel %vm2376, 0, %v2255
      %v2382 = vsel %vm2376, 0, %v2262
      %v2383 = vsel %vm2376, 0, %v2269
      %v2384 = vsel %vm2376, 0, %v2276
      %v2385 = vsel %vm2376, 0, %v2283
      %v2386 = vsel %vm2376, 0, %v2290
      %v2387 = vsel %vm2376, 0, %v2297
      %v2388 = vsel %vm2376, 0, %v2304
      %v2389 = vsel %vm2376, 0, %v2311
      %v2390 = vsel %vm2376, 0, %v2318
      %v2391 = vsel %vm2376, 0, %v2325
      %v2392 = vsel %vm2376, 0, %v2332
      %v2393 = vsel %vm2376, 0, %v2339
      %v2394 = vsel %vm2376, %v2224, 0
      %v2395 = vsel %vm2376, %v2231, 0
      %v2396 = vsel %vm2376, %v2238, 0
      %v2397 = vsel %vm2376, %v2245, 0
      %v2398 = vsel %vm2376, %v2252, 0
      %v2399 = vsel %vm2376, %v2259, 0
      %v2400 = vsel %vm2376, %v2266, 0
      %v2401 = vsel %vm2376, %v2273, 0
      %v2402 = vsel %vm2376, %v2280, 0
      %v2403 = vsel %vm2376, %v2287, 0
      %v2404 = vsel %vm2376, %v2294, 0
      %v2405 = vsel %vm2376, %v2301, 0
      %v2406 = vsel %vm2376, %v2308, 0
      %v2407 = vsel %vm2376, %v2315, 0
      %v2408 = vsel %vm2376, %v2322, 0
      %v2409 = vsel %vm2376, %v2329, 0
      %v2410 = vsel %vm2376, %v2336, 0
      %vm2411 = vsmask.f32 7424
      %v2413 = vshrl.u32 %v2377, 16
      %v2415 = vshll.u32 %v2377, 16
      %v2417 = vrot.slane %v2415, 1
      %v2418 = vor.u32 %v2413, %v2417
      %v2420 = vshll.u32 %v2394, 16
      %v2422 = vrot.slane %v2420, 1
      %v2423 = vsel %vm2411, %v2418, %v2422
      %v2425 = vshrl.u32 %v2378, 16
      %v2427 = vshll.u32 %v2378, 16
      %v2429 = vrot.slane %v2427, 1
      %v2430 = vor.u32 %v2425, %v2429
      %v2432 = vshll.u32 %v2395, 16
      %v2434 = vrot.slane %v2432, 1
      %v2435 = vsel %vm2411, %v2430, %v2434
      %v2437 = vshrl.u32 %v2379, 16
      %v2439 = vshll.u32 %v2379, 16
      %v2441 = vrot.slane %v2439, 1
      %v2442 = vor.u32 %v2437, %v2441
      %v2444 = vshll.u32 %v2396, 16
      %v2446 = vrot.slane %v2444, 1
      %v2447 = vsel %vm2411, %v2442, %v2446
      %v2449 = vshrl.u32 %v2380, 16
      %v2451 = vshll.u32 %v2380, 16
      %v2453 = vrot.slane %v2451, 1
      %v2454 = vor.u32 %v2449, %v2453
      %v2456 = vshll.u32 %v2397, 16
      %v2458 = vrot.slane %v2456, 1
      %v2459 = vsel %vm2411, %v2454, %v2458
      %v2461 = vshrl.u32 %v2381, 16
      %v2463 = vshll.u32 %v2381, 16
      %v2465 = vrot.slane %v2463, 1
      %v2466 = vor.u32 %v2461, %v2465
      %v2468 = vshll.u32 %v2398, 16
      %v2470 = vrot.slane %v2468, 1
      %v2471 = vsel %vm2411, %v2466, %v2470
      %v2473 = vshrl.u32 %v2382, 16
      %v2475 = vshll.u32 %v2382, 16
      %v2477 = vrot.slane %v2475, 1
      %v2478 = vor.u32 %v2473, %v2477
      %v2480 = vshll.u32 %v2399, 16
      %v2482 = vrot.slane %v2480, 1
      %v2483 = vsel %vm2411, %v2478, %v2482
      %v2485 = vshrl.u32 %v2383, 16
      %v2487 = vshll.u32 %v2383, 16
      %v2489 = vrot.slane %v2487, 1
      %v2490 = vor.u32 %v2485, %v2489
      %v2492 = vshll.u32 %v2400, 16
      %v2494 = vrot.slane %v2492, 1
      %v2495 = vsel %vm2411, %v2490, %v2494
      %v2497 = vshrl.u32 %v2384, 16
      %v2499 = vshll.u32 %v2384, 16
      %v2501 = vrot.slane %v2499, 1
      %v2502 = vor.u32 %v2497, %v2501
      %v2504 = vshll.u32 %v2401, 16
      %v2506 = vrot.slane %v2504, 1
      %v2507 = vsel %vm2411, %v2502, %v2506
      %v2509 = vshrl.u32 %v2385, 16
      %v2511 = vshll.u32 %v2385, 16
      %v2513 = vrot.slane %v2511, 1
      %v2514 = vor.u32 %v2509, %v2513
      %v2516 = vshll.u32 %v2402, 16
      %v2518 = vrot.slane %v2516, 1
      %v2519 = vsel %vm2411, %v2514, %v2518
      %v2521 = vshrl.u32 %v2386, 16
      %v2523 = vshll.u32 %v2386, 16
      %v2525 = vrot.slane %v2523, 1
      %v2526 = vor.u32 %v2521, %v2525
      %v2528 = vshll.u32 %v2403, 16
      %v2530 = vrot.slane %v2528, 1
      %v2531 = vsel %vm2411, %v2526, %v2530
      %v2533 = vshrl.u32 %v2387, 16
      %v2535 = vshll.u32 %v2387, 16
      %v2537 = vrot.slane %v2535, 1
      %v2538 = vor.u32 %v2533, %v2537
      %v2540 = vshll.u32 %v2404, 16
      %v2542 = vrot.slane %v2540, 1
      %v2543 = vsel %vm2411, %v2538, %v2542
      %v2545 = vshrl.u32 %v2388, 16
      %v2547 = vshll.u32 %v2388, 16
      %v2549 = vrot.slane %v2547, 1
      %v2550 = vor.u32 %v2545, %v2549
      %v2552 = vshll.u32 %v2405, 16
      %v2554 = vrot.slane %v2552, 1
      %v2555 = vsel %vm2411, %v2550, %v2554
      %v2557 = vshrl.u32 %v2389, 16
      %v2559 = vshll.u32 %v2389, 16
      %v2561 = vrot.slane %v2559, 1
      %v2562 = vor.u32 %v2557, %v2561
      %v2564 = vshll.u32 %v2406, 16
      %v2566 = vrot.slane %v2564, 1
      %v2567 = vsel %vm2411, %v2562, %v2566
      %v2569 = vshrl.u32 %v2390, 16
      %v2571 = vshll.u32 %v2390, 16
      %v2573 = vrot.slane %v2571, 1
      %v2574 = vor.u32 %v2569, %v2573
      %v2576 = vshll.u32 %v2407, 16
      %v2578 = vrot.slane %v2576, 1
      %v2579 = vsel %vm2411, %v2574, %v2578
      %v2581 = vshrl.u32 %v2391, 16
      %v2583 = vshll.u32 %v2391, 16
      %v2585 = vrot.slane %v2583, 1
      %v2586 = vor.u32 %v2581, %v2585
      %v2588 = vshll.u32 %v2408, 16
      %v2590 = vrot.slane %v2588, 1
      %v2591 = vsel %vm2411, %v2586, %v2590
      %v2593 = vshrl.u32 %v2392, 16
      %v2595 = vshll.u32 %v2392, 16
      %v2597 = vrot.slane %v2595, 1
      %v2598 = vor.u32 %v2593, %v2597
      %v2600 = vshll.u32 %v2409, 16
      %v2602 = vrot.slane %v2600, 1
      %v2603 = vsel %vm2411, %v2598, %v2602
      %2604 = vrot.lane.b32.xlu0 %v2423, 4
      %v2605 = vpop.permute.xlu0 %2604
      %2606 = vrot.lane.b32.xlu0 %v2435, 4
      %v2607 = vpop.permute.xlu0 %2606
      %2608 = vrot.lane.b32.xlu0 %v2447, 4
      %v2609 = vpop.permute.xlu0 %2608
      %2610 = vrot.lane.b32.xlu0 %v2459, 4
      %v2611 = vpop.permute.xlu0 %2610
      %2612 = vrot.lane.b32.xlu0 %v2471, 4
      %v2613 = vpop.permute.xlu0 %2612
      %2614 = vrot.lane.b32.xlu0 %v2483, 4
      %v2615 = vpop.permute.xlu0 %2614
      %2616 = vrot.lane.b32.xlu0 %v2495, 4
      %v2617 = vpop.permute.xlu0 %2616
      %2618 = vrot.lane.b32.xlu0 %v2507, 4
      %v2619 = vpop.permute.xlu0 %2618
      %2620 = vrot.lane.b32.xlu0 %v2519, 4
      %v2621 = vpop.permute.xlu0 %2620
      %2622 = vrot.lane.b32.xlu0 %v2531, 4
      %v2623 = vpop.permute.xlu0 %2622
      %2624 = vrot.lane.b32.xlu0 %v2543, 4
      %v2625 = vpop.permute.xlu0 %2624
      %2626 = vrot.lane.b32.xlu0 %v2555, 4
      %v2627 = vpop.permute.xlu0 %2626
      %2628 = vrot.lane.b32.xlu0 %v2567, 4
      %v2629 = vpop.permute.xlu0 %2628
      %2630 = vrot.lane.b32.xlu0 %v2579, 4
      %v2631 = vpop.permute.xlu0 %2630
      %2632 = vrot.lane.b32.xlu0 %v2591, 4
      %v2633 = vpop.permute.xlu0 %2632
      %2634 = vrot.lane.b32.xlu0 %v2603, 4
      %v2635 = vpop.permute.xlu0 %2634
      %vm2668 = vcmask 1046528
      %v2669 = vrot.slane %v2377, 1
      %v2670 = vrot.slane %v2394, 1
      %v2671 = vsel %vm2668, %v2669, %v2670
      %v2672 = vrot.slane %v2378, 1
      %v2673 = vrot.slane %v2395, 1
      %v2674 = vsel %vm2668, %v2672, %v2673
      %v2675 = vrot.slane %v2379, 1
      %v2676 = vrot.slane %v2396, 1
      %v2677 = vsel %vm2668, %v2675, %v2676
      %v2678 = vrot.slane %v2380, 1
      %v2679 = vrot.slane %v2397, 1
      %v2680 = vsel %vm2668, %v2678, %v2679
      %v2681 = vrot.slane %v2381, 1
      %v2682 = vrot.slane %v2398, 1
      %v2683 = vsel %vm2668, %v2681, %v2682
      %v2684 = vrot.slane %v2382, 1
      %v2685 = vrot.slane %v2399, 1
      %v2686 = vsel %vm2668, %v2684, %v2685
      %v2687 = vrot.slane %v2383, 1
      %v2688 = vrot.slane %v2400, 1
      %v2689 = vsel %vm2668, %v2687, %v2688
      %v2690 = vrot.slane %v2384, 1
      %v2691 = vrot.slane %v2401, 1
      %v2692 = vsel %vm2668, %v2690, %v2691
      %v2693 = vrot.slane %v2385, 1
      %v2694 = vrot.slane %v2402, 1
      %v2695 = vsel %vm2668, %v2693, %v2694
      %v2696 = vrot.slane %v2386, 1
      %v2697 = vrot.slane %v2403, 1
      %v2698 = vsel %vm2668, %v2696, %v2697
      %v2699 = vrot.slane %v2387, 1
      %v2700 = vrot.slane %v2404, 1
      %v2701 = vsel %vm2668, %v2699, %v2700
      %v2702 = vrot.slane %v2388, 1
      %v2703 = vrot.slane %v2405, 1
      %v2704 = vsel %vm2668, %v2702, %v2703
      %v2705 = vrot.slane %v2389, 1
      %v2706 = vrot.slane %v2406, 1
      %v2707 = vsel %vm2668, %v2705, %v2706
      %v2708 = vrot.slane %v2390, 1
      %v2709 = vrot.slane %v2407, 1
      %v2710 = vsel %vm2668, %v2708, %v2709
      %v2711 = vrot.slane %v2391, 1
      %v2712 = vrot.slane %v2408, 1
      %v2713 = vsel %vm2668, %v2711, %v2712
      %v2714 = vrot.slane %v2392, 1
      %v2715 = vrot.slane %v2409, 1
      %v2716 = vsel %vm2668, %v2714, %v2715
      %2717 = vrot.lane.b32.xlu0 %v2671, 8
      %v2718 = vpop.permute.xlu0 %2717
      %2719 = vrot.lane.b32.xlu0 %v2674, 8
      %v2720 = vpop.permute.xlu0 %2719
      %2721 = vrot.lane.b32.xlu0 %v2677, 8
      %v2722 = vpop.permute.xlu0 %2721
      %2723 = vrot.lane.b32.xlu0 %v2680, 8
      %v2724 = vpop.permute.xlu0 %2723
      %2725 = vrot.lane.b32.xlu0 %v2683, 8
      %v2726 = vpop.permute.xlu0 %2725
      %2727 = vrot.lane.b32.xlu0 %v2686, 8
      %v2728 = vpop.permute.xlu0 %2727
      %2729 = vrot.lane.b32.xlu0 %v2689, 8
      %v2730 = vpop.permute.xlu0 %2729
      %2731 = vrot.lane.b32.xlu0 %v2692, 8
      %v2732 = vpop.permute.xlu0 %2731
      %2733 = vrot.lane.b32.xlu0 %v2695, 8
      %v2734 = vpop.permute.xlu0 %2733
      %2735 = vrot.lane.b32.xlu0 %v2698, 8
      %v2736 = vpop.permute.xlu0 %2735
      %2737 = vrot.lane.b32.xlu0 %v2701, 8
      %v2738 = vpop.permute.xlu0 %2737
      %2739 = vrot.lane.b32.xlu0 %v2704, 8
      %v2740 = vpop.permute.xlu0 %2739
      %2741 = vrot.lane.b32.xlu0 %v2707, 8
      %v2742 = vpop.permute.xlu0 %2741
      %2743 = vrot.lane.b32.xlu0 %v2710, 8
      %v2744 = vpop.permute.xlu0 %2743
      %2745 = vrot.lane.b32.xlu0 %v2713, 8
      %v2746 = vpop.permute.xlu0 %2745
      %2747 = vrot.lane.b32.xlu0 %v2716, 8
      %v2748 = vpop.permute.xlu0 %2747
      %2750 = vrot.lane.b32.xlu0 %v2378, 12
      %v2751 = vpop.permute.xlu0 %2750
      %2752 = vrot.lane.b32.xlu0 %v2379, 12
      %v2753 = vpop.permute.xlu0 %2752
      %2754 = vrot.lane.b32.xlu0 %v2380, 12
      %v2755 = vpop.permute.xlu0 %2754
      %2756 = vrot.lane.b32.xlu0 %v2381, 12
      %v2757 = vpop.permute.xlu0 %2756
      %2758 = vrot.lane.b32.xlu0 %v2382, 12
      %v2759 = vpop.permute.xlu0 %2758
      %2760 = vrot.lane.b32.xlu0 %v2383, 12
      %v2761 = vpop.permute.xlu0 %2760
      %2762 = vrot.lane.b32.xlu0 %v2384, 12
      %v2763 = vpop.permute.xlu0 %2762
      %2764 = vrot.lane.b32.xlu0 %v2385, 12
      %v2765 = vpop.permute.xlu0 %2764
      %2766 = vrot.lane.b32.xlu0 %v2386, 12
      %v2767 = vpop.permute.xlu0 %2766
      %2768 = vrot.lane.b32.xlu0 %v2387, 12
      %v2769 = vpop.permute.xlu0 %2768
      %2770 = vrot.lane.b32.xlu0 %v2388, 12
      %v2771 = vpop.permute.xlu0 %2770
      %2772 = vrot.lane.b32.xlu0 %v2389, 12
      %v2773 = vpop.permute.xlu0 %2772
      %2774 = vrot.lane.b32.xlu0 %v2390, 12
      %v2775 = vpop.permute.xlu0 %2774
      %2776 = vrot.lane.b32.xlu0 %v2391, 12
      %v2777 = vpop.permute.xlu0 %2776
      %2778 = vrot.lane.b32.xlu0 %v2392, 12
      %v2779 = vpop.permute.xlu0 %2778
      %2780 = vrot.lane.b32.xlu0 %v2393, 12
      %v2781 = vpop.permute.xlu0 %2780
      %v2783 = vshrl.u32 %v2393, 16
      %v2785 = vshll.u32 %v2393, 16
      %v2787 = vrot.slane %v2785, 1
      %v2788 = vor.u32 %v2783, %v2787
      %v2790 = vshll.u32 %v2410, 16
      %v2792 = vrot.slane %v2790, 1
      %v2793 = vsel %vm2411, %v2788, %v2792
      %2794 = vrot.lane.b32.xlu0 %v2435, 16
      %v2795 = vpop.permute.xlu0 %2794
      %2796 = vrot.lane.b32.xlu0 %v2447, 16
      %v2797 = vpop.permute.xlu0 %2796
      %2798 = vrot.lane.b32.xlu0 %v2459, 16
      %v2799 = vpop.permute.xlu0 %2798
      %2800 = vrot.lane.b32.xlu0 %v2471, 16
      %v2801 = vpop.permute.xlu0 %2800
      %2802 = vrot.lane.b32.xlu0 %v2483, 16
      %v2803 = vpop.permute.xlu0 %2802
      %2804 = vrot.lane.b32.xlu0 %v2495, 16
      %v2805 = vpop.permute.xlu0 %2804
      %2806 = vrot.lane.b32.xlu0 %v2507, 16
      %v2807 = vpop.permute.xlu0 %2806
      %2808 = vrot.lane.b32.xlu0 %v2519, 16
      %v2809 = vpop.permute.xlu0 %2808
      %2810 = vrot.lane.b32.xlu0 %v2531, 16
      %v2811 = vpop.permute.xlu0 %2810
      %2812 = vrot.lane.b32.xlu0 %v2543, 16
      %v2813 = vpop.permute.xlu0 %2812
      %2814 = vrot.lane.b32.xlu0 %v2555, 16
      %v2815 = vpop.permute.xlu0 %2814
      %2816 = vrot.lane.b32.xlu0 %v2567, 16
      %v2817 = vpop.permute.xlu0 %2816
      %2818 = vrot.lane.b32.xlu0 %v2579, 16
      %v2819 = vpop.permute.xlu0 %2818
      %2820 = vrot.lane.b32.xlu0 %v2591, 16
      %v2821 = vpop.permute.xlu0 %2820
      %2822 = vrot.lane.b32.xlu0 %v2603, 16
      %v2823 = vpop.permute.xlu0 %2822
      %2824 = vrot.lane.b32.xlu0 %v2793, 16
      %v2825 = vpop.permute.xlu0 %2824
      %v2827 = vrot.slane %v2393, 1
      %v2828 = vrot.slane %v2410, 1
      %v2829 = vsel %vm2668, %v2827, %v2828
      %2830 = vrot.lane.b32.xlu0 %v2674, 20
      %v2831 = vpop.permute.xlu0 %2830
      %2832 = vrot.lane.b32.xlu0 %v2677, 20
      %v2833 = vpop.permute.xlu0 %2832
      %2834 = vrot.lane.b32.xlu0 %v2680, 20
      %v2835 = vpop.permute.xlu0 %2834
      %2836 = vrot.lane.b32.xlu0 %v2683, 20
      %v2837 = vpop.permute.xlu0 %2836
      %2838 = vrot.lane.b32.xlu0 %v2686, 20
      %v2839 = vpop.permute.xlu0 %2838
      %2840 = vrot.lane.b32.xlu0 %v2689, 20
      %v2841 = vpop.permute.xlu0 %2840
      %2842 = vrot.lane.b32.xlu0 %v2692, 20
      %v2843 = vpop.permute.xlu0 %2842
      %2844 = vrot.lane.b32.xlu0 %v2695, 20
      %v2845 = vpop.permute.xlu0 %2844
      %2846 = vrot.lane.b32.xlu0 %v2698, 20
      %v2847 = vpop.permute.xlu0 %2846
      %2848 = vrot.lane.b32.xlu0 %v2701, 20
      %v2849 = vpop.permute.xlu0 %2848
      %2850 = vrot.lane.b32.xlu0 %v2704, 20
      %v2851 = vpop.permute.xlu0 %2850
      %2852 = vrot.lane.b32.xlu0 %v2707, 20
      %v2853 = vpop.permute.xlu0 %2852
      %2854 = vrot.lane.b32.xlu0 %v2710, 20
      %v2855 = vpop.permute.xlu0 %2854
      %2856 = vrot.lane.b32.xlu0 %v2713, 20
      %v2857 = vpop.permute.xlu0 %2856
      %2858 = vrot.lane.b32.xlu0 %v2716, 20
      %v2859 = vpop.permute.xlu0 %2858
      %2860 = vrot.lane.b32.xlu0 %v2829, 20
      %v2861 = vpop.permute.xlu0 %2860
      %2862 = vrot.lane.b32.xlu0 %v2379, 24
      %v2863 = vpop.permute.xlu0 %2862
      %2864 = vrot.lane.b32.xlu0 %v2380, 24
      %v2865 = vpop.permute.xlu0 %2864
      %2866 = vrot.lane.b32.xlu0 %v2381, 24
      %v2867 = vpop.permute.xlu0 %2866
      %2868 = vrot.lane.b32.xlu0 %v2382, 24
      %v2869 = vpop.permute.xlu0 %2868
      %2870 = vrot.lane.b32.xlu0 %v2383, 24
      %v2871 = vpop.permute.xlu0 %2870
      %2872 = vrot.lane.b32.xlu0 %v2384, 24
      %v2873 = vpop.permute.xlu0 %2872
      %2874 = vrot.lane.b32.xlu0 %v2385, 24
      %v2875 = vpop.permute.xlu0 %2874
      %2876 = vrot.lane.b32.xlu0 %v2386, 24
      %v2877 = vpop.permute.xlu0 %2876
      %2878 = vrot.lane.b32.xlu0 %v2387, 24
      %v2879 = vpop.permute.xlu0 %2878
      %2880 = vrot.lane.b32.xlu0 %v2388, 24
      %v2881 = vpop.permute.xlu0 %2880
      %2882 = vrot.lane.b32.xlu0 %v2389, 24
      %v2883 = vpop.permute.xlu0 %2882
      %2884 = vrot.lane.b32.xlu0 %v2390, 24
      %v2885 = vpop.permute.xlu0 %2884
      %2886 = vrot.lane.b32.xlu0 %v2391, 24
      %v2887 = vpop.permute.xlu0 %2886
      %2888 = vrot.lane.b32.xlu0 %v2392, 24
      %v2889 = vpop.permute.xlu0 %2888
      %2890 = vrot.lane.b32.xlu0 %v2393, 24
      %v2891 = vpop.permute.xlu0 %2890
      %2892 = vrot.lane.b32.xlu0 %v2377, 24
      %v2893 = vpop.permute.xlu0 %2892
      %2894 = vrot.lane.b32.xlu0 %v2447, 28
      %v2895 = vpop.permute.xlu0 %2894
      %2896 = vrot.lane.b32.xlu0 %v2459, 28
      %v2897 = vpop.permute.xlu0 %2896
      %2898 = vrot.lane.b32.xlu0 %v2471, 28
      %v2899 = vpop.permute.xlu0 %2898
      %2900 = vrot.lane.b32.xlu0 %v2483, 28
      %v2901 = vpop.permute.xlu0 %2900
      %2902 = vrot.lane.b32.xlu0 %v2495, 28
      %v2903 = vpop.permute.xlu0 %2902
      %2904 = vrot.lane.b32.xlu0 %v2507, 28
      %v2905 = vpop.permute.xlu0 %2904
      %2906 = vrot.lane.b32.xlu0 %v2519, 28
      %v2907 = vpop.permute.xlu0 %2906
      %2908 = vrot.lane.b32.xlu0 %v2531, 28
      %v2909 = vpop.permute.xlu0 %2908
      %2910 = vrot.lane.b32.xlu0 %v2543, 28
      %v2911 = vpop.permute.xlu0 %2910
      %2912 = vrot.lane.b32.xlu0 %v2555, 28
      %v2913 = vpop.permute.xlu0 %2912
      %2914 = vrot.lane.b32.xlu0 %v2567, 28
      %v2915 = vpop.permute.xlu0 %2914
      %2916 = vrot.lane.b32.xlu0 %v2579, 28
      %v2917 = vpop.permute.xlu0 %2916
      %2918 = vrot.lane.b32.xlu0 %v2591, 28
      %v2919 = vpop.permute.xlu0 %2918
      %2920 = vrot.lane.b32.xlu0 %v2603, 28
      %v2921 = vpop.permute.xlu0 %2920
      %2922 = vrot.lane.b32.xlu0 %v2793, 28
      %v2923 = vpop.permute.xlu0 %2922
      %2924 = vrot.lane.b32.xlu0 %v2423, 28
      %v2925 = vpop.permute.xlu0 %2924
      %2926 = vrot.lane.b32.xlu0 %v2677, 32
      %v2927 = vpop.permute.xlu0 %2926
      %2928 = vrot.lane.b32.xlu0 %v2680, 32
      %v2929 = vpop.permute.xlu0 %2928
      %2930 = vrot.lane.b32.xlu0 %v2683, 32
      %v2931 = vpop.permute.xlu0 %2930
      %2932 = vrot.lane.b32.xlu0 %v2686, 32
      %v2933 = vpop.permute.xlu0 %2932
      %2934 = vrot.lane.b32.xlu0 %v2689, 32
      %v2935 = vpop.permute.xlu0 %2934
      %2936 = vrot.lane.b32.xlu0 %v2692, 32
      %v2937 = vpop.permute.xlu0 %2936
      %2938 = vrot.lane.b32.xlu0 %v2695, 32
      %v2939 = vpop.permute.xlu0 %2938
      %2940 = vrot.lane.b32.xlu0 %v2698, 32
      %v2941 = vpop.permute.xlu0 %2940
      %2942 = vrot.lane.b32.xlu0 %v2701, 32
      %v2943 = vpop.permute.xlu0 %2942
      %2944 = vrot.lane.b32.xlu0 %v2704, 32
      %v2945 = vpop.permute.xlu0 %2944
      %2946 = vrot.lane.b32.xlu0 %v2707, 32
      %v2947 = vpop.permute.xlu0 %2946
      %2948 = vrot.lane.b32.xlu0 %v2710, 32
      %v2949 = vpop.permute.xlu0 %2948
      %2950 = vrot.lane.b32.xlu0 %v2713, 32
      %v2951 = vpop.permute.xlu0 %2950
      %2952 = vrot.lane.b32.xlu0 %v2716, 32
      %v2953 = vpop.permute.xlu0 %2952
      %2954 = vrot.lane.b32.xlu0 %v2829, 32
      %v2955 = vpop.permute.xlu0 %2954
      %2956 = vrot.lane.b32.xlu0 %v2671, 32
      %v2957 = vpop.permute.xlu0 %2956
      %v2959 = vsel %vm645, %v2377, %v2605
      %v2961 = vsel %vm645, %v2378, %v2607
      %v2963 = vsel %vm645, %v2379, %v2609
      %v2965 = vsel %vm645, %v2380, %v2611
      %v2967 = vsel %vm645, %v2381, %v2613
      %v2969 = vsel %vm645, %v2382, %v2615
      %v2971 = vsel %vm645, %v2383, %v2617
      %v2973 = vsel %vm645, %v2384, %v2619
      %v2975 = vsel %vm645, %v2385, %v2621
      %v2977 = vsel %vm645, %v2386, %v2623
      %v2979 = vsel %vm645, %v2387, %v2625
      %v2981 = vsel %vm645, %v2388, %v2627
      %v2983 = vsel %vm645, %v2389, %v2629
      %v2985 = vsel %vm645, %v2390, %v2631
      %v2987 = vsel %vm645, %v2391, %v2633
      %v2989 = vsel %vm645, %v2392, %v2635
      %v2991 = vsel %vm647, %v2959, %v2718
      %v2993 = vsel %vm647, %v2961, %v2720
      %v2995 = vsel %vm647, %v2963, %v2722
      %v2997 = vsel %vm647, %v2965, %v2724
      %v2999 = vsel %vm647, %v2967, %v2726
      %v3001 = vsel %vm647, %v2969, %v2728
      %v3003 = vsel %vm647, %v2971, %v2730
      %v3005 = vsel %vm647, %v2973, %v2732
      %v3007 = vsel %vm647, %v2975, %v2734
      %v3009 = vsel %vm647, %v2977, %v2736
      %v3011 = vsel %vm647, %v2979, %v2738
      %v3013 = vsel %vm647, %v2981, %v2740
      %v3015 = vsel %vm647, %v2983, %v2742
      %v3017 = vsel %vm647, %v2985, %v2744
      %v3019 = vsel %vm647, %v2987, %v2746
      %v3021 = vsel %vm647, %v2989, %v2748
      %v3023 = vsel %vm649, %v2991, %v2751
      %v3025 = vsel %vm649, %v2993, %v2753
      %v3027 = vsel %vm649, %v2995, %v2755
      %v3029 = vsel %vm649, %v2997, %v2757
      %v3031 = vsel %vm649, %v2999, %v2759
      %v3033 = vsel %vm649, %v3001, %v2761
      %v3035 = vsel %vm649, %v3003, %v2763
      %v3037 = vsel %vm649, %v3005, %v2765
      %v3039 = vsel %vm649, %v3007, %v2767
      %v3041 = vsel %vm649, %v3009, %v2769
      %v3043 = vsel %vm649, %v3011, %v2771
      %v3045 = vsel %vm649, %v3013, %v2773
      %v3047 = vsel %vm649, %v3015, %v2775
      %v3049 = vsel %vm649, %v3017, %v2777
      %v3051 = vsel %vm649, %v3019, %v2779
      %v3053 = vsel %vm649, %v3021, %v2781
      %v3055 = vsel %vm546, %v3023, %v2795
      %v3057 = vsel %vm546, %v3025, %v2797
      %v3059 = vsel %vm546, %v3027, %v2799
      %v3061 = vsel %vm546, %v3029, %v2801
      %v3063 = vsel %vm546, %v3031, %v2803
      %v3065 = vsel %vm546, %v3033, %v2805
      %v3067 = vsel %vm546, %v3035, %v2807
      %v3069 = vsel %vm546, %v3037, %v2809
      %v3071 = vsel %vm546, %v3039, %v2811
      %v3073 = vsel %vm546, %v3041, %v2813
      %v3075 = vsel %vm546, %v3043, %v2815
      %v3077 = vsel %vm546, %v3045, %v2817
      %v3079 = vsel %vm546, %v3047, %v2819
      %v3081 = vsel %vm546, %v3049, %v2821
      %v3083 = vsel %vm546, %v3051, %v2823
      %v3085 = vsel %vm546, %v3053, %v2825
      %vm3086 = vcmask 162816
      %v3088 = vsel %vm3086, %v3055, %v2831
      %v3090 = vsel %vm3086, %v3057, %v2833
      %v3092 = vsel %vm3086, %v3059, %v2835
      %v3094 = vsel %vm3086, %v3061, %v2837
      %v3096 = vsel %vm3086, %v3063, %v2839
      %v3098 = vsel %vm3086, %v3065, %v2841
      %v3100 = vsel %vm3086, %v3067, %v2843
      %v3102 = vsel %vm3086, %v3069, %v2845
      %v3104 = vsel %vm3086, %v3071, %v2847
      %v3106 = vsel %vm3086, %v3073, %v2849
      %v3108 = vsel %vm3086, %v3075, %v2851
      %v3110 = vsel %vm3086, %v3077, %v2853
      %v3112 = vsel %vm3086, %v3079, %v2855
      %v3114 = vsel %vm3086, %v3081, %v2857
      %v3116 = vsel %vm3086, %v3083, %v2859
      %v3118 = vsel %vm3086, %v3085, %v2861
      %vm3119 = vcmask 195584
      %v3121 = vsel %vm3119, %v3088, %v2863
      %v3123 = vsel %vm3119, %v3090, %v2865
      %v3125 = vsel %vm3119, %v3092, %v2867
      %v3127 = vsel %vm3119, %v3094, %v2869
      %v3129 = vsel %vm3119, %v3096, %v2871
      %v3131 = vsel %vm3119, %v3098, %v2873
      %v3133 = vsel %vm3119, %v3100, %v2875
      %v3135 = vsel %vm3119, %v3102, %v2877
      %v3137 = vsel %vm3119, %v3104, %v2879
      %v3139 = vsel %vm3119, %v3106, %v2881
      %v3141 = vsel %vm3119, %v3108, %v2883
      %v3143 = vsel %vm3119, %v3110, %v2885
      %v3145 = vsel %vm3119, %v3112, %v2887
      %v3147 = vsel %vm3119, %v3114, %v2889
      %v3149 = vsel %vm3119, %v3116, %v2891
      %v3151 = vsel %vm3119, %v3118, %v2893
      %vm3152 = vcmask 228352
      %v3154 = vsel %vm3152, %v3121, %v2895
      %v3156 = vsel %vm3152, %v3123, %v2897
      %v3158 = vsel %vm3152, %v3125, %v2899
      %v3160 = vsel %vm3152, %v3127, %v2901
      %v3162 = vsel %vm3152, %v3129, %v2903
      %v3164 = vsel %vm3152, %v3131, %v2905
      %v3166 = vsel %vm3152, %v3133, %v2907
      %v3168 = vsel %vm3152, %v3135, %v2909
      %v3170 = vsel %vm3152, %v3137, %v2911
      %v3172 = vsel %vm3152, %v3139, %v2913
      %v3174 = vsel %vm3152, %v3141, %v2915
      %v3176 = vsel %vm3152, %v3143, %v2917
      %v3178 = vsel %vm3152, %v3145, %v2919
      %v3180 = vsel %vm3152, %v3147, %v2921
      %v3182 = vsel %vm3152, %v3149, %v2923
      %v3184 = vsel %vm3152, %v3151, %v2925
      %vm3185 = vcmask 261120
      %v3187 = vsel %vm3185, %v3154, %v2927
      %v3189 = vsel %vm3185, %v3156, %v2929
      %v3191 = vsel %vm3185, %v3158, %v2931
      %v3193 = vsel %vm3185, %v3160, %v2933
      %v3195 = vsel %vm3185, %v3162, %v2935
      %v3197 = vsel %vm3185, %v3164, %v2937
      %v3199 = vsel %vm3185, %v3166, %v2939
      %v3201 = vsel %vm3185, %v3168, %v2941
      %v3203 = vsel %vm3185, %v3170, %v2943
      %v3205 = vsel %vm3185, %v3172, %v2945
      %v3207 = vsel %vm3185, %v3174, %v2947
      %v3209 = vsel %vm3185, %v3176, %v2949
      %v3211 = vsel %vm3185, %v3178, %v2951
      %v3213 = vsel %vm3185, %v3180, %v2953
      %v3215 = vsel %vm3185, %v3182, %v2955
      %v3217 = vsel %vm3185, %v3184, %v2957
      %v3218 = vld [vmem:[%s5] sm:$0xf]
      %v3219 = vld [vmem:[%s5 + $0x4] sm:$0xf]
      %v3220 = vld [vmem:[%s5 + $0x8] sm:$0xf]
      %v3221 = vld [vmem:[%s5 + $0xc] sm:$0xf]
      %v3222 = vld [vmem:[%s5 + $0x10] sm:$0x3]
      %v3224 = vshrl.u32 %v2093, 16
      %v3226 = vrot.slane %v3224, 7
      %v3227 = vshll.u32 %v2093, 16
      %v3229 = vor.u32 %v3226, %v3227
      %v3231 = vshrl.u32 %v2094, 16
      %v3233 = vrot.slane %v3231, 7
      %v3234 = vshll.u32 %v2094, 16
      %v3236 = vor.u32 %v3233, %v3234
      %v3238 = vshrl.u32 %v2095, 16
      %v3240 = vrot.slane %v3238, 7
      %v3241 = vshll.u32 %v2095, 16
      %v3243 = vor.u32 %v3240, %v3241
      %v3245 = vshrl.u32 %v2096, 16
      %v3247 = vrot.slane %v3245, 7
      %v3248 = vshll.u32 %v2096, 16
      %v3250 = vor.u32 %v3247, %v3248
      %v3252 = vshrl.u32 %v2097, 16
      %v3254 = vrot.slane %v3252, 7
      %v3255 = vshll.u32 %v2097, 16
      %v3257 = vor.u32 %v3254, %v3255
      %v3259 = vshrl.u32 %v2098, 16
      %v3261 = vrot.slane %v3259, 7
      %v3262 = vshll.u32 %v2098, 16
      %v3264 = vor.u32 %v3261, %v3262
      %v3266 = vshrl.u32 %v2099, 16
      %v3268 = vrot.slane %v3266, 7
      %v3269 = vshll.u32 %v2099, 16
      %v3271 = vor.u32 %v3268, %v3269
      %v3273 = vshrl.u32 %v2100, 16
      %v3275 = vrot.slane %v3273, 7
      %v3276 = vshll.u32 %v2100, 16
      %v3278 = vor.u32 %v3275, %v3276
      %v3280 = vshrl.u32 %v2101, 16
      %v3282 = vrot.slane %v3280, 7
      %v3283 = vshll.u32 %v2101, 16
      %v3285 = vor.u32 %v3282, %v3283
      %v3287 = vshrl.u32 %v2102, 16
      %v3289 = vrot.slane %v3287, 7
      %v3290 = vshll.u32 %v2102, 16
      %v3292 = vor.u32 %v3289, %v3290
      %v3294 = vshrl.u32 %v2103, 16
      %v3296 = vrot.slane %v3294, 7
      %v3297 = vshll.u32 %v2103, 16
      %v3299 = vor.u32 %v3296, %v3297
      %v3301 = vshrl.u32 %v2104, 16
      %v3303 = vrot.slane %v3301, 7
      %v3304 = vshll.u32 %v2104, 16
      %v3306 = vor.u32 %v3303, %v3304
      %v3308 = vshrl.u32 %v2105, 16
      %v3310 = vrot.slane %v3308, 7
      %v3311 = vshll.u32 %v2105, 16
      %v3313 = vor.u32 %v3310, %v3311
      %v3315 = vshrl.u32 %v2106, 16
      %v3317 = vrot.slane %v3315, 7
      %v3318 = vshll.u32 %v2106, 16
      %v3320 = vor.u32 %v3317, %v3318
      %v3322 = vshrl.u32 %v2107, 16
      %v3324 = vrot.slane %v3322, 7
      %v3325 = vshll.u32 %v2107, 16
      %v3327 = vor.u32 %v3324, %v3325
      %v3329 = vshrl.u32 %v2108, 16
      %v3331 = vrot.slane %v3329, 7
      %v3332 = vshll.u32 %v2108, 16
      %v3334 = vor.u32 %v3331, %v3332
      %v3367 = vsel %vm2376, 0, %v3229
      %v3368 = vsel %vm2376, 0, %v3236
      %v3369 = vsel %vm2376, 0, %v3243
      %v3370 = vsel %vm2376, 0, %v3250
      %v3371 = vsel %vm2376, 0, %v3257
      %v3372 = vsel %vm2376, 0, %v3264
      %v3373 = vsel %vm2376, 0, %v3271
      %v3374 = vsel %vm2376, 0, %v3278
      %v3375 = vsel %vm2376, 0, %v3285
      %v3376 = vsel %vm2376, 0, %v3292
      %v3377 = vsel %vm2376, 0, %v3299
      %v3378 = vsel %vm2376, 0, %v3306
      %v3379 = vsel %vm2376, 0, %v3313
      %v3380 = vsel %vm2376, 0, %v3320
      %v3381 = vsel %vm2376, 0, %v3327
      %v3382 = vsel %vm2376, 0, %v3334
      %v3383 = vsel %vm2376, %v3226, 0
      %v3384 = vsel %vm2376, %v3233, 0
      %v3385 = vsel %vm2376, %v3240, 0
      %v3386 = vsel %vm2376, %v3247, 0
      %v3387 = vsel %vm2376, %v3254, 0
      %v3388 = vsel %vm2376, %v3261, 0
      %v3389 = vsel %vm2376, %v3268, 0
      %v3390 = vsel %vm2376, %v3275, 0
      %v3391 = vsel %vm2376, %v3282, 0
      %v3392 = vsel %vm2376, %v3289, 0
      %v3393 = vsel %vm2376, %v3296, 0
      %v3394 = vsel %vm2376, %v3303, 0
      %v3395 = vsel %vm2376, %v3310, 0
      %v3396 = vsel %vm2376, %v3317, 0
      %v3397 = vsel %vm2376, %v3324, 0
      %v3398 = vsel %vm2376, %v3331, 0
      %v3400 = vshrl.u32 %v3367, 16
      %v3402 = vshll.u32 %v3367, 16
      %v3404 = vrot.slane %v3402, 1
      %v3405 = vor.u32 %v3400, %v3404
      %v3407 = vshll.u32 %v3383, 16
      %v3409 = vrot.slane %v3407, 1
      %v3410 = vsel %vm2411, %v3405, %v3409
      %v3412 = vshrl.u32 %v3368, 16
      %v3414 = vshll.u32 %v3368, 16
      %v3416 = vrot.slane %v3414, 1
      %v3417 = vor.u32 %v3412, %v3416
      %v3419 = vshll.u32 %v3384, 16
      %v3421 = vrot.slane %v3419, 1
      %v3422 = vsel %vm2411, %v3417, %v3421
      %v3424 = vshrl.u32 %v3369, 16
      %v3426 = vshll.u32 %v3369, 16
      %v3428 = vrot.slane %v3426, 1
      %v3429 = vor.u32 %v3424, %v3428
      %v3431 = vshll.u32 %v3385, 16
      %v3433 = vrot.slane %v3431, 1
      %v3434 = vsel %vm2411, %v3429, %v3433
      %v3436 = vshrl.u32 %v3370, 16
      %v3438 = vshll.u32 %v3370, 16
      %v3440 = vrot.slane %v3438, 1
      %v3441 = vor.u32 %v3436, %v3440
      %v3443 = vshll.u32 %v3386, 16
      %v3445 = vrot.slane %v3443, 1
      %v3446 = vsel %vm2411, %v3441, %v3445
      %v3448 = vshrl.u32 %v3371, 16
      %v3450 = vshll.u32 %v3371, 16
      %v3452 = vrot.slane %v3450, 1
      %v3453 = vor.u32 %v3448, %v3452
      %v3455 = vshll.u32 %v3387, 16
      %v3457 = vrot.slane %v3455, 1
      %v3458 = vsel %vm2411, %v3453, %v3457
      %v3460 = vshrl.u32 %v3372, 16
      %v3462 = vshll.u32 %v3372, 16
      %v3464 = vrot.slane %v3462, 1
      %v3465 = vor.u32 %v3460, %v3464
      %v3467 = vshll.u32 %v3388, 16
      %v3469 = vrot.slane %v3467, 1
      %v3470 = vsel %vm2411, %v3465, %v3469
      %v3472 = vshrl.u32 %v3373, 16
      %v3474 = vshll.u32 %v3373, 16
      %v3476 = vrot.slane %v3474, 1
      %v3477 = vor.u32 %v3472, %v3476
      %v3479 = vshll.u32 %v3389, 16
      %v3481 = vrot.slane %v3479, 1
      %v3482 = vsel %vm2411, %v3477, %v3481
      %v3484 = vshrl.u32 %v3374, 16
      %v3486 = vshll.u32 %v3374, 16
      %v3488 = vrot.slane %v3486, 1
      %v3489 = vor.u32 %v3484, %v3488
      %v3491 = vshll.u32 %v3390, 16
      %v3493 = vrot.slane %v3491, 1
      %v3494 = vsel %vm2411, %v3489, %v3493
      %v3496 = vshrl.u32 %v3375, 16
      %v3498 = vshll.u32 %v3375, 16
      %v3500 = vrot.slane %v3498, 1
      %v3501 = vor.u32 %v3496, %v3500
      %v3503 = vshll.u32 %v3391, 16
      %v3505 = vrot.slane %v3503, 1
      %v3506 = vsel %vm2411, %v3501, %v3505
      %v3508 = vshrl.u32 %v3376, 16
      %v3510 = vshll.u32 %v3376, 16
      %v3512 = vrot.slane %v3510, 1
      %v3513 = vor.u32 %v3508, %v3512
      %v3515 = vshll.u32 %v3392, 16
      %v3517 = vrot.slane %v3515, 1
      %v3518 = vsel %vm2411, %v3513, %v3517
      %v3520 = vshrl.u32 %v3377, 16
      %v3522 = vshll.u32 %v3377, 16
      %v3524 = vrot.slane %v3522, 1
      %v3525 = vor.u32 %v3520, %v3524
      %v3527 = vshll.u32 %v3393, 16
      %v3529 = vrot.slane %v3527, 1
      %v3530 = vsel %vm2411, %v3525, %v3529
      %v3532 = vshrl.u32 %v3378, 16
      %v3534 = vshll.u32 %v3378, 16
      %v3536 = vrot.slane %v3534, 1
      %v3537 = vor.u32 %v3532, %v3536
      %v3539 = vshll.u32 %v3394, 16
      %v3541 = vrot.slane %v3539, 1
      %v3542 = vsel %vm2411, %v3537, %v3541
      %v3544 = vshrl.u32 %v3379, 16
      %v3546 = vshll.u32 %v3379, 16
      %v3548 = vrot.slane %v3546, 1
      %v3549 = vor.u32 %v3544, %v3548
      %v3551 = vshll.u32 %v3395, 16
      %v3553 = vrot.slane %v3551, 1
      %v3554 = vsel %vm2411, %v3549, %v3553
      %v3556 = vshrl.u32 %v3380, 16
      %v3558 = vshll.u32 %v3380, 16
      %v3560 = vrot.slane %v3558, 1
      %v3561 = vor.u32 %v3556, %v3560
      %v3563 = vshll.u32 %v3396, 16
      %v3565 = vrot.slane %v3563, 1
      %v3566 = vsel %vm2411, %v3561, %v3565
      %v3568 = vshrl.u32 %v3381, 16
      %v3570 = vshll.u32 %v3381, 16
      %v3572 = vrot.slane %v3570, 1
      %v3573 = vor.u32 %v3568, %v3572
      %v3575 = vshll.u32 %v3397, 16
      %v3577 = vrot.slane %v3575, 1
      %v3578 = vsel %vm2411, %v3573, %v3577
      %3579 = vrot.lane.b32.xlu0 %v3410, 4
      %v3580 = vpop.permute.xlu0 %3579
      %3581 = vrot.lane.b32.xlu0 %v3422, 4
      %v3582 = vpop.permute.xlu0 %3581
      %3583 = vrot.lane.b32.xlu0 %v3434, 4
      %v3584 = vpop.permute.xlu0 %3583
      %3585 = vrot.lane.b32.xlu0 %v3446, 4
      %v3586 = vpop.permute.xlu0 %3585
      %3587 = vrot.lane.b32.xlu0 %v3458, 4
      %v3588 = vpop.permute.xlu0 %3587
      %3589 = vrot.lane.b32.xlu0 %v3470, 4
      %v3590 = vpop.permute.xlu0 %3589
      %3591 = vrot.lane.b32.xlu0 %v3482, 4
      %v3592 = vpop.permute.xlu0 %3591
      %3593 = vrot.lane.b32.xlu0 %v3494, 4
      %v3594 = vpop.permute.xlu0 %3593
      %3595 = vrot.lane.b32.xlu0 %v3506, 4
      %v3596 = vpop.permute.xlu0 %3595
      %3597 = vrot.lane.b32.xlu0 %v3518, 4
      %v3598 = vpop.permute.xlu0 %3597
      %3599 = vrot.lane.b32.xlu0 %v3530, 4
      %v3600 = vpop.permute.xlu0 %3599
      %3601 = vrot.lane.b32.xlu0 %v3542, 4
      %v3602 = vpop.permute.xlu0 %3601
      %3603 = vrot.lane.b32.xlu0 %v3554, 4
      %v3604 = vpop.permute.xlu0 %3603
      %3605 = vrot.lane.b32.xlu0 %v3566, 4
      %v3606 = vpop.permute.xlu0 %3605
      %3607 = vrot.lane.b32.xlu0 %v3578, 4
      %v3608 = vpop.permute.xlu0 %3607
      %v3639 = vrot.slane %v3367, 1
      %v3640 = vrot.slane %v3383, 1
      %v3641 = vsel %vm2668, %v3639, %v3640
      %v3642 = vrot.slane %v3368, 1
      %v3643 = vrot.slane %v3384, 1
      %v3644 = vsel %vm2668, %v3642, %v3643
      %v3645 = vrot.slane %v3369, 1
      %v3646 = vrot.slane %v3385, 1
      %v3647 = vsel %vm2668, %v3645, %v3646
      %v3648 = vrot.slane %v3370, 1
      %v3649 = vrot.slane %v3386, 1
      %v3650 = vsel %vm2668, %v3648, %v3649
      %v3651 = vrot.slane %v3371, 1
      %v3652 = vrot.slane %v3387, 1
      %v3653 = vsel %vm2668, %v3651, %v3652
      %v3654 = vrot.slane %v3372, 1
      %v3655 = vrot.slane %v3388, 1
      %v3656 = vsel %vm2668, %v3654, %v3655
      %v3657 = vrot.slane %v3373, 1
      %v3658 = vrot.slane %v3389, 1
      %v3659 = vsel %vm2668, %v3657, %v3658
      %v3660 = vrot.slane %v3374, 1
      %v3661 = vrot.slane %v3390, 1
      %v3662 = vsel %vm2668, %v3660, %v3661
      %v3663 = vrot.slane %v3375, 1
      %v3664 = vrot.slane %v3391, 1
      %v3665 = vsel %vm2668, %v3663, %v3664
      %v3666 = vrot.slane %v3376, 1
      %v3667 = vrot.slane %v3392, 1
      %v3668 = vsel %vm2668, %v3666, %v3667
      %v3669 = vrot.slane %v3377, 1
      %v3670 = vrot.slane %v3393, 1
      %v3671 = vsel %vm2668, %v3669, %v3670
      %v3672 = vrot.slane %v3378, 1
      %v3673 = vrot.slane %v3394, 1
      %v3674 = vsel %vm2668, %v3672, %v3673
      %v3675 = vrot.slane %v3379, 1
      %v3676 = vrot.slane %v3395, 1
      %v3677 = vsel %vm2668, %v3675, %v3676
      %v3678 = vrot.slane %v3380, 1
      %v3679 = vrot.slane %v3396, 1
      %v3680 = vsel %vm2668, %v3678, %v3679
      %v3681 = vrot.slane %v3381, 1
      %v3682 = vrot.slane %v3397, 1
      %v3683 = vsel %vm2668, %v3681, %v3682
      %3684 = vrot.lane.b32.xlu0 %v3641, 8
      %v3685 = vpop.permute.xlu0 %3684
      %3686 = vrot.lane.b32.xlu0 %v3644, 8
      %v3687 = vpop.permute.xlu0 %3686
      %3688 = vrot.lane.b32.xlu0 %v3647, 8
      %v3689 = vpop.permute.xlu0 %3688
      %3690 = vrot.lane.b32.xlu0 %v3650, 8
      %v3691 = vpop.permute.xlu0 %3690
      %3692 = vrot.lane.b32.xlu0 %v3653, 8
      %v3693 = vpop.permute.xlu0 %3692
      %3694 = vrot.lane.b32.xlu0 %v3656, 8
      %v3695 = vpop.permute.xlu0 %3694
      %3696 = vrot.lane.b32.xlu0 %v3659, 8
      %v3697 = vpop.permute.xlu0 %3696
      %3698 = vrot.lane.b32.xlu0 %v3662, 8
      %v3699 = vpop.permute.xlu0 %3698
      %3700 = vrot.lane.b32.xlu0 %v3665, 8
      %v3701 = vpop.permute.xlu0 %3700
      %3702 = vrot.lane.b32.xlu0 %v3668, 8
      %v3703 = vpop.permute.xlu0 %3702
      %3704 = vrot.lane.b32.xlu0 %v3671, 8
      %v3705 = vpop.permute.xlu0 %3704
      %3706 = vrot.lane.b32.xlu0 %v3674, 8
      %v3707 = vpop.permute.xlu0 %3706
      %3708 = vrot.lane.b32.xlu0 %v3677, 8
      %v3709 = vpop.permute.xlu0 %3708
      %3710 = vrot.lane.b32.xlu0 %v3680, 8
      %v3711 = vpop.permute.xlu0 %3710
      %3712 = vrot.lane.b32.xlu0 %v3683, 8
      %v3713 = vpop.permute.xlu0 %3712
      %3715 = vrot.lane.b32.xlu0 %v3367, 12
      %v3716 = vpop.permute.xlu0 %3715
      %3717 = vrot.lane.b32.xlu0 %v3368, 12
      %v3718 = vpop.permute.xlu0 %3717
      %3719 = vrot.lane.b32.xlu0 %v3369, 12
      %v3720 = vpop.permute.xlu0 %3719
      %3721 = vrot.lane.b32.xlu0 %v3370, 12
      %v3722 = vpop.permute.xlu0 %3721
      %3723 = vrot.lane.b32.xlu0 %v3371, 12
      %v3724 = vpop.permute.xlu0 %3723
      %3725 = vrot.lane.b32.xlu0 %v3372, 12
      %v3726 = vpop.permute.xlu0 %3725
      %3727 = vrot.lane.b32.xlu0 %v3373, 12
      %v3728 = vpop.permute.xlu0 %3727
      %3729 = vrot.lane.b32.xlu0 %v3374, 12
      %v3730 = vpop.permute.xlu0 %3729
      %3731 = vrot.lane.b32.xlu0 %v3375, 12
      %v3732 = vpop.permute.xlu0 %3731
      %3733 = vrot.lane.b32.xlu0 %v3376, 12
      %v3734 = vpop.permute.xlu0 %3733
      %3735 = vrot.lane.b32.xlu0 %v3377, 12
      %v3736 = vpop.permute.xlu0 %3735
      %3737 = vrot.lane.b32.xlu0 %v3378, 12
      %v3738 = vpop.permute.xlu0 %3737
      %3739 = vrot.lane.b32.xlu0 %v3379, 12
      %v3740 = vpop.permute.xlu0 %3739
      %3741 = vrot.lane.b32.xlu0 %v3380, 12
      %v3742 = vpop.permute.xlu0 %3741
      %3743 = vrot.lane.b32.xlu0 %v3381, 12
      %v3744 = vpop.permute.xlu0 %3743
      %3745 = vrot.lane.b32.xlu0 %v3382, 12
      %v3746 = vpop.permute.xlu0 %3745
      %v3748 = vshrl.u32 %v3382, 16
      %v3750 = vshll.u32 %v3382, 16
      %v3752 = vrot.slane %v3750, 1
      %v3753 = vor.u32 %v3748, %v3752
      %v3755 = vshll.u32 %v3398, 16
      %v3757 = vrot.slane %v3755, 1
      %v3758 = vsel %vm2411, %v3753, %v3757
      %3759 = vrot.lane.b32.xlu0 %v3410, 16
      %v3760 = vpop.permute.xlu0 %3759
      %3761 = vrot.lane.b32.xlu0 %v3422, 16
      %v3762 = vpop.permute.xlu0 %3761
      %3763 = vrot.lane.b32.xlu0 %v3434, 16
      %v3764 = vpop.permute.xlu0 %3763
      %3765 = vrot.lane.b32.xlu0 %v3446, 16
      %v3766 = vpop.permute.xlu0 %3765
      %3767 = vrot.lane.b32.xlu0 %v3458, 16
      %v3768 = vpop.permute.xlu0 %3767
      %3769 = vrot.lane.b32.xlu0 %v3470, 16
      %v3770 = vpop.permute.xlu0 %3769
      %3771 = vrot.lane.b32.xlu0 %v3482, 16
      %v3772 = vpop.permute.xlu0 %3771
      %3773 = vrot.lane.b32.xlu0 %v3494, 16
      %v3774 = vpop.permute.xlu0 %3773
      %3775 = vrot.lane.b32.xlu0 %v3506, 16
      %v3776 = vpop.permute.xlu0 %3775
      %3777 = vrot.lane.b32.xlu0 %v3518, 16
      %v3778 = vpop.permute.xlu0 %3777
      %3779 = vrot.lane.b32.xlu0 %v3530, 16
      %v3780 = vpop.permute.xlu0 %3779
      %3781 = vrot.lane.b32.xlu0 %v3542, 16
      %v3782 = vpop.permute.xlu0 %3781
      %3783 = vrot.lane.b32.xlu0 %v3554, 16
      %v3784 = vpop.permute.xlu0 %3783
      %3785 = vrot.lane.b32.xlu0 %v3566, 16
      %v3786 = vpop.permute.xlu0 %3785
      %3787 = vrot.lane.b32.xlu0 %v3578, 16
      %v3788 = vpop.permute.xlu0 %3787
      %3789 = vrot.lane.b32.xlu0 %v3758, 16
      %v3790 = vpop.permute.xlu0 %3789
      %v3792 = vrot.slane %v3382, 1
      %v3793 = vrot.slane %v3398, 1
      %v3794 = vsel %vm2668, %v3792, %v3793
      %3795 = vrot.lane.b32.xlu0 %v3641, 20
      %v3796 = vpop.permute.xlu0 %3795
      %3797 = vrot.lane.b32.xlu0 %v3644, 20
      %v3798 = vpop.permute.xlu0 %3797
      %3799 = vrot.lane.b32.xlu0 %v3647, 20
      %v3800 = vpop.permute.xlu0 %3799
      %3801 = vrot.lane.b32.xlu0 %v3650, 20
      %v3802 = vpop.permute.xlu0 %3801
      %3803 = vrot.lane.b32.xlu0 %v3653, 20
      %v3804 = vpop.permute.xlu0 %3803
      %3805 = vrot.lane.b32.xlu0 %v3656, 20
      %v3806 = vpop.permute.xlu0 %3805
      %3807 = vrot.lane.b32.xlu0 %v3659, 20
      %v3808 = vpop.permute.xlu0 %3807
      %3809 = vrot.lane.b32.xlu0 %v3662, 20
      %v3810 = vpop.permute.xlu0 %3809
      %3811 = vrot.lane.b32.xlu0 %v3665, 20
      %v3812 = vpop.permute.xlu0 %3811
      %3813 = vrot.lane.b32.xlu0 %v3668, 20
      %v3814 = vpop.permute.xlu0 %3813
      %3815 = vrot.lane.b32.xlu0 %v3671, 20
      %v3816 = vpop.permute.xlu0 %3815
      %3817 = vrot.lane.b32.xlu0 %v3674, 20
      %v3818 = vpop.permute.xlu0 %3817
      %3819 = vrot.lane.b32.xlu0 %v3677, 20
      %v3820 = vpop.permute.xlu0 %3819
      %3821 = vrot.lane.b32.xlu0 %v3680, 20
      %v3822 = vpop.permute.xlu0 %3821
      %3823 = vrot.lane.b32.xlu0 %v3683, 20
      %v3824 = vpop.permute.xlu0 %3823
      %3825 = vrot.lane.b32.xlu0 %v3794, 20
      %v3826 = vpop.permute.xlu0 %3825
      %3827 = vrot.lane.b32.xlu0 %v3368, 24
      %v3828 = vpop.permute.xlu0 %3827
      %3829 = vrot.lane.b32.xlu0 %v3369, 24
      %v3830 = vpop.permute.xlu0 %3829
      %3831 = vrot.lane.b32.xlu0 %v3370, 24
      %v3832 = vpop.permute.xlu0 %3831
      %3833 = vrot.lane.b32.xlu0 %v3371, 24
      %v3834 = vpop.permute.xlu0 %3833
      %3835 = vrot.lane.b32.xlu0 %v3372, 24
      %v3836 = vpop.permute.xlu0 %3835
      %3837 = vrot.lane.b32.xlu0 %v3373, 24
      %v3838 = vpop.permute.xlu0 %3837
      %3839 = vrot.lane.b32.xlu0 %v3374, 24
      %v3840 = vpop.permute.xlu0 %3839
      %3841 = vrot.lane.b32.xlu0 %v3375, 24
      %v3842 = vpop.permute.xlu0 %3841
      %3843 = vrot.lane.b32.xlu0 %v3376, 24
      %v3844 = vpop.permute.xlu0 %3843
      %3845 = vrot.lane.b32.xlu0 %v3377, 24
      %v3846 = vpop.permute.xlu0 %3845
      %3847 = vrot.lane.b32.xlu0 %v3378, 24
      %v3848 = vpop.permute.xlu0 %3847
      %3849 = vrot.lane.b32.xlu0 %v3379, 24
      %v3850 = vpop.permute.xlu0 %3849
      %3851 = vrot.lane.b32.xlu0 %v3380, 24
      %v3852 = vpop.permute.xlu0 %3851
      %3853 = vrot.lane.b32.xlu0 %v3381, 24
      %v3854 = vpop.permute.xlu0 %3853
      %3855 = vrot.lane.b32.xlu0 %v3382, 24
      %v3856 = vpop.permute.xlu0 %3855
      %3857 = vrot.lane.b32.xlu0 %v3422, 28
      %v3858 = vpop.permute.xlu0 %3857
      %3859 = vrot.lane.b32.xlu0 %v3434, 28
      %v3860 = vpop.permute.xlu0 %3859
      %3861 = vrot.lane.b32.xlu0 %v3446, 28
      %v3862 = vpop.permute.xlu0 %3861
      %3863 = vrot.lane.b32.xlu0 %v3458, 28
      %v3864 = vpop.permute.xlu0 %3863
      %3865 = vrot.lane.b32.xlu0 %v3470, 28
      %v3866 = vpop.permute.xlu0 %3865
      %3867 = vrot.lane.b32.xlu0 %v3482, 28
      %v3868 = vpop.permute.xlu0 %3867
      %3869 = vrot.lane.b32.xlu0 %v3494, 28
      %v3870 = vpop.permute.xlu0 %3869
      %3871 = vrot.lane.b32.xlu0 %v3506, 28
      %v3872 = vpop.permute.xlu0 %3871
      %3873 = vrot.lane.b32.xlu0 %v3518, 28
      %v3874 = vpop.permute.xlu0 %3873
      %3875 = vrot.lane.b32.xlu0 %v3530, 28
      %v3876 = vpop.permute.xlu0 %3875
      %3877 = vrot.lane.b32.xlu0 %v3542, 28
      %v3878 = vpop.permute.xlu0 %3877
      %3879 = vrot.lane.b32.xlu0 %v3554, 28
      %v3880 = vpop.permute.xlu0 %3879
      %3881 = vrot.lane.b32.xlu0 %v3566, 28
      %v3882 = vpop.permute.xlu0 %3881
      %3883 = vrot.lane.b32.xlu0 %v3578, 28
      %v3884 = vpop.permute.xlu0 %3883
      %3885 = vrot.lane.b32.xlu0 %v3758, 28
      %v3886 = vpop.permute.xlu0 %3885
      %3887 = vrot.lane.b32.xlu0 %v3644, 32
      %v3888 = vpop.permute.xlu0 %3887
      %3889 = vrot.lane.b32.xlu0 %v3647, 32
      %v3890 = vpop.permute.xlu0 %3889
      %3891 = vrot.lane.b32.xlu0 %v3650, 32
      %v3892 = vpop.permute.xlu0 %3891
      %3893 = vrot.lane.b32.xlu0 %v3653, 32
      %v3894 = vpop.permute.xlu0 %3893
      %3895 = vrot.lane.b32.xlu0 %v3656, 32
      %v3896 = vpop.permute.xlu0 %3895
      %3897 = vrot.lane.b32.xlu0 %v3659, 32
      %v3898 = vpop.permute.xlu0 %3897
      %3899 = vrot.lane.b32.xlu0 %v3662, 32
      %v3900 = vpop.permute.xlu0 %3899
      %3901 = vrot.lane.b32.xlu0 %v3665, 32
      %v3902 = vpop.permute.xlu0 %3901
      %3903 = vrot.lane.b32.xlu0 %v3668, 32
      %v3904 = vpop.permute.xlu0 %3903
      %3905 = vrot.lane.b32.xlu0 %v3671, 32
      %v3906 = vpop.permute.xlu0 %3905
      %3907 = vrot.lane.b32.xlu0 %v3674, 32
      %v3908 = vpop.permute.xlu0 %3907
      %3909 = vrot.lane.b32.xlu0 %v3677, 32
      %v3910 = vpop.permute.xlu0 %3909
      %3911 = vrot.lane.b32.xlu0 %v3680, 32
      %v3912 = vpop.permute.xlu0 %3911
      %3913 = vrot.lane.b32.xlu0 %v3683, 32
      %v3914 = vpop.permute.xlu0 %3913
      %3915 = vrot.lane.b32.xlu0 %v3794, 32
      %v3916 = vpop.permute.xlu0 %3915
      %v3918 = vsel %vm645, %v3367, %v3580
      %v3920 = vsel %vm645, %v3368, %v3582
      %v3922 = vsel %vm645, %v3369, %v3584
      %v3924 = vsel %vm645, %v3370, %v3586
      %v3926 = vsel %vm645, %v3371, %v3588
      %v3928 = vsel %vm645, %v3372, %v3590
      %v3930 = vsel %vm645, %v3373, %v3592
      %v3932 = vsel %vm645, %v3374, %v3594
      %v3934 = vsel %vm645, %v3375, %v3596
      %v3936 = vsel %vm645, %v3376, %v3598
      %v3938 = vsel %vm645, %v3377, %v3600
      %v3940 = vsel %vm645, %v3378, %v3602
      %v3942 = vsel %vm645, %v3379, %v3604
      %v3944 = vsel %vm645, %v3380, %v3606
      %v3946 = vsel %vm645, %v3381, %v3608
      %v3948 = vsel %vm647, %v3918, %v3685
      %v3950 = vsel %vm647, %v3920, %v3687
      %v3952 = vsel %vm647, %v3922, %v3689
      %v3954 = vsel %vm647, %v3924, %v3691
      %v3956 = vsel %vm647, %v3926, %v3693
      %v3958 = vsel %vm647, %v3928, %v3695
      %v3960 = vsel %vm647, %v3930, %v3697
      %v3962 = vsel %vm647, %v3932, %v3699
      %v3964 = vsel %vm647, %v3934, %v3701
      %v3966 = vsel %vm647, %v3936, %v3703
      %v3968 = vsel %vm647, %v3938, %v3705
      %v3970 = vsel %vm647, %v3940, %v3707
      %v3972 = vsel %vm647, %v3942, %v3709
      %v3974 = vsel %vm647, %v3944, %v3711
      %v3976 = vsel %vm647, %v3946, %v3713
      %v3978 = vsel %vm649, %v2991, %v3716
      %v3980 = vsel %vm649, %v3948, %v3718
      %v3982 = vsel %vm649, %v3950, %v3720
      %v3984 = vsel %vm649, %v3952, %v3722
      %v3986 = vsel %vm649, %v3954, %v3724
      %v3988 = vsel %vm649, %v3956, %v3726
      %v3990 = vsel %vm649, %v3958, %v3728
      %v3992 = vsel %vm649, %v3960, %v3730
      %v3994 = vsel %vm649, %v3962, %v3732
      %v3996 = vsel %vm649, %v3964, %v3734
      %v3998 = vsel %vm649, %v3966, %v3736
      %v4000 = vsel %vm649, %v3968, %v3738
      %v4002 = vsel %vm649, %v3970, %v3740
      %v4004 = vsel %vm649, %v3972, %v3742
      %v4006 = vsel %vm649, %v3974, %v3744
      %v4008 = vsel %vm649, %v3976, %v3746
      %v4010 = vsel %vm546, %v3978, %v3760
      %v4012 = vsel %vm546, %v3980, %v3762
      %v4014 = vsel %vm546, %v3982, %v3764
      %v4016 = vsel %vm546, %v3984, %v3766
      %v4018 = vsel %vm546, %v3986, %v3768
      %v4020 = vsel %vm546, %v3988, %v3770
      %v4022 = vsel %vm546, %v3990, %v3772
      %v4024 = vsel %vm546, %v3992, %v3774
      %v4026 = vsel %vm546, %v3994, %v3776
      %v4028 = vsel %vm546, %v3996, %v3778
      %v4030 = vsel %vm546, %v3998, %v3780
      %v4032 = vsel %vm546, %v4000, %v3782
      %v4034 = vsel %vm546, %v4002, %v3784
      %v4036 = vsel %vm546, %v4004, %v3786
      %v4038 = vsel %vm546, %v4006, %v3788
      %v4040 = vsel %vm546, %v4008, %v3790
      %v4042 = vsel %vm3086, %v4010, %v3796
      %v4044 = vsel %vm3086, %v4012, %v3798
      %v4046 = vsel %vm3086, %v4014, %v3800
      %v4048 = vsel %vm3086, %v4016, %v3802
      %v4050 = vsel %vm3086, %v4018, %v3804
      %v4052 = vsel %vm3086, %v4020, %v3806
      %v4054 = vsel %vm3086, %v4022, %v3808
      %v4056 = vsel %vm3086, %v4024, %v3810
      %v4058 = vsel %vm3086, %v4026, %v3812
      %v4060 = vsel %vm3086, %v4028, %v3814
      %v4062 = vsel %vm3086, %v4030, %v3816
      %v4064 = vsel %vm3086, %v4032, %v3818
      %v4066 = vsel %vm3086, %v4034, %v3820
      %v4068 = vsel %vm3086, %v4036, %v3822
      %v4070 = vsel %vm3086, %v4038, %v3824
      %v4072 = vsel %vm3086, %v4040, %v3826
      %v4074 = vsel %vm3119, %v4042, %v3828
      %v4076 = vsel %vm3119, %v4044, %v3830
      %v4078 = vsel %vm3119, %v4046, %v3832
      %v4080 = vsel %vm3119, %v4048, %v3834
      %v4082 = vsel %vm3119, %v4050, %v3836
      %v4084 = vsel %vm3119, %v4052, %v3838
      %v4086 = vsel %vm3119, %v4054, %v3840
      %v4088 = vsel %vm3119, %v4056, %v3842
      %v4090 = vsel %vm3119, %v4058, %v3844
      %v4092 = vsel %vm3119, %v4060, %v3846
      %v4094 = vsel %vm3119, %v4062, %v3848
      %v4096 = vsel %vm3119, %v4064, %v3850
      %v4098 = vsel %vm3119, %v4066, %v3852
      %v4100 = vsel %vm3119, %v4068, %v3854
      %v4102 = vsel %vm3119, %v4070, %v3856
      %v4103 = vsel %vm3119, %v4072, %v2893
      %v4105 = vsel %vm3152, %v4074, %v3858
      %v4107 = vsel %vm3152, %v4076, %v3860
      %v4109 = vsel %vm3152, %v4078, %v3862
      %v4111 = vsel %vm3152, %v4080, %v3864
      %v4113 = vsel %vm3152, %v4082, %v3866
      %v4115 = vsel %vm3152, %v4084, %v3868
      %v4117 = vsel %vm3152, %v4086, %v3870
      %v4119 = vsel %vm3152, %v4088, %v3872
      %v4121 = vsel %vm3152, %v4090, %v3874
      %v4123 = vsel %vm3152, %v4092, %v3876
      %v4125 = vsel %vm3152, %v4094, %v3878
      %v4127 = vsel %vm3152, %v4096, %v3880
      %v4129 = vsel %vm3152, %v4098, %v3882
      %v4131 = vsel %vm3152, %v4100, %v3884
      %v4133 = vsel %vm3152, %v4102, %v3886
      %v4134 = vsel %vm3152, %v4103, %v2925
      %v4136 = vsel %vm3185, %v4105, %v3888
      %v4138 = vsel %vm3185, %v4107, %v3890
      %v4140 = vsel %vm3185, %v4109, %v3892
      %v4142 = vsel %vm3185, %v4111, %v3894
      %v4144 = vsel %vm3185, %v4113, %v3896
      %v4146 = vsel %vm3185, %v4115, %v3898
      %v4148 = vsel %vm3185, %v4117, %v3900
      %v4150 = vsel %vm3185, %v4119, %v3902
      %v4152 = vsel %vm3185, %v4121, %v3904
      %v4154 = vsel %vm3185, %v4123, %v3906
      %v4156 = vsel %vm3185, %v4125, %v3908
      %v4158 = vsel %vm3185, %v4127, %v3910
      %v4160 = vsel %vm3185, %v4129, %v3912
      %v4162 = vsel %vm3185, %v4131, %v3914
      %v4164 = vsel %vm3185, %v4133, %v3916
      %v4165 = vsel %vm3185, %v4134, %v2957
      %v4166 = vld [vmem:[%s6] sm:$0xf]
      %v4167 = vld [vmem:[%s6 + $0x4] sm:$0xf]
      %v4168 = vld [vmem:[%s6 + $0x8] sm:$0xf]
      %v4169 = vld [vmem:[%s6 + $0xc] sm:$0xf]
      %v4170 = vld [vmem:[%s6 + $0x10] sm:$0x3]
      %v4176 = vunpack.c.l.b16 %v4166
      %v4177 = vunpack.c.l.b16 %v4167
      %v4178 = vunpack.c.l.b16 %v4168
      %v4179 = vunpack.c.l.b16 %v4169
      %v4180 = vunpack.c.l.b16 %v4170
      %v4181 = vpack.c.b16 %v4177, %v4176
      %v4182 = vpack.c.b16 %v4179, %v4178
      %v4183 = vpack.c.b16 %v4180, %v4180
      %vm4186 = vcmask 293888
      %v4187 = vsel %vm4186, %v4136, 0
      %v4189 = vsel %vm4186, %v4138, 0
      %v4191 = vsel %vm4186, %v4140, 0
      %v4193 = vsel %vm4186, %v4142, 0
      %v4195 = vsel %vm4186, %v4144, 0
      %v4197 = vsel %vm4186, %v4146, 0
      %v4199 = vsel %vm4186, %v4148, 0
      %v4201 = vsel %vm4186, %v4150, 0
      %v4203 = vsel %vm4186, %v4152, 0
      %v4205 = vsel %vm4186, %v4154, 0
      %v4207 = vsel %vm4186, %v4156, 0
      %v4209 = vsel %vm4186, %v4158, 0
      %v4211 = vsel %vm4186, %v4160, 0
      %v4213 = vsel %vm4186, %v4162, 0
      %v4215 = vsel %vm4186, %v4164, 0
      %v4217 = vsel %vm4186, %v4165, 0
      %vm4219 = vcmask 1041408
      %v4221 = vsel %vm4219, %v4183, 0
      %4223 = vmatprep.subr.bf16.mxu0 0
      %4224 = vmatpush1.bf16.msra.mxu0 0
      %4225 = vmatprep.subr.bf16.mxu0 0
      %4226 = vmatpush1.bf16.msra.mxu0 0
      %4227 = vmatprep.subr.bf16.mxu0 0
      %4228 = vmatpush1.bf16.msra.mxu0 0
      %4229 = vmatprep.subr.bf16.mxu0 0
      %4230 = vmatpush1.bf16.msra.mxu0 0
      %4231 = vmatprep.subr.bf16.mxu0 0
      %4232 = vmatpush1.bf16.msra.mxu0 0
      %4233 = vmatprep.subr.bf16.mxu0 0
      %4234 = vmatpush1.bf16.msra.mxu0 %v4221
      %4235 = vmatprep.subr.bf16.mxu0 0
      %4236 = vmatpush1.bf16.msra.mxu0 %v4182
      %4237 = vmatprep.subr.bf16.mxu0 0
      %4238 = vmatpush1.bf16.msra.mxu0 %v4181
      %4239 = vmatprep.subr.bf16.mxu0 0
      %4240 = vmatpush2.bf16.msra.mxu0 0
      %4241 = vmatprep.subr.bf16.mxu0 0
      %4242 = vmatpush2.bf16.msra.mxu0 0
      %4243 = vmatprep.subr.bf16.mxu0 0
      %4244 = vmatpush2.bf16.msra.mxu0 0
      %4245 = vmatprep.subr.bf16.mxu0 0
      %4246 = vmatpush2.bf16.msra.mxu0 0
      %4247 = vmatprep.subr.bf16.mxu0 0
      %4248 = vmatpush2.bf16.msra.mxu0 0
      %4249 = vmatprep.subr.bf16.mxu0 0
      %4250 = vmatpush2.bf16.msra.mxu0 0
      %4251 = vmatprep.subr.bf16.mxu0 0
      %4252 = vmatpush2.bf16.msra.mxu0 0
      %4253 = vmatprep.subr.bf16.mxu0 0
      %4254 = vmatpush2.bf16.msra.mxu0 0
      %4255 = vmatprep.mubr.bf16.mxu0 0
      %4256 = vmatmul.mubr.bf16.gmra.mxu0 %v4187
      %v4257 = vpop.f32.mrf.mxu0
      %v4258 = vadd.f32 0.0, %v4257
      %v4259 = vpop.f32.mrf.mxu0
      %v4260 = vpop.f32.mrf.mxu0
      %v4261 = vadd.f32 0.0, %v4260
      %v4262 = vpop.f32.mrf.mxu0
      %4263 = vmatprep.mubr.bf16.mxu0 0
      %4264 = vmatmul.mubr.bf16.gmra.mxu0 %v4189
      %v4265 = vpop.f32.mrf.mxu0
      %v4266 = vadd.f32 0.0, %v4265
      %v4267 = vpop.f32.mrf.mxu0
      %v4268 = vpop.f32.mrf.mxu0
      %v4269 = vadd.f32 0.0, %v4268
      %v4270 = vpop.f32.mrf.mxu0
      %4271 = vmatprep.mubr.bf16.mxu0 0
      %4272 = vmatmul.mubr.bf16.gmra.mxu0 %v4191
      %v4273 = vpop.f32.mrf.mxu0
      %v4274 = vadd.f32 0.0, %v4273
      %v4275 = vpop.f32.mrf.mxu0
      %v4276 = vpop.f32.mrf.mxu0
      %v4277 = vadd.f32 0.0, %v4276
      %v4278 = vpop.f32.mrf.mxu0
      %4279 = vmatprep.mubr.bf16.mxu0 0
      %4280 = vmatmul.mubr.bf16.gmra.mxu0 %v4193
      %v4281 = vpop.f32.mrf.mxu0
      %v4282 = vadd.f32 0.0, %v4281
      %v4283 = vpop.f32.mrf.mxu0
      %v4284 = vpop.f32.mrf.mxu0
      %v4285 = vadd.f32 0.0, %v4284
      %v4286 = vpop.f32.mrf.mxu0
      %4287 = vmatprep.mubr.bf16.mxu0 0
      %4288 = vmatmul.mubr.bf16.gmra.mxu0 %v4195
      %v4289 = vpop.f32.mrf.mxu0
      %v4290 = vadd.f32 0.0, %v4289
      %v4291 = vpop.f32.mrf.mxu0
      %v4292 = vpop.f32.mrf.mxu0
      %v4293 = vadd.f32 0.0, %v4292
      %v4294 = vpop.f32.mrf.mxu0
      %4295 = vmatprep.mubr.bf16.mxu0 0
      %4296 = vmatmul.mubr.bf16.gmra.mxu0 %v4197
      %v4297 = vpop.f32.mrf.mxu0
      %v4298 = vadd.f32 0.0, %v4297
      %v4299 = vpop.f32.mrf.mxu0
      %v4300 = vpop.f32.mrf.mxu0
      %v4301 = vadd.f32 0.0, %v4300
      %v4302 = vpop.f32.mrf.mxu0
      %4303 = vmatprep.mubr.bf16.mxu0 0
      %4304 = vmatmul.mubr.bf16.gmra.mxu0 %v4199
      %v4305 = vpop.f32.mrf.mxu0
      %v4306 = vadd.f32 0.0, %v4305
      %v4307 = vpop.f32.mrf.mxu0
      %v4308 = vpop.f32.mrf.mxu0
      %v4309 = vadd.f32 0.0, %v4308
      %v4310 = vpop.f32.mrf.mxu0
      %4311 = vmatprep.mubr.bf16.mxu0 0
      %4312 = vmatmul.mubr.bf16.gmra.mxu0 %v4201
      %v4313 = vpop.f32.mrf.mxu0
      %v4314 = vadd.f32 0.0, %v4313
      %v4315 = vpop.f32.mrf.mxu0
      %v4316 = vpop.f32.mrf.mxu0
      %v4317 = vadd.f32 0.0, %v4316
      %v4318 = vpop.f32.mrf.mxu0
      %4319 = vmatprep.mubr.bf16.mxu0 0
      %4320 = vmatmul.mubr.bf16.gmra.mxu0 %v4203
      %v4321 = vpop.f32.mrf.mxu0
      %v4322 = vadd.f32 0.0, %v4321
      %v4323 = vpop.f32.mrf.mxu0
      %v4324 = vpop.f32.mrf.mxu0
      %v4325 = vadd.f32 0.0, %v4324
      %v4326 = vpop.f32.mrf.mxu0
      %4327 = vmatprep.mubr.bf16.mxu0 0
      %4328 = vmatmul.mubr.bf16.gmra.mxu0 %v4205
      %v4329 = vpop.f32.mrf.mxu0
      %v4330 = vadd.f32 0.0, %v4329
      %v4331 = vpop.f32.mrf.mxu0
      %v4332 = vpop.f32.mrf.mxu0
      %v4333 = vadd.f32 0.0, %v4332
      %v4334 = vpop.f32.mrf.mxu0
      %4335 = vmatprep.mubr.bf16.mxu0 0
      %4336 = vmatmul.mubr.bf16.gmra.mxu0 %v4207
      %v4337 = vpop.f32.mrf.mxu0
      %v4338 = vadd.f32 0.0, %v4337
      %v4339 = vpop.f32.mrf.mxu0
      %v4340 = vpop.f32.mrf.mxu0
      %v4341 = vadd.f32 0.0, %v4340
      %v4342 = vpop.f32.mrf.mxu0
      %4343 = vmatprep.mubr.bf16.mxu0 0
      %4344 = vmatmul.mubr.bf16.gmra.mxu0 %v4209
      %v4345 = vpop.f32.mrf.mxu0
      %v4346 = vadd.f32 0.0, %v4345
      %v4347 = vpop.f32.mrf.mxu0
      %v4348 = vpop.f32.mrf.mxu0
      %v4349 = vadd.f32 0.0, %v4348
      %v4350 = vpop.f32.mrf.mxu0
      %4351 = vmatprep.mubr.bf16.mxu0 0
      %4352 = vmatmul.mubr.bf16.gmra.mxu0 %v4211
      %v4353 = vpop.f32.mrf.mxu0
      %v4354 = vadd.f32 0.0, %v4353
      %v4355 = vpop.f32.mrf.mxu0
      %v4356 = vpop.f32.mrf.mxu0
      %v4357 = vadd.f32 0.0, %v4356
      %v4358 = vpop.f32.mrf.mxu0
      %4359 = vmatprep.mubr.bf16.mxu0 0
      %4360 = vmatmul.mubr.bf16.gmra.mxu0 %v4213
      %v4361 = vpop.f32.mrf.mxu0
      %v4362 = vadd.f32 0.0, %v4361
      %v4363 = vpop.f32.mrf.mxu0
      %v4364 = vpop.f32.mrf.mxu0
      %v4365 = vadd.f32 0.0, %v4364
      %v4366 = vpop.f32.mrf.mxu0
      %4367 = vmatprep.mubr.bf16.mxu0 0
      %4368 = vmatmul.mubr.bf16.gmra.mxu0 %v4215
      %v4369 = vpop.f32.mrf.mxu0
      %v4370 = vadd.f32 0.0, %v4369
      %v4371 = vpop.f32.mrf.mxu0
      %v4372 = vpop.f32.mrf.mxu0
      %v4373 = vadd.f32 0.0, %v4372
      %v4374 = vpop.f32.mrf.mxu0
      %4375 = vmatprep.mubr.bf16.mxu0 0
      %4376 = vmatmul.mubr.bf16.gmra.mxu0 %v4217
      %v4377 = vpop.f32.mrf.mxu0
      %v4378 = vadd.f32 0.0, %v4377
      %v4379 = vpop.f32.mrf.mxu0
      %v4380 = vpop.f32.mrf.mxu0
      %v4381 = vadd.f32 0.0, %v4380
      %v4382 = vpop.f32.mrf.mxu0
      %4383 = vdwg.mxu0
      %v4389 = vunpack.c.l.b16 %v3218
      %v4390 = vunpack.c.l.b16 %v3219
      %v4391 = vunpack.c.l.b16 %v3220
      %v4392 = vunpack.c.l.b16 %v3221
      %v4393 = vunpack.c.l.b16 %v3222
      %v4394 = vpack.c.b16 %v4390, %v4389
      %v4395 = vpack.c.b16 %v4392, %v4391
      %v4396 = vpack.c.b16 %v4393, %v4393
      %v4399 = vsel %vm4186, %v3187, 0
      %v4401 = vsel %vm4186, %v3189, 0
      %v4403 = vsel %vm4186, %v3191, 0
      %v4405 = vsel %vm4186, %v3193, 0
      %v4407 = vsel %vm4186, %v3195, 0
      %v4409 = vsel %vm4186, %v3197, 0
      %v4411 = vsel %vm4186, %v3199, 0
      %v4413 = vsel %vm4186, %v3201, 0
      %v4415 = vsel %vm4186, %v3203, 0
      %v4417 = vsel %vm4186, %v3205, 0
      %v4419 = vsel %vm4186, %v3207, 0
      %v4421 = vsel %vm4186, %v3209, 0
      %v4423 = vsel %vm4186, %v3211, 0
      %v4425 = vsel %vm4186, %v3213, 0
      %v4427 = vsel %vm4186, %v3215, 0
      %v4429 = vsel %vm4186, %v3217, 0
      %v4432 = vsel %vm4219, %v4396, 0
      %4434 = vmatprep.subr.bf16.mxu0 0
      %4435 = vmatpush1.bf16.msra.mxu0 0
      %4436 = vmatprep.subr.bf16.mxu0 0
      %4437 = vmatpush1.bf16.msra.mxu0 0
      %4438 = vmatprep.subr.bf16.mxu0 0
      %4439 = vmatpush1.bf16.msra.mxu0 0
      %4440 = vmatprep.subr.bf16.mxu0 0
      %4441 = vmatpush1.bf16.msra.mxu0 0
      %4442 = vmatprep.subr.bf16.mxu0 0
      %4443 = vmatpush1.bf16.msra.mxu0 0
      %4444 = vmatprep.subr.bf16.mxu0 0
      %4445 = vmatpush1.bf16.msra.mxu0 %v4432
      %4446 = vmatprep.subr.bf16.mxu0 0
      %4447 = vmatpush1.bf16.msra.mxu0 %v4395
      %4448 = vmatprep.subr.bf16.mxu0 0
      %4449 = vmatpush1.bf16.msra.mxu0 %v4394
      %4450 = vmatprep.subr.bf16.mxu0 0
      %4451 = vmatpush2.bf16.msra.mxu0 0
      %4452 = vmatprep.subr.bf16.mxu0 0
      %4453 = vmatpush2.bf16.msra.mxu0 0
      %4454 = vmatprep.subr.bf16.mxu0 0
      %4455 = vmatpush2.bf16.msra.mxu0 0
      %4456 = vmatprep.subr.bf16.mxu0 0
      %4457 = vmatpush2.bf16.msra.mxu0 0
      %4458 = vmatprep.subr.bf16.mxu0 0
      %4459 = vmatpush2.bf16.msra.mxu0 0
      %4460 = vmatprep.subr.bf16.mxu0 0
      %4461 = vmatpush2.bf16.msra.mxu0 0
      %4462 = vmatprep.subr.bf16.mxu0 0
      %4463 = vmatpush2.bf16.msra.mxu0 0
      %4464 = vmatprep.subr.bf16.mxu0 0
      %4465 = vmatpush2.bf16.msra.mxu0 0
      %4466 = vmatprep.mubr.bf16.mxu0 0
      %4467 = vmatmul.mubr.bf16.gmra.mxu0 %v4399
      %v4468 = vpop.f32.mrf.mxu0
      %v4469 = vadd.f32 %v4258, %v4468
      %v4470 = vpop.f32.mrf.mxu0
      %v4471 = vpop.f32.mrf.mxu0
      %v4472 = vadd.f32 %v4261, %v4471
      %v4473 = vpop.f32.mrf.mxu0
      %4474 = vmatprep.mubr.bf16.mxu0 0
      %4475 = vmatmul.mubr.bf16.gmra.mxu0 %v4401
      %v4476 = vpop.f32.mrf.mxu0
      %v4477 = vadd.f32 %v4266, %v4476
      %v4478 = vpop.f32.mrf.mxu0
      %v4479 = vpop.f32.mrf.mxu0
      %v4480 = vadd.f32 %v4269, %v4479
      %v4481 = vpop.f32.mrf.mxu0
      %4482 = vmatprep.mubr.bf16.mxu0 0
      %4483 = vmatmul.mubr.bf16.gmra.mxu0 %v4403
      %v4484 = vpop.f32.mrf.mxu0
      %v4485 = vadd.f32 %v4274, %v4484
      %v4486 = vpop.f32.mrf.mxu0
      %v4487 = vpop.f32.mrf.mxu0
      %v4488 = vadd.f32 %v4277, %v4487
      %v4489 = vpop.f32.mrf.mxu0
      %4490 = vmatprep.mubr.bf16.mxu0 0
      %4491 = vmatmul.mubr.bf16.gmra.mxu0 %v4405
      %v4492 = vpop.f32.mrf.mxu0
      %v4493 = vadd.f32 %v4282, %v4492
      %v4494 = vpop.f32.mrf.mxu0
      %v4495 = vpop.f32.mrf.mxu0
      %v4496 = vadd.f32 %v4285, %v4495
      %v4497 = vpop.f32.mrf.mxu0
      %4498 = vmatprep.mubr.bf16.mxu0 0
      %4499 = vmatmul.mubr.bf16.gmra.mxu0 %v4407
      %v4500 = vpop.f32.mrf.mxu0
      %v4501 = vadd.f32 %v4290, %v4500
      %v4502 = vpop.f32.mrf.mxu0
      %v4503 = vpop.f32.mrf.mxu0
      %v4504 = vadd.f32 %v4293, %v4503
      %v4505 = vpop.f32.mrf.mxu0
      %4506 = vmatprep.mubr.bf16.mxu0 0
      %4507 = vmatmul.mubr.bf16.gmra.mxu0 %v4409
      %v4508 = vpop.f32.mrf.mxu0
      %v4509 = vadd.f32 %v4298, %v4508
      %v4510 = vpop.f32.mrf.mxu0
      %v4511 = vpop.f32.mrf.mxu0
      %v4512 = vadd.f32 %v4301, %v4511
      %v4513 = vpop.f32.mrf.mxu0
      %4514 = vmatprep.mubr.bf16.mxu0 0
      %4515 = vmatmul.mubr.bf16.gmra.mxu0 %v4411
      %v4516 = vpop.f32.mrf.mxu0
      %v4517 = vadd.f32 %v4306, %v4516
      %v4518 = vpop.f32.mrf.mxu0
      %v4519 = vpop.f32.mrf.mxu0
      %v4520 = vadd.f32 %v4309, %v4519
      %v4521 = vpop.f32.mrf.mxu0
      %4522 = vmatprep.mubr.bf16.mxu0 0
      %4523 = vmatmul.mubr.bf16.gmra.mxu0 %v4413
      %v4524 = vpop.f32.mrf.mxu0
      %v4525 = vadd.f32 %v4314, %v4524
      %v4526 = vpop.f32.mrf.mxu0
      %v4527 = vpop.f32.mrf.mxu0
      %v4528 = vadd.f32 %v4317, %v4527
      %v4529 = vpop.f32.mrf.mxu0
      %4530 = vmatprep.mubr.bf16.mxu0 0
      %4531 = vmatmul.mubr.bf16.gmra.mxu0 %v4415
      %v4532 = vpop.f32.mrf.mxu0
      %v4533 = vadd.f32 %v4322, %v4532
      %v4534 = vpop.f32.mrf.mxu0
      %v4535 = vpop.f32.mrf.mxu0
      %v4536 = vadd.f32 %v4325, %v4535
      %v4537 = vpop.f32.mrf.mxu0
      %4538 = vmatprep.mubr.bf16.mxu0 0
      %4539 = vmatmul.mubr.bf16.gmra.mxu0 %v4417
      %v4540 = vpop.f32.mrf.mxu0
      %v4541 = vadd.f32 %v4330, %v4540
      %v4542 = vpop.f32.mrf.mxu0
      %v4543 = vpop.f32.mrf.mxu0
      %v4544 = vadd.f32 %v4333, %v4543
      %v4545 = vpop.f32.mrf.mxu0
      %4546 = vmatprep.mubr.bf16.mxu0 0
      %4547 = vmatmul.mubr.bf16.gmra.mxu0 %v4419
      %v4548 = vpop.f32.mrf.mxu0
      %v4549 = vadd.f32 %v4338, %v4548
      %v4550 = vpop.f32.mrf.mxu0
      %v4551 = vpop.f32.mrf.mxu0
      %v4552 = vadd.f32 %v4341, %v4551
      %v4553 = vpop.f32.mrf.mxu0
      %4554 = vmatprep.mubr.bf16.mxu0 0
      %4555 = vmatmul.mubr.bf16.gmra.mxu0 %v4421
      %v4556 = vpop.f32.mrf.mxu0
      %v4557 = vadd.f32 %v4346, %v4556
      %v4558 = vpop.f32.mrf.mxu0
      %v4559 = vpop.f32.mrf.mxu0
      %v4560 = vadd.f32 %v4349, %v4559
      %v4561 = vpop.f32.mrf.mxu0
      %4562 = vmatprep.mubr.bf16.mxu0 0
      %4563 = vmatmul.mubr.bf16.gmra.mxu0 %v4423
      %v4564 = vpop.f32.mrf.mxu0
      %v4565 = vadd.f32 %v4354, %v4564
      %v4566 = vpop.f32.mrf.mxu0
      %v4567 = vpop.f32.mrf.mxu0
      %v4568 = vadd.f32 %v4357, %v4567
      %v4569 = vpop.f32.mrf.mxu0
      %4570 = vmatprep.mubr.bf16.mxu0 0
      %4571 = vmatmul.mubr.bf16.gmra.mxu0 %v4425
      %v4572 = vpop.f32.mrf.mxu0
      %v4573 = vadd.f32 %v4362, %v4572
      %v4574 = vpop.f32.mrf.mxu0
      %v4575 = vpop.f32.mrf.mxu0
      %v4576 = vadd.f32 %v4365, %v4575
      %v4577 = vpop.f32.mrf.mxu0
      %4578 = vmatprep.mubr.bf16.mxu0 0
      %4579 = vmatmul.mubr.bf16.gmra.mxu0 %v4427
      %v4580 = vpop.f32.mrf.mxu0
      %v4581 = vadd.f32 %v4370, %v4580
      %v4582 = vpop.f32.mrf.mxu0
      %v4583 = vpop.f32.mrf.mxu0
      %v4584 = vadd.f32 %v4373, %v4583
      %v4585 = vpop.f32.mrf.mxu0
      %4586 = vmatprep.mubr.bf16.mxu0 0
      %4587 = vmatmul.mubr.bf16.gmra.mxu0 %v4429
      %v4588 = vpop.f32.mrf.mxu0
      %v4589 = vadd.f32 %v4378, %v4588
      %v4590 = vpop.f32.mrf.mxu0
      %v4591 = vpop.f32.mrf.mxu0
      %v4592 = vadd.f32 %v4381, %v4591
      %v4593 = vpop.f32.mrf.mxu0
      %4594 = vdwg.mxu0
      %v4595 = vld [vmem:[%s7] sm:$0x1]
      %v4596 = vld [vmem:[%s8] sm:$0x1]
      %v4597 = vsel %vm645, %v4469, 0.0
      %v4598 = vsel %vm645, %v4472, 0.0
      %v4599 = vadd.f32 %v4597, %v4598
      %v4600 = vsel %vm645, %v4477, 0.0
      %v4601 = vadd.f32 %v4599, %v4600
      %v4602 = vsel %vm645, %v4480, 0.0
      %v4603 = vadd.f32 %v4601, %v4602
      %v4604 = vsel %vm645, %v4485, 0.0
      %v4605 = vadd.f32 %v4603, %v4604
      %v4606 = vsel %vm645, %v4488, 0.0
      %v4607 = vadd.f32 %v4605, %v4606
      %v4608 = vsel %vm645, %v4493, 0.0
      %v4609 = vadd.f32 %v4607, %v4608
      %v4610 = vsel %vm645, %v4496, 0.0
      %v4611 = vadd.f32 %v4609, %v4610
      %v4612 = vsel %vm645, %v4501, 0.0
      %v4613 = vadd.f32 %v4611, %v4612
      %v4614 = vsel %vm645, %v4504, 0.0
      %v4615 = vadd.f32 %v4613, %v4614
      %v4616 = vsel %vm645, %v4509, 0.0
      %v4617 = vadd.f32 %v4615, %v4616
      %v4618 = vsel %vm645, %v4512, 0.0
      %v4619 = vadd.f32 %v4617, %v4618
      %v4620 = vsel %vm645, %v4517, 0.0
      %v4621 = vadd.f32 %v4619, %v4620
      %v4622 = vsel %vm645, %v4520, 0.0
      %v4623 = vadd.f32 %v4621, %v4622
      %v4624 = vsel %vm645, %v4525, 0.0
      %v4625 = vadd.f32 %v4623, %v4624
      %v4626 = vsel %vm645, %v4528, 0.0
      %v4627 = vadd.f32 %v4625, %v4626
      %v4628 = vsel %vm645, %v4533, 0.0
      %v4629 = vadd.f32 %v4627, %v4628
      %v4630 = vsel %vm645, %v4536, 0.0
      %v4631 = vadd.f32 %v4629, %v4630
      %v4632 = vsel %vm645, %v4541, 0.0
      %v4633 = vadd.f32 %v4631, %v4632
      %v4634 = vsel %vm645, %v4544, 0.0
      %v4635 = vadd.f32 %v4633, %v4634
      %v4636 = vsel %vm645, %v4549, 0.0
      %v4637 = vadd.f32 %v4635, %v4636
      %v4638 = vsel %vm645, %v4552, 0.0
      %v4639 = vadd.f32 %v4637, %v4638
      %v4640 = vsel %vm645, %v4557, 0.0
      %v4641 = vadd.f32 %v4639, %v4640
      %v4642 = vsel %vm645, %v4560, 0.0
      %v4643 = vadd.f32 %v4641, %v4642
      %v4644 = vsel %vm645, %v4565, 0.0
      %v4645 = vadd.f32 %v4643, %v4644
      %v4646 = vsel %vm645, %v4568, 0.0
      %v4647 = vadd.f32 %v4645, %v4646
      %v4648 = vsel %vm645, %v4573, 0.0
      %v4649 = vadd.f32 %v4647, %v4648
      %v4650 = vsel %vm645, %v4576, 0.0
      %v4651 = vadd.f32 %v4649, %v4650
      %v4652 = vsel %vm645, %v4581, 0.0
      %v4653 = vadd.f32 %v4651, %v4652
      %v4654 = vsel %vm645, %v4584, 0.0
      %v4655 = vadd.f32 %v4653, %v4654
      %v4656 = vsel %vm645, %v4589, 0.0
      %v4657 = vadd.f32 %v4655, %v4656
      %v4658 = vsel %vm645, %v4592, 0.0
      %v4659 = vadd.f32 %v4657, %v4658
      %v4660 = vrot.slane %v4659, 4
      %v4661 = vadd.f32 %v4659, %v4660
      %v4662 = vrot.slane %v4661, 2
      %v4663 = vadd.f32 %v4661, %v4662
      %v4664 = vrot.slane %v4663, 1
      %v4665 = vadd.f32 %v4663, %v4664
      %v4666 = vmul.f32 %v4665, 0.00390625
      %v4667 = vmul.f32 %v4469, %v4469
      %v4668 = vmul.f32 %v4472, %v4472
      %v4669 = vmul.f32 %v4477, %v4477
      %v4670 = vmul.f32 %v4480, %v4480
      %v4671 = vmul.f32 %v4485, %v4485
      %v4672 = vmul.f32 %v4488, %v4488
      %v4673 = vmul.f32 %v4493, %v4493
      %v4674 = vmul.f32 %v4496, %v4496
      %v4675 = vmul.f32 %v4501, %v4501
      %v4676 = vmul.f32 %v4504, %v4504
      %v4677 = vmul.f32 %v4509, %v4509
      %v4678 = vmul.f32 %v4512, %v4512
      %v4679 = vmul.f32 %v4517, %v4517
      %v4680 = vmul.f32 %v4520, %v4520
      %v4681 = vmul.f32 %v4525, %v4525
      %v4682 = vmul.f32 %v4528, %v4528
      %v4683 = vmul.f32 %v4533, %v4533
      %v4684 = vmul.f32 %v4536, %v4536
      %v4685 = vmul.f32 %v4541, %v4541
      %v4686 = vmul.f32 %v4544, %v4544
      %v4687 = vmul.f32 %v4549, %v4549
      %v4688 = vmul.f32 %v4552, %v4552
      %v4689 = vmul.f32 %v4557, %v4557
      %v4690 = vmul.f32 %v4560, %v4560
      %v4691 = vmul.f32 %v4565, %v4565
      %v4692 = vmul.f32 %v4568, %v4568
      %v4693 = vmul.f32 %v4573, %v4573
      %v4694 = vmul.f32 %v4576, %v4576
      %v4695 = vmul.f32 %v4581, %v4581
      %v4696 = vmul.f32 %v4584, %v4584
      %v4697 = vmul.f32 %v4589, %v4589
      %v4698 = vmul.f32 %v4592, %v4592
      %v4699 = vsel %vm645, %v4667, 0.0
      %v4700 = vsel %vm645, %v4668, 0.0
      %v4701 = vadd.f32 %v4699, %v4700
      %v4702 = vsel %vm645, %v4669, 0.0
      %v4703 = vadd.f32 %v4701, %v4702
      %v4704 = vsel %vm645, %v4670, 0.0
      %v4705 = vadd.f32 %v4703, %v4704
      %v4706 = vsel %vm645, %v4671, 0.0
      %v4707 = vadd.f32 %v4705, %v4706
      %v4708 = vsel %vm645, %v4672, 0.0
      %v4709 = vadd.f32 %v4707, %v4708
      %v4710 = vsel %vm645, %v4673, 0.0
      %v4711 = vadd.f32 %v4709, %v4710
      %v4712 = vsel %vm645, %v4674, 0.0
      %v4713 = vadd.f32 %v4711, %v4712
      %v4714 = vsel %vm645, %v4675, 0.0
      %v4715 = vadd.f32 %v4713, %v4714
      %v4716 = vsel %vm645, %v4676, 0.0
      %v4717 = vadd.f32 %v4715, %v4716
      %v4718 = vsel %vm645, %v4677, 0.0
      %v4719 = vadd.f32 %v4717, %v4718
      %v4720 = vsel %vm645, %v4678, 0.0
      %v4721 = vadd.f32 %v4719, %v4720
      %v4722 = vsel %vm645, %v4679, 0.0
      %v4723 = vadd.f32 %v4721, %v4722
      %v4724 = vsel %vm645, %v4680, 0.0
      %v4725 = vadd.f32 %v4723, %v4724
      %v4726 = vsel %vm645, %v4681, 0.0
      %v4727 = vadd.f32 %v4725, %v4726
      %v4728 = vsel %vm645, %v4682, 0.0
      %v4729 = vadd.f32 %v4727, %v4728
      %v4730 = vsel %vm645, %v4683, 0.0
      %v4731 = vadd.f32 %v4729, %v4730
      %v4732 = vsel %vm645, %v4684, 0.0
      %v4733 = vadd.f32 %v4731, %v4732
      %v4734 = vsel %vm645, %v4685, 0.0
      %v4735 = vadd.f32 %v4733, %v4734
      %v4736 = vsel %vm645, %v4686, 0.0
      %v4737 = vadd.f32 %v4735, %v4736
      %v4738 = vsel %vm645, %v4687, 0.0
      %v4739 = vadd.f32 %v4737, %v4738
      %v4740 = vsel %vm645, %v4688, 0.0
      %v4741 = vadd.f32 %v4739, %v4740
      %v4742 = vsel %vm645, %v4689, 0.0
      %v4743 = vadd.f32 %v4741, %v4742
      %v4744 = vsel %vm645, %v4690, 0.0
      %v4745 = vadd.f32 %v4743, %v4744
      %v4746 = vsel %vm645, %v4691, 0.0
      %v4747 = vadd.f32 %v4745, %v4746
      %v4748 = vsel %vm645, %v4692, 0.0
      %v4749 = vadd.f32 %v4747, %v4748
      %v4750 = vsel %vm645, %v4693, 0.0
      %v4751 = vadd.f32 %v4749, %v4750
      %v4752 = vsel %vm645, %v4694, 0.0
      %v4753 = vadd.f32 %v4751, %v4752
      %v4754 = vsel %vm645, %v4695, 0.0
      %v4755 = vadd.f32 %v4753, %v4754
      %v4756 = vsel %vm645, %v4696, 0.0
      %v4757 = vadd.f32 %v4755, %v4756
      %v4758 = vsel %vm645, %v4697, 0.0
      %v4759 = vadd.f32 %v4757, %v4758
      %v4760 = vsel %vm645, %v4698, 0.0
      %v4761 = vadd.f32 %v4759, %v4760
      %v4762 = vrot.slane %v4761, 4
      %v4763 = vadd.f32 %v4761, %v4762
      %v4764 = vrot.slane %v4763, 2
      %v4765 = vadd.f32 %v4763, %v4764
      %v4766 = vrot.slane %v4765, 1
      %v4767 = vadd.f32 %v4765, %v4766
      %v4768 = vmul.f32 %v4767, 0.00390625
      %v4769 = vmul.f32 %v4666, %v4666
      %v4770 = vsub.f32 %v4768, %v4769
      %v4771 = vmax.f32 %v4770, 0.0
      %v4772 = vadd.f32 %v4771, 1e-05
      %v4773 = vrsqrt.pop %v4772
      %v4774 = vmul.f32 %v4773, %v4595
      %v4775 = vmul.f32 %v4666, %v4774
      %v4776 = vsub.f32 %v4596, %v4775
      %v4777 = vlaneseq
      %v4778 = vshrl.u32 %v4777, 7
      %v4779 = vsub.s32 0, %v4778
      %v4780 = vrot.slane %v4774, %v4779
      %v4781 = vmul.f32 %v4469, %v4780
      %v4782 = vmul.f32 %v4472, %v4780
      %v4783 = vmul.f32 %v4477, %v4780
      %v4784 = vmul.f32 %v4480, %v4780
      %v4785 = vmul.f32 %v4485, %v4780
      %v4786 = vmul.f32 %v4488, %v4780
      %v4787 = vmul.f32 %v4493, %v4780
      %v4788 = vmul.f32 %v4496, %v4780
      %v4789 = vmul.f32 %v4501, %v4780
      %v4790 = vmul.f32 %v4504, %v4780
      %v4791 = vmul.f32 %v4509, %v4780
      %v4792 = vmul.f32 %v4512, %v4780
      %v4793 = vmul.f32 %v4517, %v4780
      %v4794 = vmul.f32 %v4520, %v4780
      %v4795 = vmul.f32 %v4525, %v4780
      %v4796 = vmul.f32 %v4528, %v4780
      %v4797 = vmul.f32 %v4533, %v4780
      %v4798 = vmul.f32 %v4536, %v4780
      %v4799 = vmul.f32 %v4541, %v4780
      %v4800 = vmul.f32 %v4544, %v4780
      %v4801 = vmul.f32 %v4549, %v4780
      %v4802 = vmul.f32 %v4552, %v4780
      %v4803 = vmul.f32 %v4557, %v4780
      %v4804 = vmul.f32 %v4560, %v4780
      %v4805 = vmul.f32 %v4565, %v4780
      %v4806 = vmul.f32 %v4568, %v4780
      %v4807 = vmul.f32 %v4573, %v4780
      %v4808 = vmul.f32 %v4576, %v4780
      %v4809 = vmul.f32 %v4581, %v4780
      %v4810 = vmul.f32 %v4584, %v4780
      %v4811 = vmul.f32 %v4589, %v4780
      %v4812 = vmul.f32 %v4592, %v4780
      %v4814 = vlaneseq
      %v4815 = vshrl.u32 %v4814, 7
      %v4816 = vsub.s32 0, %v4815
      %v4817 = vrot.slane %v4776, %v4816
      %v4819 = vadd.f32 %v4781, %v4817
      %v4820 = vadd.f32 %v4782, %v4817
      %v4821 = vadd.f32 %v4783, %v4817
      %v4822 = vadd.f32 %v4784, %v4817
      %v4823 = vadd.f32 %v4785, %v4817
      %v4824 = vadd.f32 %v4786, %v4817
      %v4825 = vadd.f32 %v4787, %v4817
      %v4826 = vadd.f32 %v4788, %v4817
      %v4827 = vadd.f32 %v4789, %v4817
      %v4828 = vadd.f32 %v4790, %v4817
      %v4829 = vadd.f32 %v4791, %v4817
      %v4830 = vadd.f32 %v4792, %v4817
      %v4831 = vadd.f32 %v4793, %v4817
      %v4832 = vadd.f32 %v4794, %v4817
      %v4833 = vadd.f32 %v4795, %v4817
      %v4834 = vadd.f32 %v4796, %v4817
      %v4835 = vadd.f32 %v4797, %v4817
      %v4836 = vadd.f32 %v4798, %v4817
      %v4837 = vadd.f32 %v4799, %v4817
      %v4838 = vadd.f32 %v4800, %v4817
      %v4839 = vadd.f32 %v4801, %v4817
      %v4840 = vadd.f32 %v4802, %v4817
      %v4841 = vadd.f32 %v4803, %v4817
      %v4842 = vadd.f32 %v4804, %v4817
      %v4843 = vadd.f32 %v4805, %v4817
      %v4844 = vadd.f32 %v4806, %v4817
      %v4845 = vadd.f32 %v4807, %v4817
      %v4846 = vadd.f32 %v4808, %v4817
      %v4847 = vadd.f32 %v4809, %v4817
      %v4848 = vadd.f32 %v4810, %v4817
      %v4849 = vadd.f32 %v4811, %v4817
      %v4850 = vadd.f32 %v4812, %v4817
      %vm4851 = vcmp.gt.f32.partialorder %v4819, 0.0
      %vm4852 = vcmp.gt.f32.partialorder %v4820, 0.0
      %vm4853 = vcmp.gt.f32.partialorder %v4821, 0.0
      %vm4854 = vcmp.gt.f32.partialorder %v4822, 0.0
      %vm4855 = vcmp.gt.f32.partialorder %v4823, 0.0
      %vm4856 = vcmp.gt.f32.partialorder %v4824, 0.0
      %vm4857 = vcmp.gt.f32.partialorder %v4825, 0.0
      %vm4858 = vcmp.gt.f32.partialorder %v4826, 0.0
      %vm4859 = vcmp.gt.f32.partialorder %v4827, 0.0
      %vm4860 = vcmp.gt.f32.partialorder %v4828, 0.0
      %vm4861 = vcmp.gt.f32.partialorder %v4829, 0.0
      %vm4862 = vcmp.gt.f32.partialorder %v4830, 0.0
      %vm4863 = vcmp.gt.f32.partialorder %v4831, 0.0
      %vm4864 = vcmp.gt.f32.partialorder %v4832, 0.0
      %vm4865 = vcmp.gt.f32.partialorder %v4833, 0.0
      %vm4866 = vcmp.gt.f32.partialorder %v4834, 0.0
      %vm4867 = vcmp.gt.f32.partialorder %v4835, 0.0
      %vm4868 = vcmp.gt.f32.partialorder %v4836, 0.0
      %vm4869 = vcmp.gt.f32.partialorder %v4837, 0.0
      %vm4870 = vcmp.gt.f32.partialorder %v4838, 0.0
      %vm4871 = vcmp.gt.f32.partialorder %v4839, 0.0
      %vm4872 = vcmp.gt.f32.partialorder %v4840, 0.0
      %vm4873 = vcmp.gt.f32.partialorder %v4841, 0.0
      %vm4874 = vcmp.gt.f32.partialorder %v4842, 0.0
      %vm4875 = vcmp.gt.f32.partialorder %v4843, 0.0
      %vm4876 = vcmp.gt.f32.partialorder %v4844, 0.0
      %vm4877 = vcmp.gt.f32.partialorder %v4845, 0.0
      %vm4878 = vcmp.gt.f32.partialorder %v4846, 0.0
      %vm4879 = vcmp.gt.f32.partialorder %v4847, 0.0
      %vm4880 = vcmp.gt.f32.partialorder %v4848, 0.0
      %vm4881 = vcmp.gt.f32.partialorder %v4849, 0.0
      %vm4882 = vcmp.gt.f32.partialorder %v4850, 0.0
      %v4883 = vmul.f32 %v4819, 0.01
      %v4884 = vmul.f32 %v4820, 0.01
      %v4885 = vmul.f32 %v4821, 0.01
      %v4886 = vmul.f32 %v4822, 0.01
      %v4887 = vmul.f32 %v4823, 0.01
      %v4888 = vmul.f32 %v4824, 0.01
      %v4889 = vmul.f32 %v4825, 0.01
      %v4890 = vmul.f32 %v4826, 0.01
      %v4891 = vmul.f32 %v4827, 0.01
      %v4892 = vmul.f32 %v4828, 0.01
      %v4893 = vmul.f32 %v4829, 0.01
      %v4894 = vmul.f32 %v4830, 0.01
      %v4895 = vmul.f32 %v4831, 0.01
      %v4896 = vmul.f32 %v4832, 0.01
      %v4897 = vmul.f32 %v4833, 0.01
      %v4898 = vmul.f32 %v4834, 0.01
      %v4899 = vmul.f32 %v4835, 0.01
      %v4900 = vmul.f32 %v4836, 0.01
      %v4901 = vmul.f32 %v4837, 0.01
      %v4902 = vmul.f32 %v4838, 0.01
      %v4903 = vmul.f32 %v4839, 0.01
      %v4904 = vmul.f32 %v4840, 0.01
      %v4905 = vmul.f32 %v4841, 0.01
      %v4906 = vmul.f32 %v4842, 0.01
      %v4907 = vmul.f32 %v4843, 0.01
      %v4908 = vmul.f32 %v4844, 0.01
      %v4909 = vmul.f32 %v4845, 0.01
      %v4910 = vmul.f32 %v4846, 0.01
      %v4911 = vmul.f32 %v4847, 0.01
      %v4912 = vmul.f32 %v4848, 0.01
      %v4913 = vmul.f32 %v4849, 0.01
      %v4914 = vmul.f32 %v4850, 0.01
      %v4915 = vsel %vm4851, %v4819, %v4883
      %v4916 = vsel %vm4852, %v4820, %v4884
      %v4917 = vsel %vm4853, %v4821, %v4885
      %v4918 = vsel %vm4854, %v4822, %v4886
      %v4919 = vsel %vm4855, %v4823, %v4887
      %v4920 = vsel %vm4856, %v4824, %v4888
      %v4921 = vsel %vm4857, %v4825, %v4889
      %v4922 = vsel %vm4858, %v4826, %v4890
      %v4923 = vsel %vm4859, %v4827, %v4891
      %v4924 = vsel %vm4860, %v4828, %v4892
      %v4925 = vsel %vm4861, %v4829, %v4893
      %v4926 = vsel %vm4862, %v4830, %v4894
      %v4927 = vsel %vm4863, %v4831, %v4895
      %v4928 = vsel %vm4864, %v4832, %v4896
      %v4929 = vsel %vm4865, %v4833, %v4897
      %v4930 = vsel %vm4866, %v4834, %v4898
      %v4931 = vsel %vm4867, %v4835, %v4899
      %v4932 = vsel %vm4868, %v4836, %v4900
      %v4933 = vsel %vm4869, %v4837, %v4901
      %v4934 = vsel %vm4870, %v4838, %v4902
      %v4935 = vsel %vm4871, %v4839, %v4903
      %v4936 = vsel %vm4872, %v4840, %v4904
      %v4937 = vsel %vm4873, %v4841, %v4905
      %v4938 = vsel %vm4874, %v4842, %v4906
      %v4939 = vsel %vm4875, %v4843, %v4907
      %v4940 = vsel %vm4876, %v4844, %v4908
      %v4941 = vsel %vm4877, %v4845, %v4909
      %v4942 = vsel %vm4878, %v4846, %v4910
      %v4943 = vsel %vm4879, %v4847, %v4911
      %v4944 = vsel %vm4880, %v4848, %v4912
      %v4945 = vsel %vm4881, %v4849, %v4913
      %v4946 = vsel %vm4882, %v4850, %v4914
      %v4947 = vpack.c.bf16 %v4916, %v4915
      %v4948 = vpack.c.bf16 %v4918, %v4917
      %v4949 = vpack.c.bf16 %v4920, %v4919
      %v4950 = vpack.c.bf16 %v4922, %v4921
      %v4951 = vpack.c.bf16 %v4924, %v4923
      %v4952 = vpack.c.bf16 %v4926, %v4925
      %v4953 = vpack.c.bf16 %v4928, %v4927
      %v4954 = vpack.c.bf16 %v4930, %v4929
      %v4955 = vpack.c.bf16 %v4932, %v4931
      %v4956 = vpack.c.bf16 %v4934, %v4933
      %v4957 = vpack.c.bf16 %v4936, %v4935
      %v4958 = vpack.c.bf16 %v4938, %v4937
      %v4959 = vpack.c.bf16 %v4940, %v4939
      %v4960 = vpack.c.bf16 %v4942, %v4941
      %v4961 = vpack.c.bf16 %v4944, %v4943
      %v4962 = vpack.c.bf16 %v4946, %v4945
      %v4964 = vshrl.u32 %v4947, 16
      %v4966 = vrot.slane %v4964, 7
      %v4967 = vshll.u32 %v4947, 16
      %v4969 = vor.u32 %v4966, %v4967
      %v4971 = vshrl.u32 %v4948, 16
      %v4973 = vrot.slane %v4971, 7
      %v4974 = vshll.u32 %v4948, 16
      %v4976 = vor.u32 %v4973, %v4974
      %v4978 = vshrl.u32 %v4949, 16
      %v4980 = vrot.slane %v4978, 7
      %v4981 = vshll.u32 %v4949, 16
      %v4983 = vor.u32 %v4980, %v4981
      %v4985 = vshrl.u32 %v4950, 16
      %v4987 = vrot.slane %v4985, 7
      %v4988 = vshll.u32 %v4950, 16
      %v4990 = vor.u32 %v4987, %v4988
      %v4992 = vshrl.u32 %v4951, 16
      %v4994 = vrot.slane %v4992, 7
      %v4995 = vshll.u32 %v4951, 16
      %v4997 = vor.u32 %v4994, %v4995
      %v4999 = vshrl.u32 %v4952, 16
      %v5001 = vrot.slane %v4999, 7
      %v5002 = vshll.u32 %v4952, 16
      %v5004 = vor.u32 %v5001, %v5002
      %v5006 = vshrl.u32 %v4953, 16
      %v5008 = vrot.slane %v5006, 7
      %v5009 = vshll.u32 %v4953, 16
      %v5011 = vor.u32 %v5008, %v5009
      %v5013 = vshrl.u32 %v4954, 16
      %v5015 = vrot.slane %v5013, 7
      %v5016 = vshll.u32 %v4954, 16
      %v5018 = vor.u32 %v5015, %v5016
      %v5020 = vshrl.u32 %v4955, 16
      %v5022 = vrot.slane %v5020, 7
      %v5023 = vshll.u32 %v4955, 16
      %v5025 = vor.u32 %v5022, %v5023
      %v5027 = vshrl.u32 %v4956, 16
      %v5029 = vrot.slane %v5027, 7
      %v5030 = vshll.u32 %v4956, 16
      %v5032 = vor.u32 %v5029, %v5030
      %v5034 = vshrl.u32 %v4957, 16
      %v5036 = vrot.slane %v5034, 7
      %v5037 = vshll.u32 %v4957, 16
      %v5039 = vor.u32 %v5036, %v5037
      %v5041 = vshrl.u32 %v4958, 16
      %v5043 = vrot.slane %v5041, 7
      %v5044 = vshll.u32 %v4958, 16
      %v5046 = vor.u32 %v5043, %v5044
      %v5048 = vshrl.u32 %v4959, 16
      %v5050 = vrot.slane %v5048, 7
      %v5051 = vshll.u32 %v4959, 16
      %v5053 = vor.u32 %v5050, %v5051
      %v5055 = vshrl.u32 %v4960, 16
      %v5057 = vrot.slane %v5055, 7
      %v5058 = vshll.u32 %v4960, 16
      %v5060 = vor.u32 %v5057, %v5058
      %v5062 = vshrl.u32 %v4961, 16
      %v5064 = vrot.slane %v5062, 7
      %v5065 = vshll.u32 %v4961, 16
      %v5067 = vor.u32 %v5064, %v5065
      %v5069 = vshrl.u32 %v4962, 16
      %v5071 = vrot.slane %v5069, 7
      %v5072 = vshll.u32 %v4962, 16
      %v5074 = vor.u32 %v5071, %v5072
      %v5107 = vsel %vm2376, 0, %v4969
      %v5108 = vsel %vm2376, 0, %v4976
      %v5109 = vsel %vm2376, 0, %v4983
      %v5110 = vsel %vm2376, 0, %v4990
      %v5111 = vsel %vm2376, 0, %v4997
      %v5112 = vsel %vm2376, 0, %v5004
      %v5113 = vsel %vm2376, 0, %v5011
      %v5114 = vsel %vm2376, 0, %v5018
      %v5115 = vsel %vm2376, 0, %v5025
      %v5116 = vsel %vm2376, 0, %v5032
      %v5117 = vsel %vm2376, 0, %v5039
      %v5118 = vsel %vm2376, 0, %v5046
      %v5119 = vsel %vm2376, 0, %v5053
      %v5120 = vsel %vm2376, 0, %v5060
      %v5121 = vsel %vm2376, 0, %v5067
      %v5122 = vsel %vm2376, 0, %v5074
      %v5123 = vsel %vm2376, %v4966, 0
      %v5124 = vsel %vm2376, %v4973, 0
      %v5125 = vsel %vm2376, %v4980, 0
      %v5126 = vsel %vm2376, %v4987, 0
      %v5127 = vsel %vm2376, %v4994, 0
      %v5128 = vsel %vm2376, %v5001, 0
      %v5129 = vsel %vm2376, %v5008, 0
      %v5130 = vsel %vm2376, %v5015, 0
      %v5131 = vsel %vm2376, %v5022, 0
      %v5132 = vsel %vm2376, %v5029, 0
      %v5133 = vsel %vm2376, %v5036, 0
      %v5134 = vsel %vm2376, %v5043, 0
      %v5135 = vsel %vm2376, %v5050, 0
      %v5136 = vsel %vm2376, %v5057, 0
      %v5137 = vsel %vm2376, %v5064, 0
      %v5138 = vsel %vm2376, %v5071, 0
      %v5140 = vshrl.u32 %v5107, 16
      %v5142 = vshll.u32 %v5107, 16
      %v5144 = vrot.slane %v5142, 1
      %v5145 = vor.u32 %v5140, %v5144
      %v5147 = vshll.u32 %v5123, 16
      %v5149 = vrot.slane %v5147, 1
      %v5150 = vsel %vm2411, %v5145, %v5149
      %v5152 = vshrl.u32 %v5108, 16
      %v5154 = vshll.u32 %v5108, 16
      %v5156 = vrot.slane %v5154, 1
      %v5157 = vor.u32 %v5152, %v5156
      %v5159 = vshll.u32 %v5124, 16
      %v5161 = vrot.slane %v5159, 1
      %v5162 = vsel %vm2411, %v5157, %v5161
      %v5164 = vshrl.u32 %v5109, 16
      %v5166 = vshll.u32 %v5109, 16
      %v5168 = vrot.slane %v5166, 1
      %v5169 = vor.u32 %v5164, %v5168
      %v5171 = vshll.u32 %v5125, 16
      %v5173 = vrot.slane %v5171, 1
      %v5174 = vsel %vm2411, %v5169, %v5173
      %v5176 = vshrl.u32 %v5110, 16
      %v5178 = vshll.u32 %v5110, 16
      %v5180 = vrot.slane %v5178, 1
      %v5181 = vor.u32 %v5176, %v5180
      %v5183 = vshll.u32 %v5126, 16
      %v5185 = vrot.slane %v5183, 1
      %v5186 = vsel %vm2411, %v5181, %v5185
      %v5188 = vshrl.u32 %v5111, 16
      %v5190 = vshll.u32 %v5111, 16
      %v5192 = vrot.slane %v5190, 1
      %v5193 = vor.u32 %v5188, %v5192
      %v5195 = vshll.u32 %v5127, 16
      %v5197 = vrot.slane %v5195, 1
      %v5198 = vsel %vm2411, %v5193, %v5197
      %v5200 = vshrl.u32 %v5112, 16
      %v5202 = vshll.u32 %v5112, 16
      %v5204 = vrot.slane %v5202, 1
      %v5205 = vor.u32 %v5200, %v5204
      %v5207 = vshll.u32 %v5128, 16
      %v5209 = vrot.slane %v5207, 1
      %v5210 = vsel %vm2411, %v5205, %v5209
      %v5212 = vshrl.u32 %v5113, 16
      %v5214 = vshll.u32 %v5113, 16
      %v5216 = vrot.slane %v5214, 1
      %v5217 = vor.u32 %v5212, %v5216
      %v5219 = vshll.u32 %v5129, 16
      %v5221 = vrot.slane %v5219, 1
      %v5222 = vsel %vm2411, %v5217, %v5221
      %v5224 = vshrl.u32 %v5114, 16
      %v5226 = vshll.u32 %v5114, 16
      %v5228 = vrot.slane %v5226, 1
      %v5229 = vor.u32 %v5224, %v5228
      %v5231 = vshll.u32 %v5130, 16
      %v5233 = vrot.slane %v5231, 1
      %v5234 = vsel %vm2411, %v5229, %v5233
      %v5236 = vshrl.u32 %v5115, 16
      %v5238 = vshll.u32 %v5115, 16
      %v5240 = vrot.slane %v5238, 1
      %v5241 = vor.u32 %v5236, %v5240
      %v5243 = vshll.u32 %v5131, 16
      %v5245 = vrot.slane %v5243, 1
      %v5246 = vsel %vm2411, %v5241, %v5245
      %v5248 = vshrl.u32 %v5116, 16
      %v5250 = vshll.u32 %v5116, 16
      %v5252 = vrot.slane %v5250, 1
      %v5253 = vor.u32 %v5248, %v5252
      %v5255 = vshll.u32 %v5132, 16
      %v5257 = vrot.slane %v5255, 1
      %v5258 = vsel %vm2411, %v5253, %v5257
      %v5260 = vshrl.u32 %v5117, 16
      %v5262 = vshll.u32 %v5117, 16
      %v5264 = vrot.slane %v5262, 1
      %v5265 = vor.u32 %v5260, %v5264
      %v5267 = vshll.u32 %v5133, 16
      %v5269 = vrot.slane %v5267, 1
      %v5270 = vsel %vm2411, %v5265, %v5269
      %v5272 = vshrl.u32 %v5118, 16
      %v5274 = vshll.u32 %v5118, 16
      %v5276 = vrot.slane %v5274, 1
      %v5277 = vor.u32 %v5272, %v5276
      %v5279 = vshll.u32 %v5134, 16
      %v5281 = vrot.slane %v5279, 1
      %v5282 = vsel %vm2411, %v5277, %v5281
      %v5284 = vshrl.u32 %v5119, 16
      %v5286 = vshll.u32 %v5119, 16
      %v5288 = vrot.slane %v5286, 1
      %v5289 = vor.u32 %v5284, %v5288
      %v5291 = vshll.u32 %v5135, 16
      %v5293 = vrot.slane %v5291, 1
      %v5294 = vsel %vm2411, %v5289, %v5293
      %v5296 = vshrl.u32 %v5120, 16
      %v5298 = vshll.u32 %v5120, 16
      %v5300 = vrot.slane %v5298, 1
      %v5301 = vor.u32 %v5296, %v5300
      %v5303 = vshll.u32 %v5136, 16
      %v5305 = vrot.slane %v5303, 1
      %v5306 = vsel %vm2411, %v5301, %v5305
      %v5308 = vshrl.u32 %v5121, 16
      %v5310 = vshll.u32 %v5121, 16
      %v5312 = vrot.slane %v5310, 1
      %v5313 = vor.u32 %v5308, %v5312
      %v5315 = vshll.u32 %v5137, 16
      %v5317 = vrot.slane %v5315, 1
      %v5318 = vsel %vm2411, %v5313, %v5317
      %5319 = vrot.lane.b32.xlu0 %v5150, 4
      %v5320 = vpop.permute.xlu0 %5319
      %5321 = vrot.lane.b32.xlu0 %v5162, 4
      %v5322 = vpop.permute.xlu0 %5321
      %5323 = vrot.lane.b32.xlu0 %v5174, 4
      %v5324 = vpop.permute.xlu0 %5323
      %5325 = vrot.lane.b32.xlu0 %v5186, 4
      %v5326 = vpop.permute.xlu0 %5325
      %5327 = vrot.lane.b32.xlu0 %v5198, 4
      %v5328 = vpop.permute.xlu0 %5327
      %5329 = vrot.lane.b32.xlu0 %v5210, 4
      %v5330 = vpop.permute.xlu0 %5329
      %5331 = vrot.lane.b32.xlu0 %v5222, 4
      %v5332 = vpop.permute.xlu0 %5331
      %5333 = vrot.lane.b32.xlu0 %v5234, 4
      %v5334 = vpop.permute.xlu0 %5333
      %5335 = vrot.lane.b32.xlu0 %v5246, 4
      %v5336 = vpop.permute.xlu0 %5335
      %5337 = vrot.lane.b32.xlu0 %v5258, 4
      %v5338 = vpop.permute.xlu0 %5337
      %5339 = vrot.lane.b32.xlu0 %v5270, 4
      %v5340 = vpop.permute.xlu0 %5339
      %5341 = vrot.lane.b32.xlu0 %v5282, 4
      %v5342 = vpop.permute.xlu0 %5341
      %5343 = vrot.lane.b32.xlu0 %v5294, 4
      %v5344 = vpop.permute.xlu0 %5343
      %5345 = vrot.lane.b32.xlu0 %v5306, 4
      %v5346 = vpop.permute.xlu0 %5345
      %5347 = vrot.lane.b32.xlu0 %v5318, 4
      %v5348 = vpop.permute.xlu0 %5347
      %v5379 = vrot.slane %v5107, 1
      %v5380 = vrot.slane %v5123, 1
      %v5381 = vsel %vm2668, %v5379, %v5380
      %v5382 = vrot.slane %v5108, 1
      %v5383 = vrot.slane %v5124, 1
      %v5384 = vsel %vm2668, %v5382, %v5383
      %v5385 = vrot.slane %v5109, 1
      %v5386 = vrot.slane %v5125, 1
      %v5387 = vsel %vm2668, %v5385, %v5386
      %v5388 = vrot.slane %v5110, 1
      %v5389 = vrot.slane %v5126, 1
      %v5390 = vsel %vm2668, %v5388, %v5389
      %v5391 = vrot.slane %v5111, 1
      %v5392 = vrot.slane %v5127, 1
      %v5393 = vsel %vm2668, %v5391, %v5392
      %v5394 = vrot.slane %v5112, 1
      %v5395 = vrot.slane %v5128, 1
      %v5396 = vsel %vm2668, %v5394, %v5395
      %v5397 = vrot.slane %v5113, 1
      %v5398 = vrot.slane %v5129, 1
      %v5399 = vsel %vm2668, %v5397, %v5398
      %v5400 = vrot.slane %v5114, 1
      %v5401 = vrot.slane %v5130, 1
      %v5402 = vsel %vm2668, %v5400, %v5401
      %v5403 = vrot.slane %v5115, 1
      %v5404 = vrot.slane %v5131, 1
      %v5405 = vsel %vm2668, %v5403, %v5404
      %v5406 = vrot.slane %v5116, 1
      %v5407 = vrot.slane %v5132, 1
      %v5408 = vsel %vm2668, %v5406, %v5407
      %v5409 = vrot.slane %v5117, 1
      %v5410 = vrot.slane %v5133, 1
      %v5411 = vsel %vm2668, %v5409, %v5410
      %v5412 = vrot.slane %v5118, 1
      %v5413 = vrot.slane %v5134, 1
      %v5414 = vsel %vm2668, %v5412, %v5413
      %v5415 = vrot.slane %v5119, 1
      %v5416 = vrot.slane %v5135, 1
      %v5417 = vsel %vm2668, %v5415, %v5416
      %v5418 = vrot.slane %v5120, 1
      %v5419 = vrot.slane %v5136, 1
      %v5420 = vsel %vm2668, %v5418, %v5419
      %v5421 = vrot.slane %v5121, 1
      %v5422 = vrot.slane %v5137, 1
      %v5423 = vsel %vm2668, %v5421, %v5422
      %5424 = vrot.lane.b32.xlu0 %v5381, 8
      %v5425 = vpop.permute.xlu0 %5424
      %5426 = vrot.lane.b32.xlu0 %v5384, 8
      %v5427 = vpop.permute.xlu0 %5426
      %5428 = vrot.lane.b32.xlu0 %v5387, 8
      %v5429 = vpop.permute.xlu0 %5428
      %5430 = vrot.lane.b32.xlu0 %v5390, 8
      %v5431 = vpop.permute.xlu0 %5430
      %5432 = vrot.lane.b32.xlu0 %v5393, 8
      %v5433 = vpop.permute.xlu0 %5432
      %5434 = vrot.lane.b32.xlu0 %v5396, 8
      %v5435 = vpop.permute.xlu0 %5434
      %5436 = vrot.lane.b32.xlu0 %v5399, 8
      %v5437 = vpop.permute.xlu0 %5436
      %5438 = vrot.lane.b32.xlu0 %v5402, 8
      %v5439 = vpop.permute.xlu0 %5438
      %5440 = vrot.lane.b32.xlu0 %v5405, 8
      %v5441 = vpop.permute.xlu0 %5440
      %5442 = vrot.lane.b32.xlu0 %v5408, 8
      %v5443 = vpop.permute.xlu0 %5442
      %5444 = vrot.lane.b32.xlu0 %v5411, 8
      %v5445 = vpop.permute.xlu0 %5444
      %5446 = vrot.lane.b32.xlu0 %v5414, 8
      %v5447 = vpop.permute.xlu0 %5446
      %5448 = vrot.lane.b32.xlu0 %v5417, 8
      %v5449 = vpop.permute.xlu0 %5448
      %5450 = vrot.lane.b32.xlu0 %v5420, 8
      %v5451 = vpop.permute.xlu0 %5450
      %5452 = vrot.lane.b32.xlu0 %v5423, 8
      %v5453 = vpop.permute.xlu0 %5452
      %5455 = vrot.lane.b32.xlu0 %v5107, 12
      %v5456 = vpop.permute.xlu0 %5455
      %5457 = vrot.lane.b32.xlu0 %v5108, 12
      %v5458 = vpop.permute.xlu0 %5457
      %5459 = vrot.lane.b32.xlu0 %v5109, 12
      %v5460 = vpop.permute.xlu0 %5459
      %5461 = vrot.lane.b32.xlu0 %v5110, 12
      %v5462 = vpop.permute.xlu0 %5461
      %5463 = vrot.lane.b32.xlu0 %v5111, 12
      %v5464 = vpop.permute.xlu0 %5463
      %5465 = vrot.lane.b32.xlu0 %v5112, 12
      %v5466 = vpop.permute.xlu0 %5465
      %5467 = vrot.lane.b32.xlu0 %v5113, 12
      %v5468 = vpop.permute.xlu0 %5467
      %5469 = vrot.lane.b32.xlu0 %v5114, 12
      %v5470 = vpop.permute.xlu0 %5469
      %5471 = vrot.lane.b32.xlu0 %v5115, 12
      %v5472 = vpop.permute.xlu0 %5471
      %5473 = vrot.lane.b32.xlu0 %v5116, 12
      %v5474 = vpop.permute.xlu0 %5473
      %5475 = vrot.lane.b32.xlu0 %v5117, 12
      %v5476 = vpop.permute.xlu0 %5475
      %5477 = vrot.lane.b32.xlu0 %v5118, 12
      %v5478 = vpop.permute.xlu0 %5477
      %5479 = vrot.lane.b32.xlu0 %v5119, 12
      %v5480 = vpop.permute.xlu0 %5479
      %5481 = vrot.lane.b32.xlu0 %v5120, 12
      %v5482 = vpop.permute.xlu0 %5481
      %5483 = vrot.lane.b32.xlu0 %v5121, 12
      %v5484 = vpop.permute.xlu0 %5483
      %5485 = vrot.lane.b32.xlu0 %v5122, 12
      %v5486 = vpop.permute.xlu0 %5485
      %v5488 = vshrl.u32 %v5122, 16
      %v5490 = vshll.u32 %v5122, 16
      %v5492 = vrot.slane %v5490, 1
      %v5493 = vor.u32 %v5488, %v5492
      %v5495 = vshll.u32 %v5138, 16
      %v5497 = vrot.slane %v5495, 1
      %v5498 = vsel %vm2411, %v5493, %v5497
      %5499 = vrot.lane.b32.xlu0 %v5150, 16
      %v5500 = vpop.permute.xlu0 %5499
      %5501 = vrot.lane.b32.xlu0 %v5162, 16
      %v5502 = vpop.permute.xlu0 %5501
      %5503 = vrot.lane.b32.xlu0 %v5174, 16
      %v5504 = vpop.permute.xlu0 %5503
      %5505 = vrot.lane.b32.xlu0 %v5186, 16
      %v5506 = vpop.permute.xlu0 %5505
      %5507 = vrot.lane.b32.xlu0 %v5198, 16
      %v5508 = vpop.permute.xlu0 %5507
      %5509 = vrot.lane.b32.xlu0 %v5210, 16
      %v5510 = vpop.permute.xlu0 %5509
      %5511 = vrot.lane.b32.xlu0 %v5222, 16
      %v5512 = vpop.permute.xlu0 %5511
      %5513 = vrot.lane.b32.xlu0 %v5234, 16
      %v5514 = vpop.permute.xlu0 %5513
      %5515 = vrot.lane.b32.xlu0 %v5246, 16
      %v5516 = vpop.permute.xlu0 %5515
      %5517 = vrot.lane.b32.xlu0 %v5258, 16
      %v5518 = vpop.permute.xlu0 %5517
      %5519 = vrot.lane.b32.xlu0 %v5270, 16
      %v5520 = vpop.permute.xlu0 %5519
      %5521 = vrot.lane.b32.xlu0 %v5282, 16
      %v5522 = vpop.permute.xlu0 %5521
      %5523 = vrot.lane.b32.xlu0 %v5294, 16
      %v5524 = vpop.permute.xlu0 %5523
      %5525 = vrot.lane.b32.xlu0 %v5306, 16
      %v5526 = vpop.permute.xlu0 %5525
      %5527 = vrot.lane.b32.xlu0 %v5318, 16
      %v5528 = vpop.permute.xlu0 %5527
      %5529 = vrot.lane.b32.xlu0 %v5498, 16
      %v5530 = vpop.permute.xlu0 %5529
      %v5532 = vrot.slane %v5122, 1
      %v5533 = vrot.slane %v5138, 1
      %v5534 = vsel %vm2668, %v5532, %v5533
      %5535 = vrot.lane.b32.xlu0 %v5381, 20
      %v5536 = vpop.permute.xlu0 %5535
      %5537 = vrot.lane.b32.xlu0 %v5384, 20
      %v5538 = vpop.permute.xlu0 %5537
      %5539 = vrot.lane.b32.xlu0 %v5387, 20
      %v5540 = vpop.permute.xlu0 %5539
      %5541 = vrot.lane.b32.xlu0 %v5390, 20
      %v5542 = vpop.permute.xlu0 %5541
      %5543 = vrot.lane.b32.xlu0 %v5393, 20
      %v5544 = vpop.permute.xlu0 %5543
      %5545 = vrot.lane.b32.xlu0 %v5396, 20
      %v5546 = vpop.permute.xlu0 %5545
      %5547 = vrot.lane.b32.xlu0 %v5399, 20
      %v5548 = vpop.permute.xlu0 %5547
      %5549 = vrot.lane.b32.xlu0 %v5402, 20
      %v5550 = vpop.permute.xlu0 %5549
      %5551 = vrot.lane.b32.xlu0 %v5405, 20
      %v5552 = vpop.permute.xlu0 %5551
      %5553 = vrot.lane.b32.xlu0 %v5408, 20
      %v5554 = vpop.permute.xlu0 %5553
      %5555 = vrot.lane.b32.xlu0 %v5411, 20
      %v5556 = vpop.permute.xlu0 %5555
      %5557 = vrot.lane.b32.xlu0 %v5414, 20
      %v5558 = vpop.permute.xlu0 %5557
      %5559 = vrot.lane.b32.xlu0 %v5417, 20
      %v5560 = vpop.permute.xlu0 %5559
      %5561 = vrot.lane.b32.xlu0 %v5420, 20
      %v5562 = vpop.permute.xlu0 %5561
      %5563 = vrot.lane.b32.xlu0 %v5423, 20
      %v5564 = vpop.permute.xlu0 %5563
      %5565 = vrot.lane.b32.xlu0 %v5534, 20
      %v5566 = vpop.permute.xlu0 %5565
      %5567 = vrot.lane.b32.xlu0 %v5108, 24
      %v5568 = vpop.permute.xlu0 %5567
      %5569 = vrot.lane.b32.xlu0 %v5109, 24
      %v5570 = vpop.permute.xlu0 %5569
      %5571 = vrot.lane.b32.xlu0 %v5110, 24
      %v5572 = vpop.permute.xlu0 %5571
      %5573 = vrot.lane.b32.xlu0 %v5111, 24
      %v5574 = vpop.permute.xlu0 %5573
      %5575 = vrot.lane.b32.xlu0 %v5112, 24
      %v5576 = vpop.permute.xlu0 %5575
      %5577 = vrot.lane.b32.xlu0 %v5113, 24
      %v5578 = vpop.permute.xlu0 %5577
      %5579 = vrot.lane.b32.xlu0 %v5114, 24
      %v5580 = vpop.permute.xlu0 %5579
      %5581 = vrot.lane.b32.xlu0 %v5115, 24
      %v5582 = vpop.permute.xlu0 %5581
      %5583 = vrot.lane.b32.xlu0 %v5116, 24
      %v5584 = vpop.permute.xlu0 %5583
      %5585 = vrot.lane.b32.xlu0 %v5117, 24
      %v5586 = vpop.permute.xlu0 %5585
      %5587 = vrot.lane.b32.xlu0 %v5118, 24
      %v5588 = vpop.permute.xlu0 %5587
      %5589 = vrot.lane.b32.xlu0 %v5119, 24
      %v5590 = vpop.permute.xlu0 %5589
      %5591 = vrot.lane.b32.xlu0 %v5120, 24
      %v5592 = vpop.permute.xlu0 %5591
      %5593 = vrot.lane.b32.xlu0 %v5121, 24
      %v5594 = vpop.permute.xlu0 %5593
      %5595 = vrot.lane.b32.xlu0 %v5122, 24
      %v5596 = vpop.permute.xlu0 %5595
      %5597 = vrot.lane.b32.xlu0 %v5162, 28
      %v5598 = vpop.permute.xlu0 %5597
      %5599 = vrot.lane.b32.xlu0 %v5174, 28
      %v5600 = vpop.permute.xlu0 %5599
      %5601 = vrot.lane.b32.xlu0 %v5186, 28
      %v5602 = vpop.permute.xlu0 %5601
      %5603 = vrot.lane.b32.xlu0 %v5198, 28
      %v5604 = vpop.permute.xlu0 %5603
      %5605 = vrot.lane.b32.xlu0 %v5210, 28
      %v5606 = vpop.permute.xlu0 %5605
      %5607 = vrot.lane.b32.xlu0 %v5222, 28
      %v5608 = vpop.permute.xlu0 %5607
      %5609 = vrot.lane.b32.xlu0 %v5234, 28
      %v5610 = vpop.permute.xlu0 %5609
      %5611 = vrot.lane.b32.xlu0 %v5246, 28
      %v5612 = vpop.permute.xlu0 %5611
      %5613 = vrot.lane.b32.xlu0 %v5258, 28
      %v5614 = vpop.permute.xlu0 %5613
      %5615 = vrot.lane.b32.xlu0 %v5270, 28
      %v5616 = vpop.permute.xlu0 %5615
      %5617 = vrot.lane.b32.xlu0 %v5282, 28
      %v5618 = vpop.permute.xlu0 %5617
      %5619 = vrot.lane.b32.xlu0 %v5294, 28
      %v5620 = vpop.permute.xlu0 %5619
      %5621 = vrot.lane.b32.xlu0 %v5306, 28
      %v5622 = vpop.permute.xlu0 %5621
      %5623 = vrot.lane.b32.xlu0 %v5318, 28
      %v5624 = vpop.permute.xlu0 %5623
      %5625 = vrot.lane.b32.xlu0 %v5498, 28
      %v5626 = vpop.permute.xlu0 %5625
      %5627 = vrot.lane.b32.xlu0 %v5384, 32
      %v5628 = vpop.permute.xlu0 %5627
      %5629 = vrot.lane.b32.xlu0 %v5387, 32
      %v5630 = vpop.permute.xlu0 %5629
      %5631 = vrot.lane.b32.xlu0 %v5390, 32
      %v5632 = vpop.permute.xlu0 %5631
      %5633 = vrot.lane.b32.xlu0 %v5393, 32
      %v5634 = vpop.permute.xlu0 %5633
      %5635 = vrot.lane.b32.xlu0 %v5396, 32
      %v5636 = vpop.permute.xlu0 %5635
      %5637 = vrot.lane.b32.xlu0 %v5399, 32
      %v5638 = vpop.permute.xlu0 %5637
      %5639 = vrot.lane.b32.xlu0 %v5402, 32
      %v5640 = vpop.permute.xlu0 %5639
      %5641 = vrot.lane.b32.xlu0 %v5405, 32
      %v5642 = vpop.permute.xlu0 %5641
      %5643 = vrot.lane.b32.xlu0 %v5408, 32
      %v5644 = vpop.permute.xlu0 %5643
      %5645 = vrot.lane.b32.xlu0 %v5411, 32
      %v5646 = vpop.permute.xlu0 %5645
      %5647 = vrot.lane.b32.xlu0 %v5414, 32
      %v5648 = vpop.permute.xlu0 %5647
      %5649 = vrot.lane.b32.xlu0 %v5417, 32
      %v5650 = vpop.permute.xlu0 %5649
      %5651 = vrot.lane.b32.xlu0 %v5420, 32
      %v5652 = vpop.permute.xlu0 %5651
      %5653 = vrot.lane.b32.xlu0 %v5423, 32
      %v5654 = vpop.permute.xlu0 %5653
      %5655 = vrot.lane.b32.xlu0 %v5534, 32
      %v5656 = vpop.permute.xlu0 %5655
      %v5658 = vsel %vm645, %v5107, %v5320
      %v5660 = vsel %vm645, %v5108, %v5322
      %v5662 = vsel %vm645, %v5109, %v5324
      %v5664 = vsel %vm645, %v5110, %v5326
      %v5666 = vsel %vm645, %v5111, %v5328
      %v5668 = vsel %vm645, %v5112, %v5330
      %v5670 = vsel %vm645, %v5113, %v5332
      %v5672 = vsel %vm645, %v5114, %v5334
      %v5674 = vsel %vm645, %v5115, %v5336
      %v5676 = vsel %vm645, %v5116, %v5338
      %v5678 = vsel %vm645, %v5117, %v5340
      %v5680 = vsel %vm645, %v5118, %v5342
      %v5682 = vsel %vm645, %v5119, %v5344
      %v5684 = vsel %vm645, %v5120, %v5346
      %v5686 = vsel %vm645, %v5121, %v5348
      %v5688 = vsel %vm647, %v5658, %v5425
      %v5690 = vsel %vm647, %v5660, %v5427
      %v5692 = vsel %vm647, %v5662, %v5429
      %v5694 = vsel %vm647, %v5664, %v5431
      %v5696 = vsel %vm647, %v5666, %v5433
      %v5698 = vsel %vm647, %v5668, %v5435
      %v5700 = vsel %vm647, %v5670, %v5437
      %v5702 = vsel %vm647, %v5672, %v5439
      %v5704 = vsel %vm647, %v5674, %v5441
      %v5706 = vsel %vm647, %v5676, %v5443
      %v5708 = vsel %vm647, %v5678, %v5445
      %v5710 = vsel %vm647, %v5680, %v5447
      %v5712 = vsel %vm647, %v5682, %v5449
      %v5714 = vsel %vm647, %v5684, %v5451
      %v5716 = vsel %vm647, %v5686, %v5453
      %v5718 = vsel %vm649, %v2991, %v5456
      %v5720 = vsel %vm649, %v5688, %v5458
      %v5722 = vsel %vm649, %v5690, %v5460
      %v5724 = vsel %vm649, %v5692, %v5462
      %v5726 = vsel %vm649, %v5694, %v5464
      %v5728 = vsel %vm649, %v5696, %v5466
      %v5730 = vsel %vm649, %v5698, %v5468
      %v5732 = vsel %vm649, %v5700, %v5470
      %v5734 = vsel %vm649, %v5702, %v5472
      %v5736 = vsel %vm649, %v5704, %v5474
      %v5738 = vsel %vm649, %v5706, %v5476
      %v5740 = vsel %vm649, %v5708, %v5478
      %v5742 = vsel %vm649, %v5710, %v5480
      %v5744 = vsel %vm649, %v5712, %v5482
      %v5746 = vsel %vm649, %v5714, %v5484
      %v5748 = vsel %vm649, %v5716, %v5486
      %v5750 = vsel %vm546, %v5718, %v5500
      %v5752 = vsel %vm546, %v5720, %v5502
      %v5754 = vsel %vm546, %v5722, %v5504
      %v5756 = vsel %vm546, %v5724, %v5506
      %v5758 = vsel %vm546, %v5726, %v5508
      %v5760 = vsel %vm546, %v5728, %v5510
      %v5762 = vsel %vm546, %v5730, %v5512
      %v5764 = vsel %vm546, %v5732, %v5514
      %v5766 = vsel %vm546, %v5734, %v5516
      %v5768 = vsel %vm546, %v5736, %v5518
      %v5770 = vsel %vm546, %v5738, %v5520
      %v5772 = vsel %vm546, %v5740, %v5522
      %v5774 = vsel %vm546, %v5742, %v5524
      %v5776 = vsel %vm546, %v5744, %v5526
      %v5778 = vsel %vm546, %v5746, %v5528
      %v5780 = vsel %vm546, %v5748, %v5530
      %v5782 = vsel %vm3086, %v5750, %v5536
      %v5784 = vsel %vm3086, %v5752, %v5538
      %v5786 = vsel %vm3086, %v5754, %v5540
      %v5788 = vsel %vm3086, %v5756, %v5542
      %v5790 = vsel %vm3086, %v5758, %v5544
      %v5792 = vsel %vm3086, %v5760, %v5546
      %v5794 = vsel %vm3086, %v5762, %v5548
      %v5796 = vsel %vm3086, %v5764, %v5550
      %v5798 = vsel %vm3086, %v5766, %v5552
      %v5800 = vsel %vm3086, %v5768, %v5554
      %v5802 = vsel %vm3086, %v5770, %v5556
      %v5804 = vsel %vm3086, %v5772, %v5558
      %v5806 = vsel %vm3086, %v5774, %v5560
      %v5808 = vsel %vm3086, %v5776, %v5562
      %v5810 = vsel %vm3086, %v5778, %v5564
      %v5812 = vsel %vm3086, %v5780, %v5566
      %v5814 = vsel %vm3119, %v5782, %v5568
      %v5816 = vsel %vm3119, %v5784, %v5570
      %v5818 = vsel %vm3119, %v5786, %v5572
      %v5820 = vsel %vm3119, %v5788, %v5574
      %v5822 = vsel %vm3119, %v5790, %v5576
      %v5824 = vsel %vm3119, %v5792, %v5578
      %v5826 = vsel %vm3119, %v5794, %v5580
      %v5828 = vsel %vm3119, %v5796, %v5582
      %v5830 = vsel %vm3119, %v5798, %v5584
      %v5832 = vsel %vm3119, %v5800, %v5586
      %v5834 = vsel %vm3119, %v5802, %v5588
      %v5836 = vsel %vm3119, %v5804, %v5590
      %v5838 = vsel %vm3119, %v5806, %v5592
      %v5840 = vsel %vm3119, %v5808, %v5594
      %v5842 = vsel %vm3119, %v5810, %v5596
      %v5843 = vsel %vm3119, %v5812, %v2893
      %v5845 = vsel %vm3152, %v5814, %v5598
      %v5847 = vsel %vm3152, %v5816, %v5600
      %v5849 = vsel %vm3152, %v5818, %v5602
      %v5851 = vsel %vm3152, %v5820, %v5604
      %v5853 = vsel %vm3152, %v5822, %v5606
      %v5855 = vsel %vm3152, %v5824, %v5608
      %v5857 = vsel %vm3152, %v5826, %v5610
      %v5859 = vsel %vm3152, %v5828, %v5612
      %v5861 = vsel %vm3152, %v5830, %v5614
      %v5863 = vsel %vm3152, %v5832, %v5616
      %v5865 = vsel %vm3152, %v5834, %v5618
      %v5867 = vsel %vm3152, %v5836, %v5620
      %v5869 = vsel %vm3152, %v5838, %v5622
      %v5871 = vsel %vm3152, %v5840, %v5624
      %v5873 = vsel %vm3152, %v5842, %v5626
      %v5874 = vsel %vm3152, %v5843, %v2925
      %v5876 = vsel %vm3185, %v5845, %v5628
      %v5878 = vsel %vm3185, %v5847, %v5630
      %v5880 = vsel %vm3185, %v5849, %v5632
      %v5882 = vsel %vm3185, %v5851, %v5634
      %v5884 = vsel %vm3185, %v5853, %v5636
      %v5886 = vsel %vm3185, %v5855, %v5638
      %v5888 = vsel %vm3185, %v5857, %v5640
      %v5890 = vsel %vm3185, %v5859, %v5642
      %v5892 = vsel %vm3185, %v5861, %v5644
      %v5894 = vsel %vm3185, %v5863, %v5646
      %v5896 = vsel %vm3185, %v5865, %v5648
      %v5898 = vsel %vm3185, %v5867, %v5650
      %v5900 = vsel %vm3185, %v5869, %v5652
      %v5902 = vsel %vm3185, %v5871, %v5654
      %v5904 = vsel %vm3185, %v5873, %v5656
      %v5905 = vsel %vm3185, %v5874, %v2957
      %v5906 = vld [vmem:[%s9] sm:$0xf]
      %v5907 = vld [vmem:[%s9 + $0x4] sm:$0xf]
      %v5908 = vld [vmem:[%s9 + $0x8] sm:$0xf]
      %v5909 = vld [vmem:[%s9 + $0xc] sm:$0xf]
      %v5910 = vld [vmem:[%s9 + $0x10] sm:$0x3]
      %v5916 = vunpack.c.l.b16 %v5906
      %v5917 = vunpack.c.l.b16 %v5907
      %v5918 = vunpack.c.l.b16 %v5908
      %v5919 = vunpack.c.l.b16 %v5909
      %v5920 = vunpack.c.l.b16 %v5910
      %v5921 = vpack.c.b16 %v5917, %v5916
      %v5922 = vpack.c.b16 %v5919, %v5918
      %v5923 = vpack.c.b16 %v5920, %v5920
      %v5926 = vsel %vm4186, %v5876, 0
      %v5928 = vsel %vm4186, %v5878, 0
      %v5930 = vsel %vm4186, %v5880, 0
      %v5932 = vsel %vm4186, %v5882, 0
      %v5934 = vsel %vm4186, %v5884, 0
      %v5936 = vsel %vm4186, %v5886, 0
      %v5938 = vsel %vm4186, %v5888, 0
      %v5940 = vsel %vm4186, %v5890, 0
      %v5942 = vsel %vm4186, %v5892, 0
      %v5944 = vsel %vm4186, %v5894, 0
      %v5946 = vsel %vm4186, %v5896, 0
      %v5948 = vsel %vm4186, %v5898, 0
      %v5950 = vsel %vm4186, %v5900, 0
      %v5952 = vsel %vm4186, %v5902, 0
      %v5954 = vsel %vm4186, %v5904, 0
      %v5956 = vsel %vm4186, %v5905, 0
      %v5959 = vsel %vm4219, %v5923, 0
      %5961 = vmatprep.subr.bf16.mxu0 0
      %5962 = vmatpush1.bf16.msra.mxu0 0
      %5963 = vmatprep.subr.bf16.mxu0 0
      %5964 = vmatpush1.bf16.msra.mxu0 0
      %5965 = vmatprep.subr.bf16.mxu0 0
      %5966 = vmatpush1.bf16.msra.mxu0 0
      %5967 = vmatprep.subr.bf16.mxu0 0
      %5968 = vmatpush1.bf16.msra.mxu0 0
      %5969 = vmatprep.subr.bf16.mxu0 0
      %5970 = vmatpush1.bf16.msra.mxu0 0
      %5971 = vmatprep.subr.bf16.mxu0 0
      %5972 = vmatpush1.bf16.msra.mxu0 %v5959
      %5973 = vmatprep.subr.bf16.mxu0 0
      %5974 = vmatpush1.bf16.msra.mxu0 %v5922
      %5975 = vmatprep.subr.bf16.mxu0 0
      %5976 = vmatpush1.bf16.msra.mxu0 %v5921
      %5977 = vmatprep.subr.bf16.mxu0 0
      %5978 = vmatpush2.bf16.msra.mxu0 0
      %5979 = vmatprep.subr.bf16.mxu0 0
      %5980 = vmatpush2.bf16.msra.mxu0 0
      %5981 = vmatprep.subr.bf16.mxu0 0
      %5982 = vmatpush2.bf16.msra.mxu0 0
      %5983 = vmatprep.subr.bf16.mxu0 0
      %5984 = vmatpush2.bf16.msra.mxu0 0
      %5985 = vmatprep.subr.bf16.mxu0 0
      %5986 = vmatpush2.bf16.msra.mxu0 0
      %5987 = vmatprep.subr.bf16.mxu0 0
      %5988 = vmatpush2.bf16.msra.mxu0 0
      %5989 = vmatprep.subr.bf16.mxu0 0
      %5990 = vmatpush2.bf16.msra.mxu0 0
      %5991 = vmatprep.subr.bf16.mxu0 0
      %5992 = vmatpush2.bf16.msra.mxu0 0
      %5993 = vmatprep.mubr.bf16.mxu0 0
      %5994 = vmatmul.mubr.bf16.gmra.mxu0 %v5926
      %v5995 = vpop.f32.mrf.mxu0
      %v5996 = vadd.f32 0.0, %v5995
      %v5997 = vpop.f32.mrf.mxu0
      %v5998 = vpop.f32.mrf.mxu0
      %v5999 = vadd.f32 0.0, %v5998
      %v6000 = vpop.f32.mrf.mxu0
      %6001 = vmatprep.mubr.bf16.mxu0 0
      %6002 = vmatmul.mubr.bf16.gmra.mxu0 %v5928
      %v6003 = vpop.f32.mrf.mxu0
      %v6004 = vadd.f32 0.0, %v6003
      %v6005 = vpop.f32.mrf.mxu0
      %v6006 = vpop.f32.mrf.mxu0
      %v6007 = vadd.f32 0.0, %v6006
      %v6008 = vpop.f32.mrf.mxu0
      %6009 = vmatprep.mubr.bf16.mxu0 0
      %6010 = vmatmul.mubr.bf16.gmra.mxu0 %v5930
      %v6011 = vpop.f32.mrf.mxu0
      %v6012 = vadd.f32 0.0, %v6011
      %v6013 = vpop.f32.mrf.mxu0
      %v6014 = vpop.f32.mrf.mxu0
      %v6015 = vadd.f32 0.0, %v6014
      %v6016 = vpop.f32.mrf.mxu0
      %6017 = vmatprep.mubr.bf16.mxu0 0
      %6018 = vmatmul.mubr.bf16.gmra.mxu0 %v5932
      %v6019 = vpop.f32.mrf.mxu0
      %v6020 = vadd.f32 0.0, %v6019
      %v6021 = vpop.f32.mrf.mxu0
      %v6022 = vpop.f32.mrf.mxu0
      %v6023 = vadd.f32 0.0, %v6022
      %v6024 = vpop.f32.mrf.mxu0
      %6025 = vmatprep.mubr.bf16.mxu0 0
      %6026 = vmatmul.mubr.bf16.gmra.mxu0 %v5934
      %v6027 = vpop.f32.mrf.mxu0
      %v6028 = vadd.f32 0.0, %v6027
      %v6029 = vpop.f32.mrf.mxu0
      %v6030 = vpop.f32.mrf.mxu0
      %v6031 = vadd.f32 0.0, %v6030
      %v6032 = vpop.f32.mrf.mxu0
      %6033 = vmatprep.mubr.bf16.mxu0 0
      %6034 = vmatmul.mubr.bf16.gmra.mxu0 %v5936
      %v6035 = vpop.f32.mrf.mxu0
      %v6036 = vadd.f32 0.0, %v6035
      %v6037 = vpop.f32.mrf.mxu0
      %v6038 = vpop.f32.mrf.mxu0
      %v6039 = vadd.f32 0.0, %v6038
      %v6040 = vpop.f32.mrf.mxu0
      %6041 = vmatprep.mubr.bf16.mxu0 0
      %6042 = vmatmul.mubr.bf16.gmra.mxu0 %v5938
      %v6043 = vpop.f32.mrf.mxu0
      %v6044 = vadd.f32 0.0, %v6043
      %v6045 = vpop.f32.mrf.mxu0
      %v6046 = vpop.f32.mrf.mxu0
      %v6047 = vadd.f32 0.0, %v6046
      %v6048 = vpop.f32.mrf.mxu0
      %6049 = vmatprep.mubr.bf16.mxu0 0
      %6050 = vmatmul.mubr.bf16.gmra.mxu0 %v5940
      %v6051 = vpop.f32.mrf.mxu0
      %v6052 = vadd.f32 0.0, %v6051
      %v6053 = vpop.f32.mrf.mxu0
      %v6054 = vpop.f32.mrf.mxu0
      %v6055 = vadd.f32 0.0, %v6054
      %v6056 = vpop.f32.mrf.mxu0
      %6057 = vmatprep.mubr.bf16.mxu0 0
      %6058 = vmatmul.mubr.bf16.gmra.mxu0 %v5942
      %v6059 = vpop.f32.mrf.mxu0
      %v6060 = vadd.f32 0.0, %v6059
      %v6061 = vpop.f32.mrf.mxu0
      %v6062 = vpop.f32.mrf.mxu0
      %v6063 = vadd.f32 0.0, %v6062
      %v6064 = vpop.f32.mrf.mxu0
      %6065 = vmatprep.mubr.bf16.mxu0 0
      %6066 = vmatmul.mubr.bf16.gmra.mxu0 %v5944
      %v6067 = vpop.f32.mrf.mxu0
      %v6068 = vadd.f32 0.0, %v6067
      %v6069 = vpop.f32.mrf.mxu0
      %v6070 = vpop.f32.mrf.mxu0
      %v6071 = vadd.f32 0.0, %v6070
      %v6072 = vpop.f32.mrf.mxu0
      %6073 = vmatprep.mubr.bf16.mxu0 0
      %6074 = vmatmul.mubr.bf16.gmra.mxu0 %v5946
      %v6075 = vpop.f32.mrf.mxu0
      %v6076 = vadd.f32 0.0, %v6075
      %v6077 = vpop.f32.mrf.mxu0
      %v6078 = vpop.f32.mrf.mxu0
      %v6079 = vadd.f32 0.0, %v6078
      %v6080 = vpop.f32.mrf.mxu0
      %6081 = vmatprep.mubr.bf16.mxu0 0
      %6082 = vmatmul.mubr.bf16.gmra.mxu0 %v5948
      %v6083 = vpop.f32.mrf.mxu0
      %v6084 = vadd.f32 0.0, %v6083
      %v6085 = vpop.f32.mrf.mxu0
      %v6086 = vpop.f32.mrf.mxu0
      %v6087 = vadd.f32 0.0, %v6086
      %v6088 = vpop.f32.mrf.mxu0
      %6089 = vmatprep.mubr.bf16.mxu0 0
      %6090 = vmatmul.mubr.bf16.gmra.mxu0 %v5950
      %v6091 = vpop.f32.mrf.mxu0
      %v6092 = vadd.f32 0.0, %v6091
      %v6093 = vpop.f32.mrf.mxu0
      %v6094 = vpop.f32.mrf.mxu0
      %v6095 = vadd.f32 0.0, %v6094
      %v6096 = vpop.f32.mrf.mxu0
      %6097 = vmatprep.mubr.bf16.mxu0 0
      %6098 = vmatmul.mubr.bf16.gmra.mxu0 %v5952
      %v6099 = vpop.f32.mrf.mxu0
      %v6100 = vadd.f32 0.0, %v6099
      %v6101 = vpop.f32.mrf.mxu0
      %v6102 = vpop.f32.mrf.mxu0
      %v6103 = vadd.f32 0.0, %v6102
      %v6104 = vpop.f32.mrf.mxu0
      %6105 = vmatprep.mubr.bf16.mxu0 0
      %6106 = vmatmul.mubr.bf16.gmra.mxu0 %v5954
      %v6107 = vpop.f32.mrf.mxu0
      %v6108 = vadd.f32 0.0, %v6107
      %v6109 = vpop.f32.mrf.mxu0
      %v6110 = vpop.f32.mrf.mxu0
      %v6111 = vadd.f32 0.0, %v6110
      %v6112 = vpop.f32.mrf.mxu0
      %6113 = vmatprep.mubr.bf16.mxu0 0
      %6114 = vmatmul.mubr.bf16.gmra.mxu0 %v5956
      %v6115 = vpop.f32.mrf.mxu0
      %v6116 = vadd.f32 0.0, %v6115
      %v6117 = vpop.f32.mrf.mxu0
      %v6118 = vpop.f32.mrf.mxu0
      %v6119 = vadd.f32 0.0, %v6118
      %v6120 = vpop.f32.mrf.mxu0
      %6121 = vdwg.mxu0
      %v6122 = vld [vmem:[%s10] sm:$0x1]
      %v6123 = vld [vmem:[%s11] sm:$0x1]
      %v6124 = vsel %vm645, %v5996, 0.0
      %v6125 = vsel %vm645, %v5999, 0.0
      %v6126 = vadd.f32 %v6124, %v6125
      %v6127 = vsel %vm645, %v6004, 0.0
      %v6128 = vadd.f32 %v6126, %v6127
      %v6129 = vsel %vm645, %v6007, 0.0
      %v6130 = vadd.f32 %v6128, %v6129
      %v6131 = vsel %vm645, %v6012, 0.0
      %v6132 = vadd.f32 %v6130, %v6131
      %v6133 = vsel %vm645, %v6015, 0.0
      %v6134 = vadd.f32 %v6132, %v6133
      %v6135 = vsel %vm645, %v6020, 0.0
      %v6136 = vadd.f32 %v6134, %v6135
      %v6137 = vsel %vm645, %v6023, 0.0
      %v6138 = vadd.f32 %v6136, %v6137
      %v6139 = vsel %vm645, %v6028, 0.0
      %v6140 = vadd.f32 %v6138, %v6139
      %v6141 = vsel %vm645, %v6031, 0.0
      %v6142 = vadd.f32 %v6140, %v6141
      %v6143 = vsel %vm645, %v6036, 0.0
      %v6144 = vadd.f32 %v6142, %v6143
      %v6145 = vsel %vm645, %v6039, 0.0
      %v6146 = vadd.f32 %v6144, %v6145
      %v6147 = vsel %vm645, %v6044, 0.0
      %v6148 = vadd.f32 %v6146, %v6147
      %v6149 = vsel %vm645, %v6047, 0.0
      %v6150 = vadd.f32 %v6148, %v6149
      %v6151 = vsel %vm645, %v6052, 0.0
      %v6152 = vadd.f32 %v6150, %v6151
      %v6153 = vsel %vm645, %v6055, 0.0
      %v6154 = vadd.f32 %v6152, %v6153
      %v6155 = vsel %vm645, %v6060, 0.0
      %v6156 = vadd.f32 %v6154, %v6155
      %v6157 = vsel %vm645, %v6063, 0.0
      %v6158 = vadd.f32 %v6156, %v6157
      %v6159 = vsel %vm645, %v6068, 0.0
      %v6160 = vadd.f32 %v6158, %v6159
      %v6161 = vsel %vm645, %v6071, 0.0
      %v6162 = vadd.f32 %v6160, %v6161
      %v6163 = vsel %vm645, %v6076, 0.0
      %v6164 = vadd.f32 %v6162, %v6163
      %v6165 = vsel %vm645, %v6079, 0.0
      %v6166 = vadd.f32 %v6164, %v6165
      %v6167 = vsel %vm645, %v6084, 0.0
      %v6168 = vadd.f32 %v6166, %v6167
      %v6169 = vsel %vm645, %v6087, 0.0
      %v6170 = vadd.f32 %v6168, %v6169
      %v6171 = vsel %vm645, %v6092, 0.0
      %v6172 = vadd.f32 %v6170, %v6171
      %v6173 = vsel %vm645, %v6095, 0.0
      %v6174 = vadd.f32 %v6172, %v6173
      %v6175 = vsel %vm645, %v6100, 0.0
      %v6176 = vadd.f32 %v6174, %v6175
      %v6177 = vsel %vm645, %v6103, 0.0
      %v6178 = vadd.f32 %v6176, %v6177
      %v6179 = vsel %vm645, %v6108, 0.0
      %v6180 = vadd.f32 %v6178, %v6179
      %v6181 = vsel %vm645, %v6111, 0.0
      %v6182 = vadd.f32 %v6180, %v6181
      %v6183 = vsel %vm645, %v6116, 0.0
      %v6184 = vadd.f32 %v6182, %v6183
      %v6185 = vsel %vm645, %v6119, 0.0
      %v6186 = vadd.f32 %v6184, %v6185
      %v6187 = vrot.slane %v6186, 4
      %v6188 = vadd.f32 %v6186, %v6187
      %v6189 = vrot.slane %v6188, 2
      %v6190 = vadd.f32 %v6188, %v6189
      %v6191 = vrot.slane %v6190, 1
      %v6192 = vadd.f32 %v6190, %v6191
      %v6193 = vmul.f32 %v6192, 0.00390625
      %v6194 = vmul.f32 %v5996, %v5996
      %v6195 = vmul.f32 %v5999, %v5999
      %v6196 = vmul.f32 %v6004, %v6004
      %v6197 = vmul.f32 %v6007, %v6007
      %v6198 = vmul.f32 %v6012, %v6012
      %v6199 = vmul.f32 %v6015, %v6015
      %v6200 = vmul.f32 %v6020, %v6020
      %v6201 = vmul.f32 %v6023, %v6023
      %v6202 = vmul.f32 %v6028, %v6028
      %v6203 = vmul.f32 %v6031, %v6031
      %v6204 = vmul.f32 %v6036, %v6036
      %v6205 = vmul.f32 %v6039, %v6039
      %v6206 = vmul.f32 %v6044, %v6044
      %v6207 = vmul.f32 %v6047, %v6047
      %v6208 = vmul.f32 %v6052, %v6052
      %v6209 = vmul.f32 %v6055, %v6055
      %v6210 = vmul.f32 %v6060, %v6060
      %v6211 = vmul.f32 %v6063, %v6063
      %v6212 = vmul.f32 %v6068, %v6068
      %v6213 = vmul.f32 %v6071, %v6071
      %v6214 = vmul.f32 %v6076, %v6076
      %v6215 = vmul.f32 %v6079, %v6079
      %v6216 = vmul.f32 %v6084, %v6084
      %v6217 = vmul.f32 %v6087, %v6087
      %v6218 = vmul.f32 %v6092, %v6092
      %v6219 = vmul.f32 %v6095, %v6095
      %v6220 = vmul.f32 %v6100, %v6100
      %v6221 = vmul.f32 %v6103, %v6103
      %v6222 = vmul.f32 %v6108, %v6108
      %v6223 = vmul.f32 %v6111, %v6111
      %v6224 = vmul.f32 %v6116, %v6116
      %v6225 = vmul.f32 %v6119, %v6119
      %v6226 = vsel %vm645, %v6194, 0.0
      %v6227 = vsel %vm645, %v6195, 0.0
      %v6228 = vadd.f32 %v6226, %v6227
      %v6229 = vsel %vm645, %v6196, 0.0
      %v6230 = vadd.f32 %v6228, %v6229
      %v6231 = vsel %vm645, %v6197, 0.0
      %v6232 = vadd.f32 %v6230, %v6231
      %v6233 = vsel %vm645, %v6198, 0.0
      %v6234 = vadd.f32 %v6232, %v6233
      %v6235 = vsel %vm645, %v6199, 0.0
      %v6236 = vadd.f32 %v6234, %v6235
      %v6237 = vsel %vm645, %v6200, 0.0
      %v6238 = vadd.f32 %v6236, %v6237
      %v6239 = vsel %vm645, %v6201, 0.0
      %v6240 = vadd.f32 %v6238, %v6239
      %v6241 = vsel %vm645, %v6202, 0.0
      %v6242 = vadd.f32 %v6240, %v6241
      %v6243 = vsel %vm645, %v6203, 0.0
      %v6244 = vadd.f32 %v6242, %v6243
      %v6245 = vsel %vm645, %v6204, 0.0
      %v6246 = vadd.f32 %v6244, %v6245
      %v6247 = vsel %vm645, %v6205, 0.0
      %v6248 = vadd.f32 %v6246, %v6247
      %v6249 = vsel %vm645, %v6206, 0.0
      %v6250 = vadd.f32 %v6248, %v6249
      %v6251 = vsel %vm645, %v6207, 0.0
      %v6252 = vadd.f32 %v6250, %v6251
      %v6253 = vsel %vm645, %v6208, 0.0
      %v6254 = vadd.f32 %v6252, %v6253
      %v6255 = vsel %vm645, %v6209, 0.0
      %v6256 = vadd.f32 %v6254, %v6255
      %v6257 = vsel %vm645, %v6210, 0.0
      %v6258 = vadd.f32 %v6256, %v6257
      %v6259 = vsel %vm645, %v6211, 0.0
      %v6260 = vadd.f32 %v6258, %v6259
      %v6261 = vsel %vm645, %v6212, 0.0
      %v6262 = vadd.f32 %v6260, %v6261
      %v6263 = vsel %vm645, %v6213, 0.0
      %v6264 = vadd.f32 %v6262, %v6263
      %v6265 = vsel %vm645, %v6214, 0.0
      %v6266 = vadd.f32 %v6264, %v6265
      %v6267 = vsel %vm645, %v6215, 0.0
      %v6268 = vadd.f32 %v6266, %v6267
      %v6269 = vsel %vm645, %v6216, 0.0
      %v6270 = vadd.f32 %v6268, %v6269
      %v6271 = vsel %vm645, %v6217, 0.0
      %v6272 = vadd.f32 %v6270, %v6271
      %v6273 = vsel %vm645, %v6218, 0.0
      %v6274 = vadd.f32 %v6272, %v6273
      %v6275 = vsel %vm645, %v6219, 0.0
      %v6276 = vadd.f32 %v6274, %v6275
      %v6277 = vsel %vm645, %v6220, 0.0
      %v6278 = vadd.f32 %v6276, %v6277
      %v6279 = vsel %vm645, %v6221, 0.0
      %v6280 = vadd.f32 %v6278, %v6279
      %v6281 = vsel %vm645, %v6222, 0.0
      %v6282 = vadd.f32 %v6280, %v6281
      %v6283 = vsel %vm645, %v6223, 0.0
      %v6284 = vadd.f32 %v6282, %v6283
      %v6285 = vsel %vm645, %v6224, 0.0
      %v6286 = vadd.f32 %v6284, %v6285
      %v6287 = vsel %vm645, %v6225, 0.0
      %v6288 = vadd.f32 %v6286, %v6287
      %v6289 = vrot.slane %v6288, 4
      %v6290 = vadd.f32 %v6288, %v6289
      %v6291 = vrot.slane %v6290, 2
      %v6292 = vadd.f32 %v6290, %v6291
      %v6293 = vrot.slane %v6292, 1
      %v6294 = vadd.f32 %v6292, %v6293
      %v6295 = vmul.f32 %v6294, 0.00390625
      %v6296 = vmul.f32 %v6193, %v6193
      %v6297 = vsub.f32 %v6295, %v6296
      %v6298 = vmax.f32 %v6297, 0.0
      %v6299 = vadd.f32 %v6298, 1e-05
      %v6300 = vrsqrt.pop %v6299
      %v6301 = vmul.f32 %v6300, %v6122
      %v6302 = vmul.f32 %v6193, %v6301
      %v6303 = vsub.f32 %v6123, %v6302
      %v6304 = vlaneseq
      %v6305 = vshrl.u32 %v6304, 7
      %v6306 = vsub.s32 0, %v6305
      %v6307 = vrot.slane %v6301, %v6306
      %v6308 = vmul.f32 %v5996, %v6307
      %v6309 = vmul.f32 %v5999, %v6307
      %v6310 = vmul.f32 %v6004, %v6307
      %v6311 = vmul.f32 %v6007, %v6307
      %v6312 = vmul.f32 %v6012, %v6307
      %v6313 = vmul.f32 %v6015, %v6307
      %v6314 = vmul.f32 %v6020, %v6307
      %v6315 = vmul.f32 %v6023, %v6307
      %v6316 = vmul.f32 %v6028, %v6307
      %v6317 = vmul.f32 %v6031, %v6307
      %v6318 = vmul.f32 %v6036, %v6307
      %v6319 = vmul.f32 %v6039, %v6307
      %v6320 = vmul.f32 %v6044, %v6307
      %v6321 = vmul.f32 %v6047, %v6307
      %v6322 = vmul.f32 %v6052, %v6307
      %v6323 = vmul.f32 %v6055, %v6307
      %v6324 = vmul.f32 %v6060, %v6307
      %v6325 = vmul.f32 %v6063, %v6307
      %v6326 = vmul.f32 %v6068, %v6307
      %v6327 = vmul.f32 %v6071, %v6307
      %v6328 = vmul.f32 %v6076, %v6307
      %v6329 = vmul.f32 %v6079, %v6307
      %v6330 = vmul.f32 %v6084, %v6307
      %v6331 = vmul.f32 %v6087, %v6307
      %v6332 = vmul.f32 %v6092, %v6307
      %v6333 = vmul.f32 %v6095, %v6307
      %v6334 = vmul.f32 %v6100, %v6307
      %v6335 = vmul.f32 %v6103, %v6307
      %v6336 = vmul.f32 %v6108, %v6307
      %v6337 = vmul.f32 %v6111, %v6307
      %v6338 = vmul.f32 %v6116, %v6307
      %v6339 = vmul.f32 %v6119, %v6307
      %v6341 = vlaneseq
      %v6342 = vshrl.u32 %v6341, 7
      %v6343 = vsub.s32 0, %v6342
      %v6344 = vrot.slane %v6303, %v6343
      %v6346 = vadd.f32 %v6308, %v6344
      %v6347 = vadd.f32 %v6309, %v6344
      %v6348 = vadd.f32 %v6310, %v6344
      %v6349 = vadd.f32 %v6311, %v6344
      %v6350 = vadd.f32 %v6312, %v6344
      %v6351 = vadd.f32 %v6313, %v6344
      %v6352 = vadd.f32 %v6314, %v6344
      %v6353 = vadd.f32 %v6315, %v6344
      %v6354 = vadd.f32 %v6316, %v6344
      %v6355 = vadd.f32 %v6317, %v6344
      %v6356 = vadd.f32 %v6318, %v6344
      %v6357 = vadd.f32 %v6319, %v6344
      %v6358 = vadd.f32 %v6320, %v6344
      %v6359 = vadd.f32 %v6321, %v6344
      %v6360 = vadd.f32 %v6322, %v6344
      %v6361 = vadd.f32 %v6323, %v6344
      %v6362 = vadd.f32 %v6324, %v6344
      %v6363 = vadd.f32 %v6325, %v6344
      %v6364 = vadd.f32 %v6326, %v6344
      %v6365 = vadd.f32 %v6327, %v6344
      %v6366 = vadd.f32 %v6328, %v6344
      %v6367 = vadd.f32 %v6329, %v6344
      %v6368 = vadd.f32 %v6330, %v6344
      %v6369 = vadd.f32 %v6331, %v6344
      %v6370 = vadd.f32 %v6332, %v6344
      %v6371 = vadd.f32 %v6333, %v6344
      %v6372 = vadd.f32 %v6334, %v6344
      %v6373 = vadd.f32 %v6335, %v6344
      %v6374 = vadd.f32 %v6336, %v6344
      %v6375 = vadd.f32 %v6337, %v6344
      %v6376 = vadd.f32 %v6338, %v6344
      %v6377 = vadd.f32 %v6339, %v6344
      %vm6378 = vcmp.gt.f32.partialorder %v6346, 0.0
      %vm6379 = vcmp.gt.f32.partialorder %v6347, 0.0
      %vm6380 = vcmp.gt.f32.partialorder %v6348, 0.0
      %vm6381 = vcmp.gt.f32.partialorder %v6349, 0.0
      %vm6382 = vcmp.gt.f32.partialorder %v6350, 0.0
      %vm6383 = vcmp.gt.f32.partialorder %v6351, 0.0
      %vm6384 = vcmp.gt.f32.partialorder %v6352, 0.0
      %vm6385 = vcmp.gt.f32.partialorder %v6353, 0.0
      %vm6386 = vcmp.gt.f32.partialorder %v6354, 0.0
      %vm6387 = vcmp.gt.f32.partialorder %v6355, 0.0
      %vm6388 = vcmp.gt.f32.partialorder %v6356, 0.0
      %vm6389 = vcmp.gt.f32.partialorder %v6357, 0.0
      %vm6390 = vcmp.gt.f32.partialorder %v6358, 0.0
      %vm6391 = vcmp.gt.f32.partialorder %v6359, 0.0
      %vm6392 = vcmp.gt.f32.partialorder %v6360, 0.0
      %vm6393 = vcmp.gt.f32.partialorder %v6361, 0.0
      %vm6394 = vcmp.gt.f32.partialorder %v6362, 0.0
      %vm6395 = vcmp.gt.f32.partialorder %v6363, 0.0
      %vm6396 = vcmp.gt.f32.partialorder %v6364, 0.0
      %vm6397 = vcmp.gt.f32.partialorder %v6365, 0.0
      %vm6398 = vcmp.gt.f32.partialorder %v6366, 0.0
      %vm6399 = vcmp.gt.f32.partialorder %v6367, 0.0
      %vm6400 = vcmp.gt.f32.partialorder %v6368, 0.0
      %vm6401 = vcmp.gt.f32.partialorder %v6369, 0.0
      %vm6402 = vcmp.gt.f32.partialorder %v6370, 0.0
      %vm6403 = vcmp.gt.f32.partialorder %v6371, 0.0
      %vm6404 = vcmp.gt.f32.partialorder %v6372, 0.0
      %vm6405 = vcmp.gt.f32.partialorder %v6373, 0.0
      %vm6406 = vcmp.gt.f32.partialorder %v6374, 0.0
      %vm6407 = vcmp.gt.f32.partialorder %v6375, 0.0
      %vm6408 = vcmp.gt.f32.partialorder %v6376, 0.0
      %vm6409 = vcmp.gt.f32.partialorder %v6377, 0.0
      %v6410 = vmul.f32 %v6346, 0.01
      %v6411 = vmul.f32 %v6347, 0.01
      %v6412 = vmul.f32 %v6348, 0.01
      %v6413 = vmul.f32 %v6349, 0.01
      %v6414 = vmul.f32 %v6350, 0.01
      %v6415 = vmul.f32 %v6351, 0.01
      %v6416 = vmul.f32 %v6352, 0.01
      %v6417 = vmul.f32 %v6353, 0.01
      %v6418 = vmul.f32 %v6354, 0.01
      %v6419 = vmul.f32 %v6355, 0.01
      %v6420 = vmul.f32 %v6356, 0.01
      %v6421 = vmul.f32 %v6357, 0.01
      %v6422 = vmul.f32 %v6358, 0.01
      %v6423 = vmul.f32 %v6359, 0.01
      %v6424 = vmul.f32 %v6360, 0.01
      %v6425 = vmul.f32 %v6361, 0.01
      %v6426 = vmul.f32 %v6362, 0.01
      %v6427 = vmul.f32 %v6363, 0.01
      %v6428 = vmul.f32 %v6364, 0.01
      %v6429 = vmul.f32 %v6365, 0.01
      %v6430 = vmul.f32 %v6366, 0.01
      %v6431 = vmul.f32 %v6367, 0.01
      %v6432 = vmul.f32 %v6368, 0.01
      %v6433 = vmul.f32 %v6369, 0.01
      %v6434 = vmul.f32 %v6370, 0.01
      %v6435 = vmul.f32 %v6371, 0.01
      %v6436 = vmul.f32 %v6372, 0.01
      %v6437 = vmul.f32 %v6373, 0.01
      %v6438 = vmul.f32 %v6374, 0.01
      %v6439 = vmul.f32 %v6375, 0.01
      %v6440 = vmul.f32 %v6376, 0.01
      %v6441 = vmul.f32 %v6377, 0.01
      %v6442 = vsel %vm6378, %v6346, %v6410
      %v6443 = vsel %vm6379, %v6347, %v6411
      %v6444 = vsel %vm6380, %v6348, %v6412
      %v6445 = vsel %vm6381, %v6349, %v6413
      %v6446 = vsel %vm6382, %v6350, %v6414
      %v6447 = vsel %vm6383, %v6351, %v6415
      %v6448 = vsel %vm6384, %v6352, %v6416
      %v6449 = vsel %vm6385, %v6353, %v6417
      %v6450 = vsel %vm6386, %v6354, %v6418
      %v6451 = vsel %vm6387, %v6355, %v6419
      %v6452 = vsel %vm6388, %v6356, %v6420
      %v6453 = vsel %vm6389, %v6357, %v6421
      %v6454 = vsel %vm6390, %v6358, %v6422
      %v6455 = vsel %vm6391, %v6359, %v6423
      %v6456 = vsel %vm6392, %v6360, %v6424
      %v6457 = vsel %vm6393, %v6361, %v6425
      %v6458 = vsel %vm6394, %v6362, %v6426
      %v6459 = vsel %vm6395, %v6363, %v6427
      %v6460 = vsel %vm6396, %v6364, %v6428
      %v6461 = vsel %vm6397, %v6365, %v6429
      %v6462 = vsel %vm6398, %v6366, %v6430
      %v6463 = vsel %vm6399, %v6367, %v6431
      %v6464 = vsel %vm6400, %v6368, %v6432
      %v6465 = vsel %vm6401, %v6369, %v6433
      %v6466 = vsel %vm6402, %v6370, %v6434
      %v6467 = vsel %vm6403, %v6371, %v6435
      %v6468 = vsel %vm6404, %v6372, %v6436
      %v6469 = vsel %vm6405, %v6373, %v6437
      %v6470 = vsel %vm6406, %v6374, %v6438
      %v6471 = vsel %vm6407, %v6375, %v6439
      %v6472 = vsel %vm6408, %v6376, %v6440
      %v6473 = vsel %vm6409, %v6377, %v6441
      %6474 = vst.msk [vmem:[%s433] sm:$0xff] %vm645, %v6442
      %6475 = vst.msk [vmem:[%s433 + $0x8] sm:$0xff] %vm645, %v6443
      %6476 = vst.msk [vmem:[%s433 + $0x10] sm:$0xff] %vm645, %v6444
      %6477 = vst.msk [vmem:[%s433 + $0x18] sm:$0xff] %vm645, %v6445
      %6478 = vst.msk [vmem:[%s433 + $0x20] sm:$0xff] %vm645, %v6446
      %6479 = vst.msk [vmem:[%s433 + $0x28] sm:$0xff] %vm645, %v6447
      %6480 = vst.msk [vmem:[%s433 + $0x30] sm:$0xff] %vm645, %v6448
      %6481 = vst.msk [vmem:[%s433 + $0x38] sm:$0xff] %vm645, %v6449
      %6482 = vst.msk [vmem:[%s433 + $0x40] sm:$0xff] %vm645, %v6450
      %6483 = vst.msk [vmem:[%s433 + $0x48] sm:$0xff] %vm645, %v6451
      %6484 = vst.msk [vmem:[%s433 + $0x50] sm:$0xff] %vm645, %v6452
      %6485 = vst.msk [vmem:[%s433 + $0x58] sm:$0xff] %vm645, %v6453
      %6486 = vst.msk [vmem:[%s433 + $0x60] sm:$0xff] %vm645, %v6454
      %6487 = vst.msk [vmem:[%s433 + $0x68] sm:$0xff] %vm645, %v6455
      %6488 = vst.msk [vmem:[%s433 + $0x70] sm:$0xff] %vm645, %v6456
      %6489 = vst.msk [vmem:[%s433 + $0x78] sm:$0xff] %vm645, %v6457
      %6490 = vst.msk [vmem:[%s433 + $0x80] sm:$0xff] %vm645, %v6458
      %6491 = vst.msk [vmem:[%s433 + $0x88] sm:$0xff] %vm645, %v6459
      %6492 = vst.msk [vmem:[%s433 + $0x90] sm:$0xff] %vm645, %v6460
      %6493 = vst.msk [vmem:[%s433 + $0x98] sm:$0xff] %vm645, %v6461
      %6494 = vst.msk [vmem:[%s433 + $0xa0] sm:$0xff] %vm645, %v6462
      %6495 = vst.msk [vmem:[%s433 + $0xa8] sm:$0xff] %vm645, %v6463
      %6496 = vst.msk [vmem:[%s433 + $0xb0] sm:$0xff] %vm645, %v6464
      %6497 = vst.msk [vmem:[%s433 + $0xb8] sm:$0xff] %vm645, %v6465
      %6498 = vst.msk [vmem:[%s433 + $0xc0] sm:$0xff] %vm645, %v6466
      %6499 = vst.msk [vmem:[%s433 + $0xc8] sm:$0xff] %vm645, %v6467
      %6500 = vst.msk [vmem:[%s433 + $0xd0] sm:$0xff] %vm645, %v6468
      %6501 = vst.msk [vmem:[%s433 + $0xd8] sm:$0xff] %vm645, %v6469
      %6502 = vst.msk [vmem:[%s433 + $0xe0] sm:$0xff] %vm645, %v6470
      %6503 = vst.msk [vmem:[%s433 + $0xe8] sm:$0xff] %vm645, %v6471
      %6504 = vst.msk [vmem:[%s433 + $0xf0] sm:$0xff] %vm645, %v6472
      %6505 = vst.msk [vmem:[%s433 + $0xf8] sm:$0xff] %vm645, %v6473
      %p6506 = scmp.lt.s32.totalorder %s23, 1
      %s6507 = scalar_select %p6506, %s23, 1
      %s6508 = smul.addr %s6507, 32
      %s6509 = smul.addr %s6508, 8
      %s6510 = scalar_lea.vmem %s12, %s6509
      // Predicated region
      $region69: #{tpu_custom_call.1} parent=67 // pred_check
        %p6511 = pneg %p303
      $region70: #{tpu_custom_call.1} parent=67 // pred_check_branch
        %6513 = sbr.rel (%p6511) target = $region72
      $region71: #{tpu_custom_call.1} parent=67 // pred_region
        _
      $region72: #{tpu_custom_call.1} parent=67 // pred_fallthru
        _
    $region68: #{tpu_custom_call.1} parent=5 // pred_fallthru
      _
    %p6514 = scmp.le.s32.totalorder 2, %s18
    // Predicated region
    $region73: #{tpu_custom_call.1} parent=5 // pred_check
      %p6515 = pneg %p6514
    $region74: #{tpu_custom_call.1} parent=5 // pred_check_branch
      %6517 = sbr.rel (%p6515) target = $region76
    $region75: #{tpu_custom_call.1} parent=5 // pred_region
      %s6518 = ssub.s32 %s18, 2
      // Predicated region
      $region77: #{tpu_custom_call.1} parent=75 // pred_check
        %p6519 = pneg %p309
      $region78: #{tpu_custom_call.1} parent=75 // pred_check_branch
        %6521 = sbr.rel (%p6519) target = $region80
      $region79: #{tpu_custom_call.1} parent=75 // pred_region
        %p6522 = scmp.lt.s32.totalorder %s24, 1
        %s6523 = scalar_select %p6522, %s24, 1
        %s6524 = smul.addr %s6523, 32
        %s6525 = smul.addr %s6524, 8
        %s6526 = scalar_lea.vmem %s12, %s6525
      $region80: #{tpu_custom_call.1} parent=75 // pred_fallthru
        _
    $region76: #{tpu_custom_call.1} parent=5 // pred_fallthru
      _
  $region6: #{tpu_custom_call.1} parent=0 // loop_footer
    %s22 = sadd.s32 1, %s18
  $region7: #{tpu_custom_call.1} parent=0 // loop_footer_branch
    %17 = sbr.rel target = $region3
  $region8: #{tpu_custom_call.1} parent=0 // loop_exit
    _

</llo_original>
